<compile_context>
chip_gen: v5e
topology: v5e:2x2
jax: 0.10.0
libtpu: 0.0.40
codegen_flags: <defaults>
</compile_context>

<pallas_src>
import functools

import jax
import jax.numpy as jnp
from jax import lax
from jax.experimental import pallas as pl
from jax.experimental.pallas import tpu as pltpu


def _en_conv_kernel(xp_ref,                     # (Cin, HW)   pooled input, spatial flattened on lanes
                    s1_ref, t1_ref,             # BN1 affine  (Cin, 1)
                    s2_ref, t2_ref,             # BN2 affine  (Cout, 1)
                    s3_ref, t3_ref,             # BN3 affine  (Cin, 1)
                    w1_ref, b1_ref,             # conv1: (9, Cout, Cin), (Cout, 1)
                    w2_ref, b2_ref,             # conv2: (9, Cout, Cout), (Cout, 1)
                    w3_ref, b3_ref,             # conv3 (shortcut): (9, Cout, Cin), (Cout, 1)
                    o_ref,                      # (Cout, HW)
                    pad_in_ref, pad_mid_ref,    # VMEM scratch: zero-padded flat activations
                    *, Hp, Wp):
    f32 = jnp.float32
    HW = Hp * Wp
    base = Wp + 1                               # interior offset inside the padded flat buffer

    x = xp_ref[...].astype(f32)                 # (Cin, HW)

    # Lane-position helper (column index of every flattened pixel) for masking the
    # 3x3 taps that would otherwise wrap across a row edge.
    col = lax.broadcasted_iota(jnp.int32, (1, HW), 1) % Wp

    def conv3x3(act, pad_ref, w_ref, b_ref):
        """3x3 same-padding conv: act (c_in, HW) -> (c_out, HW), f32 accumulation."""
        c_in = act.shape[0]
        c_out = b_ref.shape[0]

        # Zero-padded flat buffer: rows above/below the image are zero, so vertical
        # (dy) out-of-range taps read zeros automatically.
        pad_ref[...] = jnp.zeros_like(pad_ref)
        pad_ref[:, base:base + HW] = act

        acc = jnp.zeros((c_out, HW), f32)
        for dy in (-1, 0, 1):
            for dx in (-1, 0, 1):
                start = base + dy * Wp + dx
                win = pad_ref[:, start:start + HW]          # (c_in, HW) shifted window
                if dx != 0:                                  # mask lanes that wrapped across a row
                    valid = (col + dx >= 0) & (col + dx < Wp)
                    win = jnp.where(valid, win, 0.0)
                w_tap = w_ref[(dy + 1) * 3 + (dx + 1)].astype(f32)   # (c_out, c_in)
                if c_in <= 8:
                    # Tiny channel count: contract on the VPU (MXU would idle, per review).
                    for ci in range(c_in):
                        acc = acc + w_tap[:, ci:ci + 1] * win[ci:ci + 1, :]
                else:
                    # Larger channel counts: use the MXU.
                    acc = acc + jnp.dot(w_tap, win, preferred_element_type=f32)
        return acc + b_ref[...].astype(f32)                  # (c_out, 1) bias broadcast over lanes

    # Branch A: BN1 -> ReLU -> conv1 -> BN2 -> ReLU -> conv2
    a1 = jnp.maximum(x * s1_ref[...] + t1_ref[...], 0.0)
    y1 = conv3x3(a1, pad_in_ref, w1_ref, b1_ref)
    a2 = jnp.maximum(y1 * s2_ref[...] + t2_ref[...], 0.0)
    y2 = conv3x3(a2, pad_mid_ref, w2_ref, b2_ref)

    # Branch B (shortcut): BN3 -> ReLU -> conv3
    a3 = jnp.maximum(x * s3_ref[...] + t3_ref[...], 0.0)
    y3 = conv3x3(a3, pad_in_ref, w3_ref, b3_ref)

    # Residual add, single lane-dense store.
    o_ref[...] = (y2 + y3).astype(o_ref.dtype)


def _resident(a):
    """BlockSpec for a small parameter that stays resident in VMEM for all grid steps."""
    nd = a.ndim
    return pl.BlockSpec(a.shape, lambda n: (0,) * nd)


def en_conv_forward(x, params, *, eps=1e-5):
    """en_conv forward pass: MaxPool2d(2) followed by Conv_residual(in_ch, out_ch).

    x      : (N, Cin, H, W)
    params : dict of BN / conv parameters (see __main__)
    returns: (N, Cout, H//2, W//2)
    """
    N, Cin, H, W = x.shape
    assert H % 2 == 0 and W % 2 == 0, "MaxPool2d(2) path assumes even spatial dims"
    Hp, Wp = H // 2, W // 2
    HW = Hp * Wp
    Cout = params["conv1_w"].shape[0]

    # MaxPool2d(2): cheap XLA reduce (strided 2x2 downsample is not lane-friendly in
    # Mosaic); it shrinks the data 4x before the Pallas kernel runs.
    xp = x.reshape(N, Cin, Hp, 2, Wp, 2).max(axis=(3, 5))
    # Free reshape: channels on sublanes, flattened spatial on lanes.
    xp = xp.reshape(N, Cin, HW)

    def bn_affine(g, b, m, v):
        s = (g / jnp.sqrt(v + eps)).astype(jnp.float32)
        t = (b - m * (g / jnp.sqrt(v + eps))).astype(jnp.float32)
        return s.reshape(-1, 1), t.reshape(-1, 1)

    s1, t1 = bn_affine(params["bn1_gamma"], params["bn1_beta"], params["bn1_mean"], params["bn1_var"])
    s2, t2 = bn_affine(params["bn2_gamma"], params["bn2_beta"], params["bn2_mean"], params["bn2_var"])
    s3, t3 = bn_affine(params["bn3_gamma"], params["bn3_beta"], params["bn3_mean"], params["bn3_var"])

    def conv_w(w):  # (Cout, Cin, 3, 3) -> (9, Cout, Cin), tap-major (dy, dx)
        co, ci = w.shape[0], w.shape[1]
        return jnp.transpose(w, (2, 3, 0, 1)).reshape(9, co, ci).astype(jnp.float32)

    w1 = conv_w(params["conv1_w"]); b1 = params["conv1_b"].astype(jnp.float32).reshape(-1, 1)
    w2 = conv_w(params["conv2_w"]); b2 = params["conv2_b"].astype(jnp.float32).reshape(-1, 1)
    w3 = conv_w(params["conv3_w"]); b3 = params["conv3_b"].astype(jnp.float32).reshape(-1, 1)

    # Flat padded-activation scratch length: one zero row above/below plus one extra
    # element on each side for the corner taps.
    Lpad = (Hp + 2) * Wp + 2

    kernel = functools.partial(_en_conv_kernel, Hp=Hp, Wp=Wp)

    out = pl.pallas_call(
        kernel,
        out_shape=jax.ShapeDtypeStruct((N, Cout, HW), x.dtype),
        grid_spec=pltpu.PrefetchScalarGridSpec(
            num_scalar_prefetch=0,
            grid=(N,),                                     # one full image per step (max tile)
            in_specs=[
                pl.BlockSpec((None, Cin, HW), lambda n: (n, 0, 0)),   # pooled input, per batch
                _resident(s1), _resident(t1),
                _resident(s2), _resident(t2),
                _resident(s3), _resident(t3),
                _resident(w1), _resident(b1),
                _resident(w2), _resident(b2),
                _resident(w3), _resident(b3),
            ],
            out_specs=pl.BlockSpec((None, Cout, HW), lambda n: (n, 0, 0)),
            scratch_shapes=[
                pltpu.VMEM((Cin, Lpad), jnp.float32),
                pltpu.VMEM((Cout, Lpad), jnp.float32),
            ],
        ),
        compiler_params=pltpu.CompilerParams(
            dimension_semantics=("parallel",),             # batch axis -> both TCs on v7x
            vmem_limit_bytes=32 * 1024 * 1024,             # explicit, safe on v5e/v6e/v7x
        ),
    )(xp, s1, t1, s2, t2, s3, t3, w1, b1, w2, b2, w3, b3)

    # Free reshape back to NCHW.
    return out.reshape(N, Cout, Hp, Wp)


def _reference_forward(x, p, *, eps=1e-5):
    """Pure-JAX reference for en_conv (inference-mode BN)."""
    N, Cin, H, W = x.shape
    xp = x.reshape(N, Cin, H // 2, 2, W // 2, 2).max(axis=(3, 5))

    def bn_relu(v, g, b, m, var):
        s = g / jnp.sqrt(var + eps)
        y = v * s[None, :, None, None] + (b - m * s)[None, :, None, None]
        return jnp.maximum(y, 0.0)

    def conv(v, w, b):
        y = lax.conv_general_dilated(
            v, w, window_strides=(1, 1), padding=((1, 1), (1, 1)),
            dimension_numbers=("NCHW", "OIHW", "NCHW"),
            precision=lax.Precision.HIGHEST)
        return y + b[None, :, None, None]

    a1 = bn_relu(xp, p["bn1_gamma"], p["bn1_beta"], p["bn1_mean"], p["bn1_var"])
    y1 = conv(a1, p["conv1_w"], p["conv1_b"])
    a2 = bn_relu(y1, p["bn2_gamma"], p["bn2_beta"], p["bn2_mean"], p["bn2_var"])
    y2 = conv(a2, p["conv2_w"], p["conv2_b"])
    a3 = bn_relu(xp, p["bn3_gamma"], p["bn3_beta"], p["bn3_mean"], p["bn3_var"])
    y3 = conv(a3, p["conv3_w"], p["conv3_b"])
    return y2 + y3


if __name__ == "__main__":
    key = jax.random.PRNGKey(0)
    keys = jax.random.split(key, 20)

    N, Cin, Cout, H, W = 2, 4, 8, 16, 16

    x = jax.random.normal(keys[0], (N, Cin, H, W), dtype=jnp.float32)

    def bn_params(kg, kb, km, kv, c):
        return (1.0 + 0.1 * jax.random.normal(kg, (c,), jnp.float32),   # gamma
                0.1 * jax.random.normal(kb, (c,), jnp.float32),         # beta
                0.1 * jax.random.normal(km, (c,), jnp.float32),         # running mean
                0.5 + jax.random.uniform(kv, (c,), jnp.float32))        # running var (>0)

    g1, be1, m1, v1 = bn_params(keys[1], keys[2], keys[3], keys[4], Cin)
    g2, be2, m2, v2 = bn_params(keys[5], keys[6], keys[7], keys[8], Cout)
    g3, be3, m3, v3 = bn_params(keys[9], keys[10], keys[11], keys[12], Cin)

    params = dict(
        bn1_gamma=g1, bn1_beta=be1, bn1_mean=m1, bn1_var=v1,
        bn2_gamma=g2, bn2_beta=be2, bn2_mean=m2, bn2_var=v2,
        bn3_gamma=g3, bn3_beta=be3, bn3_mean=m3, bn3_var=v3,
        conv1_w=0.1 * jax.random.normal(keys[13], (Cout, Cin, 3, 3), jnp.float32),
        conv1_b=0.1 * jax.random.normal(keys[14], (Cout,), jnp.float32),
        conv2_w=0.1 * jax.random.normal(keys[15], (Cout, Cout, 3, 3), jnp.float32),
        conv2_b=0.1 * jax.random.normal(keys[16], (Cout,), jnp.float32),
        conv3_w=0.1 * jax.random.normal(keys[17], (Cout, Cin, 3, 3), jnp.float32),
        conv3_b=0.1 * jax.random.normal(keys[18], (Cout,), jnp.float32),
    )

    y = en_conv_forward(x, params)
    y = jax.block_until_ready(y)

    ref = _reference_forward(x, params)
    assert y.shape == (N, Cout, H // 2, W // 2)
    assert jnp.allclose(y, ref, atol=1e-4, rtol=1e-4), float(jnp.max(jnp.abs(y - ref)))

    print("KERNEL_OK")
</pallas_src>

<mosaic_0001>
module attributes {stable_mosaic.version = 11 : i64} {
  func.func @_en_conv_kernel(%arg0: i32, %arg1: memref<1x4x64xf32, #tpu.memory_space<vmem>>, %arg2: memref<4x1xf32, #tpu.memory_space<vmem>>, %arg3: memref<4x1xf32, #tpu.memory_space<vmem>>, %arg4: memref<8x1xf32, #tpu.memory_space<vmem>>, %arg5: memref<8x1xf32, #tpu.memory_space<vmem>>, %arg6: memref<4x1xf32, #tpu.memory_space<vmem>>, %arg7: memref<4x1xf32, #tpu.memory_space<vmem>>, %arg8: memref<9x8x4xf32, #tpu.memory_space<vmem>>, %arg9: memref<8x1xf32, #tpu.memory_space<vmem>>, %arg10: memref<9x8x8xf32, #tpu.memory_space<vmem>>, %arg11: memref<8x1xf32, #tpu.memory_space<vmem>>, %arg12: memref<9x8x4xf32, #tpu.memory_space<vmem>>, %arg13: memref<8x1xf32, #tpu.memory_space<vmem>>, %arg14: memref<1x8x64xf32, #tpu.memory_space<vmem>>, %arg15: memref<4x82xf32, #tpu.memory_space<vmem>>, %arg16: memref<8x82xf32, #tpu.memory_space<vmem>>) attributes {dimension_semantics = [#tpu.dimension_semantics<parallel>], iteration_bounds = array<i64: 2>, scalar_prefetch = 0 : i64, scratch_operands = 2 : i64, tpu.core_type = #tpu.core_type<tc>, window_params = [{transform_indices = @transform_0, window_bounds = array<i64: 1, 4, 64>}, {pipeline_mode = #tpu.pipeline_mode<synchronous>, transform_indices = @transform_1, window_bounds = array<i64: 4, 1>}, {pipeline_mode = #tpu.pipeline_mode<synchronous>, transform_indices = @transform_2, window_bounds = array<i64: 4, 1>}, {pipeline_mode = #tpu.pipeline_mode<synchronous>, transform_indices = @transform_3, window_bounds = array<i64: 8, 1>}, {pipeline_mode = #tpu.pipeline_mode<synchronous>, transform_indices = @transform_4, window_bounds = array<i64: 8, 1>}, {pipeline_mode = #tpu.pipeline_mode<synchronous>, transform_indices = @transform_5, window_bounds = array<i64: 4, 1>}, {pipeline_mode = #tpu.pipeline_mode<synchronous>, transform_indices = @transform_6, window_bounds = array<i64: 4, 1>}, {pipeline_mode = #tpu.pipeline_mode<synchronous>, transform_indices = @transform_7, window_bounds = array<i64: 9, 8, 4>}, {pipeline_mode = #tpu.pipeline_mode<synchronous>, transform_indices = @transform_8, window_bounds = array<i64: 8, 1>}, {pipeline_mode = #tpu.pipeline_mode<synchronous>, transform_indices = @transform_9, window_bounds = array<i64: 9, 8, 8>}, {pipeline_mode = #tpu.pipeline_mode<synchronous>, transform_indices = @transform_10, window_bounds = array<i64: 8, 1>}, {pipeline_mode = #tpu.pipeline_mode<synchronous>, transform_indices = @transform_11, window_bounds = array<i64: 9, 8, 4>}, {pipeline_mode = #tpu.pipeline_mode<synchronous>, transform_indices = @transform_12, window_bounds = array<i64: 8, 1>}, {transform_indices = @transform_13, window_bounds = array<i64: 1, 8, 64>}]} {
    %c0 = arith.constant 0 : index
    %c0_0 = arith.constant 0 : index
    %c0_1 = arith.constant 0 : index
    %0 = vector.load %arg1[%c0, %c0_0, %c0_1] : memref<1x4x64xf32, #tpu.memory_space<vmem>>, vector<1x4x64xf32>
    %1 = vector.shape_cast %0 : vector<1x4x64xf32> to vector<4x64xf32>
    %2 = tpu.iota {dimensions = array<i32: 1>} : vector<1x64xi32>
    %c8_i32 = arith.constant 8 : i32
    %c0_i32 = arith.constant 0 : i32
    %3 = arith.cmpi eq, %c8_i32, %c0_i32 : i32
    %c1_i32 = arith.constant 1 : i32
    %4 = arith.select %3, %c1_i32, %c8_i32 : i32
    %5 = vector.broadcast %4 : i32 to vector<1x64xi32>
    %6 = arith.remsi %2, %5 : vector<1x64xi32>
    %c0_i32_2 = arith.constant 0 : i32
    %7 = vector.broadcast %c0_i32_2 : i32 to vector<1x64xi32>
    %8 = arith.cmpi ne, %6, %7 : vector<1x64xi32>
    %c0_i32_3 = arith.constant 0 : i32
    %9 = vector.broadcast %c0_i32_3 : i32 to vector<1x64xi32>
    %10 = arith.cmpi slt, %6, %9 : vector<1x64xi32>
    %c0_i32_4 = arith.constant 0 : i32
    %11 = arith.cmpi slt, %4, %c0_i32_4 : i32
    %12 = vector.broadcast %11 : i1 to vector<1x64xi1>
    %13 = vector.broadcast %12 : vector<1x64xi1> to vector<1x64xi1>
    %14 = arith.xori %10, %13 : vector<1x64xi1>
    %15 = arith.andi %14, %8 : vector<1x64xi1>
    %16 = vector.broadcast %4 : i32 to vector<1x64xi32>
    %17 = arith.addi %6, %16 : vector<1x64xi32>
    %18 = arith.select %15, %17, %6 : vector<1x64xi1>, vector<1x64xi32>
    %c0_5 = arith.constant 0 : index
    %c0_6 = arith.constant 0 : index
    %19 = vector.load %arg2[%c0_5, %c0_6] : memref<4x1xf32, #tpu.memory_space<vmem>>, vector<4x1xf32>
    %20 = vector.broadcast %19 : vector<4x1xf32> to vector<4x64xf32>
    %21 = arith.mulf %1, %20 : vector<4x64xf32>
    %c0_7 = arith.constant 0 : index
    %c0_8 = arith.constant 0 : index
    %22 = vector.load %arg3[%c0_7, %c0_8] : memref<4x1xf32, #tpu.memory_space<vmem>>, vector<4x1xf32>
    %23 = vector.broadcast %22 : vector<4x1xf32> to vector<4x64xf32>
    %24 = arith.addf %21, %23 : vector<4x64xf32>
    %cst = arith.constant 0.000000e+00 : f32
    %25 = vector.broadcast %cst : f32 to vector<4x64xf32>
    %26 = arith.maximumf %24, %25 : vector<4x64xf32>
    %cst_9 = arith.constant 0.000000e+00 : f32
    %27 = vector.broadcast %cst_9 : f32 to vector<4x82xf32>
    %c0_10 = arith.constant 0 : index
    %c0_11 = arith.constant 0 : index
    %28 = vector.load %arg15[%c0_10, %c0_11] : memref<4x82xf32, #tpu.memory_space<vmem>>, vector<4x82xf32>
    tpu.vector_store %arg15[%c0_10, %c0_11], %27 {strides = array<i32>} : memref<4x82xf32, #tpu.memory_space<vmem>>, vector<4x82xf32>,
    %c0_12 = arith.constant 0 : index
    %c9 = arith.constant 9 : index
    %29 = vector.load %arg15[%c0_12, %c9] : memref<4x82xf32, #tpu.memory_space<vmem>>, vector<4x64xf32>
    tpu.vector_store %arg15[%c0_12, %c9], %26 {strides = array<i32>} : memref<4x82xf32, #tpu.memory_space<vmem>>, vector<4x64xf32>,
    %cst_13 = arith.constant 0.000000e+00 : f32
    %30 = vector.broadcast %cst_13 : f32 to vector<8x64xf32>
    %c0_14 = arith.constant 0 : index
    %c0_15 = arith.constant 0 : index
    %31 = vector.load %arg15[%c0_14, %c0_15] : memref<4x82xf32, #tpu.memory_space<vmem>>, vector<4x64xf32>
    %c-1_i32 = arith.constant -1 : i32
    %32 = vector.broadcast %c-1_i32 : i32 to vector<1x64xi32>
    %33 = arith.addi %18, %32 : vector<1x64xi32>
    %c0_i32_16 = arith.constant 0 : i32
    %34 = vector.broadcast %c0_i32_16 : i32 to vector<1x64xi32>
    %35 = arith.cmpi sge, %33, %34 : vector<1x64xi32>
    %c-1_i32_17 = arith.constant -1 : i32
    %36 = vector.broadcast %c-1_i32_17 : i32 to vector<1x64xi32>
    %37 = arith.addi %18, %36 : vector<1x64xi32>
    %c8_i32_18 = arith.constant 8 : i32
    %38 = vector.broadcast %c8_i32_18 : i32 to vector<1x64xi32>
    %39 = arith.cmpi slt, %37, %38 : vector<1x64xi32>
    %40 = arith.andi %35, %39 : vector<1x64xi1>
    %cst_19 = arith.constant 0.000000e+00 : f32
    %41 = vector.shape_cast %40 : vector<1x64xi1> to vector<1x64xi1>
    %42 = vector.broadcast %41 : vector<1x64xi1> to vector<4x64xi1>
    %43 = vector.broadcast %cst_19 : f32 to vector<4x64xf32>
    %44 = arith.select %42, %31, %43 : vector<4x64xi1>, vector<4x64xf32>
    %c0_20 = arith.constant 0 : index
    %c0_21 = arith.constant 0 : index
    %c0_22 = arith.constant 0 : index
    %45 = vector.load %arg8[%c0_20, %c0_21, %c0_22] : memref<9x8x4xf32, #tpu.memory_space<vmem>>, vector<1x8x4xf32>
    %46 = vector.shape_cast %45 : vector<1x8x4xf32> to vector<8x4xf32>
    %47 = vector.extract_strided_slice %46 {offsets = [0, 0], sizes = [8, 1], strides = [1, 1]} : vector<8x4xf32> to vector<8x1xf32>
    %48 = vector.extract_strided_slice %44 {offsets = [0, 0], sizes = [1, 64], strides = [1, 1]} : vector<4x64xf32> to vector<1x64xf32>
    %49 = vector.broadcast %47 : vector<8x1xf32> to vector<8x64xf32>
    %50 = vector.broadcast %48 : vector<1x64xf32> to vector<8x64xf32>
    %51 = arith.mulf %49, %50 : vector<8x64xf32>
    %52 = arith.addf %30, %51 : vector<8x64xf32>
    %53 = vector.extract_strided_slice %46 {offsets = [0, 1], sizes = [8, 1], strides = [1, 1]} : vector<8x4xf32> to vector<8x1xf32>
    %54 = vector.extract_strided_slice %44 {offsets = [1, 0], sizes = [1, 64], strides = [1, 1]} : vector<4x64xf32> to vector<1x64xf32>
    %55 = vector.broadcast %53 : vector<8x1xf32> to vector<8x64xf32>
    %56 = vector.broadcast %54 : vector<1x64xf32> to vector<8x64xf32>
    %57 = arith.mulf %55, %56 : vector<8x64xf32>
    %58 = arith.addf %52, %57 : vector<8x64xf32>
    %59 = vector.extract_strided_slice %46 {offsets = [0, 2], sizes = [8, 1], strides = [1, 1]} : vector<8x4xf32> to vector<8x1xf32>
    %60 = vector.extract_strided_slice %44 {offsets = [2, 0], sizes = [1, 64], strides = [1, 1]} : vector<4x64xf32> to vector<1x64xf32>
    %61 = vector.broadcast %59 : vector<8x1xf32> to vector<8x64xf32>
    %62 = vector.broadcast %60 : vector<1x64xf32> to vector<8x64xf32>
    %63 = arith.mulf %61, %62 : vector<8x64xf32>
    %64 = arith.addf %58, %63 : vector<8x64xf32>
    %65 = vector.extract_strided_slice %46 {offsets = [0, 3], sizes = [8, 1], strides = [1, 1]} : vector<8x4xf32> to vector<8x1xf32>
    %66 = vector.extract_strided_slice %44 {offsets = [3, 0], sizes = [1, 64], strides = [1, 1]} : vector<4x64xf32> to vector<1x64xf32>
    %67 = vector.broadcast %65 : vector<8x1xf32> to vector<8x64xf32>
    %68 = vector.broadcast %66 : vector<1x64xf32> to vector<8x64xf32>
    %69 = arith.mulf %67, %68 : vector<8x64xf32>
    %70 = arith.addf %64, %69 : vector<8x64xf32>
    %c0_23 = arith.constant 0 : index
    %c1 = arith.constant 1 : index
    %71 = vector.load %arg15[%c0_23, %c1] : memref<4x82xf32, #tpu.memory_space<vmem>>, vector<4x64xf32>
    %c1_24 = arith.constant 1 : index
    %c0_25 = arith.constant 0 : index
    %c0_26 = arith.constant 0 : index
    %72 = vector.load %arg8[%c1_24, %c0_25, %c0_26] : memref<9x8x4xf32, #tpu.memory_space<vmem>>, vector<1x8x4xf32>
    %73 = vector.shape_cast %72 : vector<1x8x4xf32> to vector<8x4xf32>
    %74 = vector.extract_strided_slice %73 {offsets = [0, 0], sizes = [8, 1], strides = [1, 1]} : vector<8x4xf32> to vector<8x1xf32>
    %75 = vector.extract_strided_slice %71 {offsets = [0, 0], sizes = [1, 64], strides = [1, 1]} : vector<4x64xf32> to vector<1x64xf32>
    %76 = vector.broadcast %74 : vector<8x1xf32> to vector<8x64xf32>
    %77 = vector.broadcast %75 : vector<1x64xf32> to vector<8x64xf32>
    %78 = arith.mulf %76, %77 : vector<8x64xf32>
    %79 = arith.addf %70, %78 : vector<8x64xf32>
    %80 = vector.extract_strided_slice %73 {offsets = [0, 1], sizes = [8, 1], strides = [1, 1]} : vector<8x4xf32> to vector<8x1xf32>
    %81 = vector.extract_strided_slice %71 {offsets = [1, 0], sizes = [1, 64], strides = [1, 1]} : vector<4x64xf32> to vector<1x64xf32>
    %82 = vector.broadcast %80 : vector<8x1xf32> to vector<8x64xf32>
    %83 = vector.broadcast %81 : vector<1x64xf32> to vector<8x64xf32>
    %84 = arith.mulf %82, %83 : vector<8x64xf32>
    %85 = arith.addf %79, %84 : vector<8x64xf32>
    %86 = vector.extract_strided_slice %73 {offsets = [0, 2], sizes = [8, 1], strides = [1, 1]} : vector<8x4xf32> to vector<8x1xf32>
    %87 = vector.extract_strided_slice %71 {offsets = [2, 0], sizes = [1, 64], strides = [1, 1]} : vector<4x64xf32> to vector<1x64xf32>
    %88 = vector.broadcast %86 : vector<8x1xf32> to vector<8x64xf32>
    %89 = vector.broadcast %87 : vector<1x64xf32> to vector<8x64xf32>
    %90 = arith.mulf %88, %89 : vector<8x64xf32>
    %91 = arith.addf %85, %90 : vector<8x64xf32>
    %92 = vector.extract_strided_slice %73 {offsets = [0, 3], sizes = [8, 1], strides = [1, 1]} : vector<8x4xf32> to vector<8x1xf32>
    %93 = vector.extract_strided_slice %71 {offsets = [3, 0], sizes = [1, 64], strides = [1, 1]} : vector<4x64xf32> to vector<1x64xf32>
    %94 = vector.broadcast %92 : vector<8x1xf32> to vector<8x64xf32>
    %95 = vector.broadcast %93 : vector<1x64xf32> to vector<8x64xf32>
    %96 = arith.mulf %94, %95 : vector<8x64xf32>
    %97 = arith.addf %91, %96 : vector<8x64xf32>
    %c0_27 = arith.constant 0 : index
    %c2 = arith.constant 2 : index
    %98 = vector.load %arg15[%c0_27, %c2] : memref<4x82xf32, #tpu.memory_space<vmem>>, vector<4x64xf32>
    %c1_i32_28 = arith.constant 1 : i32
    %99 = vector.broadcast %c1_i32_28 : i32 to vector<1x64xi32>
    %100 = arith.addi %18, %99 : vector<1x64xi32>
    %c0_i32_29 = arith.constant 0 : i32
    %101 = vector.broadcast %c0_i32_29 : i32 to vector<1x64xi32>
    %102 = arith.cmpi sge, %100, %101 : vector<1x64xi32>
    %c1_i32_30 = arith.constant 1 : i32
    %103 = vector.broadcast %c1_i32_30 : i32 to vector<1x64xi32>
    %104 = arith.addi %18, %103 : vector<1x64xi32>
    %c8_i32_31 = arith.constant 8 : i32
    %105 = vector.broadcast %c8_i32_31 : i32 to vector<1x64xi32>
    %106 = arith.cmpi slt, %104, %105 : vector<1x64xi32>
    %107 = arith.andi %102, %106 : vector<1x64xi1>
    %cst_32 = arith.constant 0.000000e+00 : f32
    %108 = vector.shape_cast %107 : vector<1x64xi1> to vector<1x64xi1>
    %109 = vector.broadcast %108 : vector<1x64xi1> to vector<4x64xi1>
    %110 = vector.broadcast %cst_32 : f32 to vector<4x64xf32>
    %111 = arith.select %109, %98, %110 : vector<4x64xi1>, vector<4x64xf32>
    %c2_33 = arith.constant 2 : index
    %c0_34 = arith.constant 0 : index
    %c0_35 = arith.constant 0 : index
    %112 = vector.load %arg8[%c2_33, %c0_34, %c0_35] : memref<9x8x4xf32, #tpu.memory_space<vmem>>, vector<1x8x4xf32>
    %113 = vector.shape_cast %112 : vector<1x8x4xf32> to vector<8x4xf32>
    %114 = vector.extract_strided_slice %113 {offsets = [0, 0], sizes = [8, 1], strides = [1, 1]} : vector<8x4xf32> to vector<8x1xf32>
    %115 = vector.extract_strided_slice %111 {offsets = [0, 0], sizes = [1, 64], strides = [1, 1]} : vector<4x64xf32> to vector<1x64xf32>
    %116 = vector.broadcast %114 : vector<8x1xf32> to vector<8x64xf32>
    %117 = vector.broadcast %115 : vector<1x64xf32> to vector<8x64xf32>
    %118 = arith.mulf %116, %117 : vector<8x64xf32>
    %119 = arith.addf %97, %118 : vector<8x64xf32>
    %120 = vector.extract_strided_slice %113 {offsets = [0, 1], sizes = [8, 1], strides = [1, 1]} : vector<8x4xf32> to vector<8x1xf32>
    %121 = vector.extract_strided_slice %111 {offsets = [1, 0], sizes = [1, 64], strides = [1, 1]} : vector<4x64xf32> to vector<1x64xf32>
    %122 = vector.broadcast %120 : vector<8x1xf32> to vector<8x64xf32>
    %123 = vector.broadcast %121 : vector<1x64xf32> to vector<8x64xf32>
    %124 = arith.mulf %122, %123 : vector<8x64xf32>
    %125 = arith.addf %119, %124 : vector<8x64xf32>
    %126 = vector.extract_strided_slice %113 {offsets = [0, 2], sizes = [8, 1], strides = [1, 1]} : vector<8x4xf32> to vector<8x1xf32>
    %127 = vector.extract_strided_slice %111 {offsets = [2, 0], sizes = [1, 64], strides = [1, 1]} : vector<4x64xf32> to vector<1x64xf32>
    %128 = vector.broadcast %126 : vector<8x1xf32> to vector<8x64xf32>
    %129 = vector.broadcast %127 : vector<1x64xf32> to vector<8x64xf32>
    %130 = arith.mulf %128, %129 : vector<8x64xf32>
    %131 = arith.addf %125, %130 : vector<8x64xf32>
    %132 = vector.extract_strided_slice %113 {offsets = [0, 3], sizes = [8, 1], strides = [1, 1]} : vector<8x4xf32> to vector<8x1xf32>
    %133 = vector.extract_strided_slice %111 {offsets = [3, 0], sizes = [1, 64], strides = [1, 1]} : vector<4x64xf32> to vector<1x64xf32>
    %134 = vector.broadcast %132 : vector<8x1xf32> to vector<8x64xf32>
    %135 = vector.broadcast %133 : vector<1x64xf32> to vector<8x64xf32>
    %136 = arith.mulf %134, %135 : vector<8x64xf32>
    %137 = arith.addf %131, %136 : vector<8x64xf32>
    %c0_36 = arith.constant 0 : index
    %c8 = arith.constant 8 : index
    %138 = vector.load %arg15[%c0_36, %c8] : memref<4x82xf32, #tpu.memory_space<vmem>>, vector<4x64xf32>
    %c-1_i32_37 = arith.constant -1 : i32
    %139 = vector.broadcast %c-1_i32_37 : i32 to vector<1x64xi32>
    %140 = arith.addi %18, %139 : vector<1x64xi32>
    %c0_i32_38 = arith.constant 0 : i32
    %141 = vector.broadcast %c0_i32_38 : i32 to vector<1x64xi32>
    %142 = arith.cmpi sge, %140, %141 : vector<1x64xi32>
    %c-1_i32_39 = arith.constant -1 : i32
    %143 = vector.broadcast %c-1_i32_39 : i32 to vector<1x64xi32>
    %144 = arith.addi %18, %143 : vector<1x64xi32>
    %c8_i32_40 = arith.constant 8 : i32
    %145 = vector.broadcast %c8_i32_40 : i32 to vector<1x64xi32>
    %146 = arith.cmpi slt, %144, %145 : vector<1x64xi32>
    %147 = arith.andi %142, %146 : vector<1x64xi1>
    %cst_41 = arith.constant 0.000000e+00 : f32
    %148 = vector.shape_cast %147 : vector<1x64xi1> to vector<1x64xi1>
    %149 = vector.broadcast %148 : vector<1x64xi1> to vector<4x64xi1>
    %150 = vector.broadcast %cst_41 : f32 to vector<4x64xf32>
    %151 = arith.select %149, %138, %150 : vector<4x64xi1>, vector<4x64xf32>
    %c3 = arith.constant 3 : index
    %c0_42 = arith.constant 0 : index
    %c0_43 = arith.constant 0 : index
    %152 = vector.load %arg8[%c3, %c0_42, %c0_43] : memref<9x8x4xf32, #tpu.memory_space<vmem>>, vector<1x8x4xf32>
    %153 = vector.shape_cast %152 : vector<1x8x4xf32> to vector<8x4xf32>
    %154 = vector.extract_strided_slice %153 {offsets = [0, 0], sizes = [8, 1], strides = [1, 1]} : vector<8x4xf32> to vector<8x1xf32>
    %155 = vector.extract_strided_slice %151 {offsets = [0, 0], sizes = [1, 64], strides = [1, 1]} : vector<4x64xf32> to vector<1x64xf32>
    %156 = vector.broadcast %154 : vector<8x1xf32> to vector<8x64xf32>
    %157 = vector.broadcast %155 : vector<1x64xf32> to vector<8x64xf32>
    %158 = arith.mulf %156, %157 : vector<8x64xf32>
    %159 = arith.addf %137, %158 : vector<8x64xf32>
    %160 = vector.extract_strided_slice %153 {offsets = [0, 1], sizes = [8, 1], strides = [1, 1]} : vector<8x4xf32> to vector<8x1xf32>
    %161 = vector.extract_strided_slice %151 {offsets = [1, 0], sizes = [1, 64], strides = [1, 1]} : vector<4x64xf32> to vector<1x64xf32>
    %162 = vector.broadcast %160 : vector<8x1xf32> to vector<8x64xf32>
    %163 = vector.broadcast %161 : vector<1x64xf32> to vector<8x64xf32>
    %164 = arith.mulf %162, %163 : vector<8x64xf32>
    %165 = arith.addf %159, %164 : vector<8x64xf32>
    %166 = vector.extract_strided_slice %153 {offsets = [0, 2], sizes = [8, 1], strides = [1, 1]} : vector<8x4xf32> to vector<8x1xf32>
    %167 = vector.extract_strided_slice %151 {offsets = [2, 0], sizes = [1, 64], strides = [1, 1]} : vector<4x64xf32> to vector<1x64xf32>
    %168 = vector.broadcast %166 : vector<8x1xf32> to vector<8x64xf32>
    %169 = vector.broadcast %167 : vector<1x64xf32> to vector<8x64xf32>
    %170 = arith.mulf %168, %169 : vector<8x64xf32>
    %171 = arith.addf %165, %170 : vector<8x64xf32>
    %172 = vector.extract_strided_slice %153 {offsets = [0, 3], sizes = [8, 1], strides = [1, 1]} : vector<8x4xf32> to vector<8x1xf32>
    %173 = vector.extract_strided_slice %151 {offsets = [3, 0], sizes = [1, 64], strides = [1, 1]} : vector<4x64xf32> to vector<1x64xf32>
    %174 = vector.broadcast %172 : vector<8x1xf32> to vector<8x64xf32>
    %175 = vector.broadcast %173 : vector<1x64xf32> to vector<8x64xf32>
    %176 = arith.mulf %174, %175 : vector<8x64xf32>
    %177 = arith.addf %171, %176 : vector<8x64xf32>
    %c0_44 = arith.constant 0 : index
    %c9_45 = arith.constant 9 : index
    %178 = vector.load %arg15[%c0_44, %c9_45] : memref<4x82xf32, #tpu.memory_space<vmem>>, vector<4x64xf32>
    %c4 = arith.constant 4 : index
    %c0_46 = arith.constant 0 : index
    %c0_47 = arith.constant 0 : index
    %179 = vector.load %arg8[%c4, %c0_46, %c0_47] : memref<9x8x4xf32, #tpu.memory_space<vmem>>, vector<1x8x4xf32>
    %180 = vector.shape_cast %179 : vector<1x8x4xf32> to vector<8x4xf32>
    %181 = vector.extract_strided_slice %180 {offsets = [0, 0], sizes = [8, 1], strides = [1, 1]} : vector<8x4xf32> to vector<8x1xf32>
    %182 = vector.extract_strided_slice %178 {offsets = [0, 0], sizes = [1, 64], strides = [1, 1]} : vector<4x64xf32> to vector<1x64xf32>
    %183 = vector.broadcast %181 : vector<8x1xf32> to vector<8x64xf32>
    %184 = vector.broadcast %182 : vector<1x64xf32> to vector<8x64xf32>
    %185 = arith.mulf %183, %184 : vector<8x64xf32>
    %186 = arith.addf %177, %185 : vector<8x64xf32>
    %187 = vector.extract_strided_slice %180 {offsets = [0, 1], sizes = [8, 1], strides = [1, 1]} : vector<8x4xf32> to vector<8x1xf32>
    %188 = vector.extract_strided_slice %178 {offsets = [1, 0], sizes = [1, 64], strides = [1, 1]} : vector<4x64xf32> to vector<1x64xf32>
    %189 = vector.broadcast %187 : vector<8x1xf32> to vector<8x64xf32>
    %190 = vector.broadcast %188 : vector<1x64xf32> to vector<8x64xf32>
    %191 = arith.mulf %189, %190 : vector<8x64xf32>
    %192 = arith.addf %186, %191 : vector<8x64xf32>
    %193 = vector.extract_strided_slice %180 {offsets = [0, 2], sizes = [8, 1], strides = [1, 1]} : vector<8x4xf32> to vector<8x1xf32>
    %194 = vector.extract_strided_slice %178 {offsets = [2, 0], sizes = [1, 64], strides = [1, 1]} : vector<4x64xf32> to vector<1x64xf32>
    %195 = vector.broadcast %193 : vector<8x1xf32> to vector<8x64xf32>
    %196 = vector.broadcast %194 : vector<1x64xf32> to vector<8x64xf32>
    %197 = arith.mulf %195, %196 : vector<8x64xf32>
    %198 = arith.addf %192, %197 : vector<8x64xf32>
    %199 = vector.extract_strided_slice %180 {offsets = [0, 3], sizes = [8, 1], strides = [1, 1]} : vector<8x4xf32> to vector<8x1xf32>
    %200 = vector.extract_strided_slice %178 {offsets = [3, 0], sizes = [1, 64], strides = [1, 1]} : vector<4x64xf32> to vector<1x64xf32>
    %201 = vector.broadcast %199 : vector<8x1xf32> to vector<8x64xf32>
    %202 = vector.broadcast %200 : vector<1x64xf32> to vector<8x64xf32>
    %203 = arith.mulf %201, %202 : vector<8x64xf32>
    %204 = arith.addf %198, %203 : vector<8x64xf32>
    %c0_48 = arith.constant 0 : index
    %c10 = arith.constant 10 : index
    %205 = vector.load %arg15[%c0_48, %c10] : memref<4x82xf32, #tpu.memory_space<vmem>>, vector<4x64xf32>
    %c1_i32_49 = arith.constant 1 : i32
    %206 = vector.broadcast %c1_i32_49 : i32 to vector<1x64xi32>
    %207 = arith.addi %18, %206 : vector<1x64xi32>
    %c0_i32_50 = arith.constant 0 : i32
    %208 = vector.broadcast %c0_i32_50 : i32 to vector<1x64xi32>
    %209 = arith.cmpi sge, %207, %208 : vector<1x64xi32>
    %c1_i32_51 = arith.constant 1 : i32
    %210 = vector.broadcast %c1_i32_51 : i32 to vector<1x64xi32>
    %211 = arith.addi %18, %210 : vector<1x64xi32>
    %c8_i32_52 = arith.constant 8 : i32
    %212 = vector.broadcast %c8_i32_52 : i32 to vector<1x64xi32>
    %213 = arith.cmpi slt, %211, %212 : vector<1x64xi32>
    %214 = arith.andi %209, %213 : vector<1x64xi1>
    %cst_53 = arith.constant 0.000000e+00 : f32
    %215 = vector.shape_cast %214 : vector<1x64xi1> to vector<1x64xi1>
    %216 = vector.broadcast %215 : vector<1x64xi1> to vector<4x64xi1>
    %217 = vector.broadcast %cst_53 : f32 to vector<4x64xf32>
    %218 = arith.select %216, %205, %217 : vector<4x64xi1>, vector<4x64xf32>
    %c5 = arith.constant 5 : index
    %c0_54 = arith.constant 0 : index
    %c0_55 = arith.constant 0 : index
    %219 = vector.load %arg8[%c5, %c0_54, %c0_55] : memref<9x8x4xf32, #tpu.memory_space<vmem>>, vector<1x8x4xf32>
    %220 = vector.shape_cast %219 : vector<1x8x4xf32> to vector<8x4xf32>
    %221 = vector.extract_strided_slice %220 {offsets = [0, 0], sizes = [8, 1], strides = [1, 1]} : vector<8x4xf32> to vector<8x1xf32>
    %222 = vector.extract_strided_slice %218 {offsets = [0, 0], sizes = [1, 64], strides = [1, 1]} : vector<4x64xf32> to vector<1x64xf32>
    %223 = vector.broadcast %221 : vector<8x1xf32> to vector<8x64xf32>
    %224 = vector.broadcast %222 : vector<1x64xf32> to vector<8x64xf32>
    %225 = arith.mulf %223, %224 : vector<8x64xf32>
    %226 = arith.addf %204, %225 : vector<8x64xf32>
    %227 = vector.extract_strided_slice %220 {offsets = [0, 1], sizes = [8, 1], strides = [1, 1]} : vector<8x4xf32> to vector<8x1xf32>
    %228 = vector.extract_strided_slice %218 {offsets = [1, 0], sizes = [1, 64], strides = [1, 1]} : vector<4x64xf32> to vector<1x64xf32>
    %229 = vector.broadcast %227 : vector<8x1xf32> to vector<8x64xf32>
    %230 = vector.broadcast %228 : vector<1x64xf32> to vector<8x64xf32>
    %231 = arith.mulf %229, %230 : vector<8x64xf32>
    %232 = arith.addf %226, %231 : vector<8x64xf32>
    %233 = vector.extract_strided_slice %220 {offsets = [0, 2], sizes = [8, 1], strides = [1, 1]} : vector<8x4xf32> to vector<8x1xf32>
    %234 = vector.extract_strided_slice %218 {offsets = [2, 0], sizes = [1, 64], strides = [1, 1]} : vector<4x64xf32> to vector<1x64xf32>
    %235 = vector.broadcast %233 : vector<8x1xf32> to vector<8x64xf32>
    %236 = vector.broadcast %234 : vector<1x64xf32> to vector<8x64xf32>
    %237 = arith.mulf %235, %236 : vector<8x64xf32>
    %238 = arith.addf %232, %237 : vector<8x64xf32>
    %239 = vector.extract_strided_slice %220 {offsets = [0, 3], sizes = [8, 1], strides = [1, 1]} : vector<8x4xf32> to vector<8x1xf32>
    %240 = vector.extract_strided_slice %218 {offsets = [3, 0], sizes = [1, 64], strides = [1, 1]} : vector<4x64xf32> to vector<1x64xf32>
    %241 = vector.broadcast %239 : vector<8x1xf32> to vector<8x64xf32>
    %242 = vector.broadcast %240 : vector<1x64xf32> to vector<8x64xf32>
    %243 = arith.mulf %241, %242 : vector<8x64xf32>
    %244 = arith.addf %238, %243 : vector<8x64xf32>
    %c0_56 = arith.constant 0 : index
    %c16 = arith.constant 16 : index
    %245 = vector.load %arg15[%c0_56, %c16] : memref<4x82xf32, #tpu.memory_space<vmem>>, vector<4x64xf32>
    %c-1_i32_57 = arith.constant -1 : i32
    %246 = vector.broadcast %c-1_i32_57 : i32 to vector<1x64xi32>
    %247 = arith.addi %18, %246 : vector<1x64xi32>
    %c0_i32_58 = arith.constant 0 : i32
    %248 = vector.broadcast %c0_i32_58 : i32 to vector<1x64xi32>
    %249 = arith.cmpi sge, %247, %248 : vector<1x64xi32>
    %c-1_i32_59 = arith.constant -1 : i32
    %250 = vector.broadcast %c-1_i32_59 : i32 to vector<1x64xi32>
    %251 = arith.addi %18, %250 : vector<1x64xi32>
    %c8_i32_60 = arith.constant 8 : i32
    %252 = vector.broadcast %c8_i32_60 : i32 to vector<1x64xi32>
    %253 = arith.cmpi slt, %251, %252 : vector<1x64xi32>
    %254 = arith.andi %249, %253 : vector<1x64xi1>
    %cst_61 = arith.constant 0.000000e+00 : f32
    %255 = vector.shape_cast %254 : vector<1x64xi1> to vector<1x64xi1>
    %256 = vector.broadcast %255 : vector<1x64xi1> to vector<4x64xi1>
    %257 = vector.broadcast %cst_61 : f32 to vector<4x64xf32>
    %258 = arith.select %256, %245, %257 : vector<4x64xi1>, vector<4x64xf32>
    %c6 = arith.constant 6 : index
    %c0_62 = arith.constant 0 : index
    %c0_63 = arith.constant 0 : index
    %259 = vector.load %arg8[%c6, %c0_62, %c0_63] : memref<9x8x4xf32, #tpu.memory_space<vmem>>, vector<1x8x4xf32>
    %260 = vector.shape_cast %259 : vector<1x8x4xf32> to vector<8x4xf32>
    %261 = vector.extract_strided_slice %260 {offsets = [0, 0], sizes = [8, 1], strides = [1, 1]} : vector<8x4xf32> to vector<8x1xf32>
    %262 = vector.extract_strided_slice %258 {offsets = [0, 0], sizes = [1, 64], strides = [1, 1]} : vector<4x64xf32> to vector<1x64xf32>
    %263 = vector.broadcast %261 : vector<8x1xf32> to vector<8x64xf32>
    %264 = vector.broadcast %262 : vector<1x64xf32> to vector<8x64xf32>
    %265 = arith.mulf %263, %264 : vector<8x64xf32>
    %266 = arith.addf %244, %265 : vector<8x64xf32>
    %267 = vector.extract_strided_slice %260 {offsets = [0, 1], sizes = [8, 1], strides = [1, 1]} : vector<8x4xf32> to vector<8x1xf32>
    %268 = vector.extract_strided_slice %258 {offsets = [1, 0], sizes = [1, 64], strides = [1, 1]} : vector<4x64xf32> to vector<1x64xf32>
    %269 = vector.broadcast %267 : vector<8x1xf32> to vector<8x64xf32>
    %270 = vector.broadcast %268 : vector<1x64xf32> to vector<8x64xf32>
    %271 = arith.mulf %269, %270 : vector<8x64xf32>
    %272 = arith.addf %266, %271 : vector<8x64xf32>
    %273 = vector.extract_strided_slice %260 {offsets = [0, 2], sizes = [8, 1], strides = [1, 1]} : vector<8x4xf32> to vector<8x1xf32>
    %274 = vector.extract_strided_slice %258 {offsets = [2, 0], sizes = [1, 64], strides = [1, 1]} : vector<4x64xf32> to vector<1x64xf32>
    %275 = vector.broadcast %273 : vector<8x1xf32> to vector<8x64xf32>
    %276 = vector.broadcast %274 : vector<1x64xf32> to vector<8x64xf32>
    %277 = arith.mulf %275, %276 : vector<8x64xf32>
    %278 = arith.addf %272, %277 : vector<8x64xf32>
    %279 = vector.extract_strided_slice %260 {offsets = [0, 3], sizes = [8, 1], strides = [1, 1]} : vector<8x4xf32> to vector<8x1xf32>
    %280 = vector.extract_strided_slice %258 {offsets = [3, 0], sizes = [1, 64], strides = [1, 1]} : vector<4x64xf32> to vector<1x64xf32>
    %281 = vector.broadcast %279 : vector<8x1xf32> to vector<8x64xf32>
    %282 = vector.broadcast %280 : vector<1x64xf32> to vector<8x64xf32>
    %283 = arith.mulf %281, %282 : vector<8x64xf32>
    %284 = arith.addf %278, %283 : vector<8x64xf32>
    %c0_64 = arith.constant 0 : index
    %c17 = arith.constant 17 : index
    %285 = vector.load %arg15[%c0_64, %c17] : memref<4x82xf32, #tpu.memory_space<vmem>>, vector<4x64xf32>
    %c7 = arith.constant 7 : index
    %c0_65 = arith.constant 0 : index
    %c0_66 = arith.constant 0 : index
    %286 = vector.load %arg8[%c7, %c0_65, %c0_66] : memref<9x8x4xf32, #tpu.memory_space<vmem>>, vector<1x8x4xf32>
    %287 = vector.shape_cast %286 : vector<1x8x4xf32> to vector<8x4xf32>
    %288 = vector.extract_strided_slice %287 {offsets = [0, 0], sizes = [8, 1], strides = [1, 1]} : vector<8x4xf32> to vector<8x1xf32>
    %289 = vector.extract_strided_slice %285 {offsets = [0, 0], sizes = [1, 64], strides = [1, 1]} : vector<4x64xf32> to vector<1x64xf32>
    %290 = vector.broadcast %288 : vector<8x1xf32> to vector<8x64xf32>
    %291 = vector.broadcast %289 : vector<1x64xf32> to vector<8x64xf32>
    %292 = arith.mulf %290, %291 : vector<8x64xf32>
    %293 = arith.addf %284, %292 : vector<8x64xf32>
    %294 = vector.extract_strided_slice %287 {offsets = [0, 1], sizes = [8, 1], strides = [1, 1]} : vector<8x4xf32> to vector<8x1xf32>
    %295 = vector.extract_strided_slice %285 {offsets = [1, 0], sizes = [1, 64], strides = [1, 1]} : vector<4x64xf32> to vector<1x64xf32>
    %296 = vector.broadcast %294 : vector<8x1xf32> to vector<8x64xf32>
    %297 = vector.broadcast %295 : vector<1x64xf32> to vector<8x64xf32>
    %298 = arith.mulf %296, %297 : vector<8x64xf32>
    %299 = arith.addf %293, %298 : vector<8x64xf32>
    %300 = vector.extract_strided_slice %287 {offsets = [0, 2], sizes = [8, 1], strides = [1, 1]} : vector<8x4xf32> to vector<8x1xf32>
    %301 = vector.extract_strided_slice %285 {offsets = [2, 0], sizes = [1, 64], strides = [1, 1]} : vector<4x64xf32> to vector<1x64xf32>
    %302 = vector.broadcast %300 : vector<8x1xf32> to vector<8x64xf32>
    %303 = vector.broadcast %301 : vector<1x64xf32> to vector<8x64xf32>
    %304 = arith.mulf %302, %303 : vector<8x64xf32>
    %305 = arith.addf %299, %304 : vector<8x64xf32>
    %306 = vector.extract_strided_slice %287 {offsets = [0, 3], sizes = [8, 1], strides = [1, 1]} : vector<8x4xf32> to vector<8x1xf32>
    %307 = vector.extract_strided_slice %285 {offsets = [3, 0], sizes = [1, 64], strides = [1, 1]} : vector<4x64xf32> to vector<1x64xf32>
    %308 = vector.broadcast %306 : vector<8x1xf32> to vector<8x64xf32>
    %309 = vector.broadcast %307 : vector<1x64xf32> to vector<8x64xf32>
    %310 = arith.mulf %308, %309 : vector<8x64xf32>
    %311 = arith.addf %305, %310 : vector<8x64xf32>
    %c0_67 = arith.constant 0 : index
    %c18 = arith.constant 18 : index
    %312 = vector.load %arg15[%c0_67, %c18] : memref<4x82xf32, #tpu.memory_space<vmem>>, vector<4x64xf32>
    %c1_i32_68 = arith.constant 1 : i32
    %313 = vector.broadcast %c1_i32_68 : i32 to vector<1x64xi32>
    %314 = arith.addi %18, %313 : vector<1x64xi32>
    %c0_i32_69 = arith.constant 0 : i32
    %315 = vector.broadcast %c0_i32_69 : i32 to vector<1x64xi32>
    %316 = arith.cmpi sge, %314, %315 : vector<1x64xi32>
    %c1_i32_70 = arith.constant 1 : i32
    %317 = vector.broadcast %c1_i32_70 : i32 to vector<1x64xi32>
    %318 = arith.addi %18, %317 : vector<1x64xi32>
    %c8_i32_71 = arith.constant 8 : i32
    %319 = vector.broadcast %c8_i32_71 : i32 to vector<1x64xi32>
    %320 = arith.cmpi slt, %318, %319 : vector<1x64xi32>
    %321 = arith.andi %316, %320 : vector<1x64xi1>
    %cst_72 = arith.constant 0.000000e+00 : f32
    %322 = vector.shape_cast %321 : vector<1x64xi1> to vector<1x64xi1>
    %323 = vector.broadcast %322 : vector<1x64xi1> to vector<4x64xi1>
    %324 = vector.broadcast %cst_72 : f32 to vector<4x64xf32>
    %325 = arith.select %323, %312, %324 : vector<4x64xi1>, vector<4x64xf32>
    %c8_73 = arith.constant 8 : index
    %c0_74 = arith.constant 0 : index
    %c0_75 = arith.constant 0 : index
    %326 = vector.load %arg8[%c8_73, %c0_74, %c0_75] : memref<9x8x4xf32, #tpu.memory_space<vmem>>, vector<1x8x4xf32>
    %327 = vector.shape_cast %326 : vector<1x8x4xf32> to vector<8x4xf32>
    %328 = vector.extract_strided_slice %327 {offsets = [0, 0], sizes = [8, 1], strides = [1, 1]} : vector<8x4xf32> to vector<8x1xf32>
    %329 = vector.extract_strided_slice %325 {offsets = [0, 0], sizes = [1, 64], strides = [1, 1]} : vector<4x64xf32> to vector<1x64xf32>
    %330 = vector.broadcast %328 : vector<8x1xf32> to vector<8x64xf32>
    %331 = vector.broadcast %329 : vector<1x64xf32> to vector<8x64xf32>
    %332 = arith.mulf %330, %331 : vector<8x64xf32>
    %333 = arith.addf %311, %332 : vector<8x64xf32>
    %334 = vector.extract_strided_slice %327 {offsets = [0, 1], sizes = [8, 1], strides = [1, 1]} : vector<8x4xf32> to vector<8x1xf32>
    %335 = vector.extract_strided_slice %325 {offsets = [1, 0], sizes = [1, 64], strides = [1, 1]} : vector<4x64xf32> to vector<1x64xf32>
    %336 = vector.broadcast %334 : vector<8x1xf32> to vector<8x64xf32>
    %337 = vector.broadcast %335 : vector<1x64xf32> to vector<8x64xf32>
    %338 = arith.mulf %336, %337 : vector<8x64xf32>
    %339 = arith.addf %333, %338 : vector<8x64xf32>
    %340 = vector.extract_strided_slice %327 {offsets = [0, 2], sizes = [8, 1], strides = [1, 1]} : vector<8x4xf32> to vector<8x1xf32>
    %341 = vector.extract_strided_slice %325 {offsets = [2, 0], sizes = [1, 64], strides = [1, 1]} : vector<4x64xf32> to vector<1x64xf32>
    %342 = vector.broadcast %340 : vector<8x1xf32> to vector<8x64xf32>
    %343 = vector.broadcast %341 : vector<1x64xf32> to vector<8x64xf32>
    %344 = arith.mulf %342, %343 : vector<8x64xf32>
    %345 = arith.addf %339, %344 : vector<8x64xf32>
    %346 = vector.extract_strided_slice %327 {offsets = [0, 3], sizes = [8, 1], strides = [1, 1]} : vector<8x4xf32> to vector<8x1xf32>
    %347 = vector.extract_strided_slice %325 {offsets = [3, 0], sizes = [1, 64], strides = [1, 1]} : vector<4x64xf32> to vector<1x64xf32>
    %348 = vector.broadcast %346 : vector<8x1xf32> to vector<8x64xf32>
    %349 = vector.broadcast %347 : vector<1x64xf32> to vector<8x64xf32>
    %350 = arith.mulf %348, %349 : vector<8x64xf32>
    %351 = arith.addf %345, %350 : vector<8x64xf32>
    %c0_76 = arith.constant 0 : index
    %c0_77 = arith.constant 0 : index
    %352 = vector.load %arg9[%c0_76, %c0_77] : memref<8x1xf32, #tpu.memory_space<vmem>>, vector<8x1xf32>
    %353 = vector.broadcast %352 : vector<8x1xf32> to vector<8x64xf32>
    %354 = arith.addf %351, %353 : vector<8x64xf32>
    %c0_78 = arith.constant 0 : index
    %c0_79 = arith.constant 0 : index
    %355 = vector.load %arg4[%c0_78, %c0_79] : memref<8x1xf32, #tpu.memory_space<vmem>>, vector<8x1xf32>
    %356 = vector.broadcast %355 : vector<8x1xf32> to vector<8x64xf32>
    %357 = arith.mulf %354, %356 : vector<8x64xf32>
    %c0_80 = arith.constant 0 : index
    %c0_81 = arith.constant 0 : index
    %358 = vector.load %arg5[%c0_80, %c0_81] : memref<8x1xf32, #tpu.memory_space<vmem>>, vector<8x1xf32>
    %359 = vector.broadcast %358 : vector<8x1xf32> to vector<8x64xf32>
    %360 = arith.addf %357, %359 : vector<8x64xf32>
    %cst_82 = arith.constant 0.000000e+00 : f32
    %361 = vector.broadcast %cst_82 : f32 to vector<8x64xf32>
    %362 = arith.maximumf %360, %361 : vector<8x64xf32>
    %cst_83 = arith.constant 0.000000e+00 : f32
    %363 = vector.broadcast %cst_83 : f32 to vector<8x82xf32>
    %c0_84 = arith.constant 0 : index
    %c0_85 = arith.constant 0 : index
    %364 = vector.load %arg16[%c0_84, %c0_85] : memref<8x82xf32, #tpu.memory_space<vmem>>, vector<8x82xf32>
    tpu.vector_store %arg16[%c0_84, %c0_85], %363 {strides = array<i32>} : memref<8x82xf32, #tpu.memory_space<vmem>>, vector<8x82xf32>,
    %c0_86 = arith.constant 0 : index
    %c9_87 = arith.constant 9 : index
    %365 = vector.load %arg16[%c0_86, %c9_87] : memref<8x82xf32, #tpu.memory_space<vmem>>, vector<8x64xf32>
    tpu.vector_store %arg16[%c0_86, %c9_87], %362 {strides = array<i32>} : memref<8x82xf32, #tpu.memory_space<vmem>>, vector<8x64xf32>,
    %cst_88 = arith.constant 0.000000e+00 : f32
    %366 = vector.broadcast %cst_88 : f32 to vector<8x64xf32>
    %c0_89 = arith.constant 0 : index
    %c0_90 = arith.constant 0 : index
    %367 = vector.load %arg16[%c0_89, %c0_90] : memref<8x82xf32, #tpu.memory_space<vmem>>, vector<8x64xf32>
    %c-1_i32_91 = arith.constant -1 : i32
    %368 = vector.broadcast %c-1_i32_91 : i32 to vector<1x64xi32>
    %369 = arith.addi %18, %368 : vector<1x64xi32>
    %c0_i32_92 = arith.constant 0 : i32
    %370 = vector.broadcast %c0_i32_92 : i32 to vector<1x64xi32>
    %371 = arith.cmpi sge, %369, %370 : vector<1x64xi32>
    %c-1_i32_93 = arith.constant -1 : i32
    %372 = vector.broadcast %c-1_i32_93 : i32 to vector<1x64xi32>
    %373 = arith.addi %18, %372 : vector<1x64xi32>
    %c8_i32_94 = arith.constant 8 : i32
    %374 = vector.broadcast %c8_i32_94 : i32 to vector<1x64xi32>
    %375 = arith.cmpi slt, %373, %374 : vector<1x64xi32>
    %376 = arith.andi %371, %375 : vector<1x64xi1>
    %cst_95 = arith.constant 0.000000e+00 : f32
    %377 = vector.shape_cast %376 : vector<1x64xi1> to vector<1x64xi1>
    %378 = vector.broadcast %377 : vector<1x64xi1> to vector<8x64xi1>
    %379 = vector.broadcast %cst_95 : f32 to vector<8x64xf32>
    %380 = arith.select %378, %367, %379 : vector<8x64xi1>, vector<8x64xf32>
    %c0_96 = arith.constant 0 : index
    %c0_97 = arith.constant 0 : index
    %c0_98 = arith.constant 0 : index
    %381 = vector.load %arg10[%c0_96, %c0_97, %c0_98] : memref<9x8x8xf32, #tpu.memory_space<vmem>>, vector<1x8x8xf32>
    %382 = vector.shape_cast %381 : vector<1x8x8xf32> to vector<8x8xf32>
    %383 = vector.extract_strided_slice %382 {offsets = [0, 0], sizes = [8, 1], strides = [1, 1]} : vector<8x8xf32> to vector<8x1xf32>
    %384 = vector.extract_strided_slice %380 {offsets = [0, 0], sizes = [1, 64], strides = [1, 1]} : vector<8x64xf32> to vector<1x64xf32>
    %385 = vector.broadcast %383 : vector<8x1xf32> to vector<8x64xf32>
    %386 = vector.broadcast %384 : vector<1x64xf32> to vector<8x64xf32>
    %387 = arith.mulf %385, %386 : vector<8x64xf32>
    %388 = arith.addf %366, %387 : vector<8x64xf32>
    %389 = vector.extract_strided_slice %382 {offsets = [0, 1], sizes = [8, 1], strides = [1, 1]} : vector<8x8xf32> to vector<8x1xf32>
    %390 = vector.extract_strided_slice %380 {offsets = [1, 0], sizes = [1, 64], strides = [1, 1]} : vector<8x64xf32> to vector<1x64xf32>
    %391 = vector.broadcast %389 : vector<8x1xf32> to vector<8x64xf32>
    %392 = vector.broadcast %390 : vector<1x64xf32> to vector<8x64xf32>
    %393 = arith.mulf %391, %392 : vector<8x64xf32>
    %394 = arith.addf %388, %393 : vector<8x64xf32>
    %395 = vector.extract_strided_slice %382 {offsets = [0, 2], sizes = [8, 1], strides = [1, 1]} : vector<8x8xf32> to vector<8x1xf32>
    %396 = vector.extract_strided_slice %380 {offsets = [2, 0], sizes = [1, 64], strides = [1, 1]} : vector<8x64xf32> to vector<1x64xf32>
    %397 = vector.broadcast %395 : vector<8x1xf32> to vector<8x64xf32>
    %398 = vector.broadcast %396 : vector<1x64xf32> to vector<8x64xf32>
    %399 = arith.mulf %397, %398 : vector<8x64xf32>
    %400 = arith.addf %394, %399 : vector<8x64xf32>
    %401 = vector.extract_strided_slice %382 {offsets = [0, 3], sizes = [8, 1], strides = [1, 1]} : vector<8x8xf32> to vector<8x1xf32>
    %402 = vector.extract_strided_slice %380 {offsets = [3, 0], sizes = [1, 64], strides = [1, 1]} : vector<8x64xf32> to vector<1x64xf32>
    %403 = vector.broadcast %401 : vector<8x1xf32> to vector<8x64xf32>
    %404 = vector.broadcast %402 : vector<1x64xf32> to vector<8x64xf32>
    %405 = arith.mulf %403, %404 : vector<8x64xf32>
    %406 = arith.addf %400, %405 : vector<8x64xf32>
    %407 = vector.extract_strided_slice %382 {offsets = [0, 4], sizes = [8, 1], strides = [1, 1]} : vector<8x8xf32> to vector<8x1xf32>
    %408 = vector.extract_strided_slice %380 {offsets = [4, 0], sizes = [1, 64], strides = [1, 1]} : vector<8x64xf32> to vector<1x64xf32>
    %409 = vector.broadcast %407 : vector<8x1xf32> to vector<8x64xf32>
    %410 = vector.broadcast %408 : vector<1x64xf32> to vector<8x64xf32>
    %411 = arith.mulf %409, %410 : vector<8x64xf32>
    %412 = arith.addf %406, %411 : vector<8x64xf32>
    %413 = vector.extract_strided_slice %382 {offsets = [0, 5], sizes = [8, 1], strides = [1, 1]} : vector<8x8xf32> to vector<8x1xf32>
    %414 = vector.extract_strided_slice %380 {offsets = [5, 0], sizes = [1, 64], strides = [1, 1]} : vector<8x64xf32> to vector<1x64xf32>
    %415 = vector.broadcast %413 : vector<8x1xf32> to vector<8x64xf32>
    %416 = vector.broadcast %414 : vector<1x64xf32> to vector<8x64xf32>
    %417 = arith.mulf %415, %416 : vector<8x64xf32>
    %418 = arith.addf %412, %417 : vector<8x64xf32>
    %419 = vector.extract_strided_slice %382 {offsets = [0, 6], sizes = [8, 1], strides = [1, 1]} : vector<8x8xf32> to vector<8x1xf32>
    %420 = vector.extract_strided_slice %380 {offsets = [6, 0], sizes = [1, 64], strides = [1, 1]} : vector<8x64xf32> to vector<1x64xf32>
    %421 = vector.broadcast %419 : vector<8x1xf32> to vector<8x64xf32>
    %422 = vector.broadcast %420 : vector<1x64xf32> to vector<8x64xf32>
    %423 = arith.mulf %421, %422 : vector<8x64xf32>
    %424 = arith.addf %418, %423 : vector<8x64xf32>
    %425 = vector.extract_strided_slice %382 {offsets = [0, 7], sizes = [8, 1], strides = [1, 1]} : vector<8x8xf32> to vector<8x1xf32>
    %426 = vector.extract_strided_slice %380 {offsets = [7, 0], sizes = [1, 64], strides = [1, 1]} : vector<8x64xf32> to vector<1x64xf32>
    %427 = vector.broadcast %425 : vector<8x1xf32> to vector<8x64xf32>
    %428 = vector.broadcast %426 : vector<1x64xf32> to vector<8x64xf32>
    %429 = arith.mulf %427, %428 : vector<8x64xf32>
    %430 = arith.addf %424, %429 : vector<8x64xf32>
    %c0_99 = arith.constant 0 : index
    %c1_100 = arith.constant 1 : index
    %431 = vector.load %arg16[%c0_99, %c1_100] : memref<8x82xf32, #tpu.memory_space<vmem>>, vector<8x64xf32>
    %c1_101 = arith.constant 1 : index
    %c0_102 = arith.constant 0 : index
    %c0_103 = arith.constant 0 : index
    %432 = vector.load %arg10[%c1_101, %c0_102, %c0_103] : memref<9x8x8xf32, #tpu.memory_space<vmem>>, vector<1x8x8xf32>
    %433 = vector.shape_cast %432 : vector<1x8x8xf32> to vector<8x8xf32>
    %434 = vector.extract_strided_slice %433 {offsets = [0, 0], sizes = [8, 1], strides = [1, 1]} : vector<8x8xf32> to vector<8x1xf32>
    %435 = vector.extract_strided_slice %431 {offsets = [0, 0], sizes = [1, 64], strides = [1, 1]} : vector<8x64xf32> to vector<1x64xf32>
    %436 = vector.broadcast %434 : vector<8x1xf32> to vector<8x64xf32>
    %437 = vector.broadcast %435 : vector<1x64xf32> to vector<8x64xf32>
    %438 = arith.mulf %436, %437 : vector<8x64xf32>
    %439 = arith.addf %430, %438 : vector<8x64xf32>
    %440 = vector.extract_strided_slice %433 {offsets = [0, 1], sizes = [8, 1], strides = [1, 1]} : vector<8x8xf32> to vector<8x1xf32>
    %441 = vector.extract_strided_slice %431 {offsets = [1, 0], sizes = [1, 64], strides = [1, 1]} : vector<8x64xf32> to vector<1x64xf32>
    %442 = vector.broadcast %440 : vector<8x1xf32> to vector<8x64xf32>
    %443 = vector.broadcast %441 : vector<1x64xf32> to vector<8x64xf32>
    %444 = arith.mulf %442, %443 : vector<8x64xf32>
    %445 = arith.addf %439, %444 : vector<8x64xf32>
    %446 = vector.extract_strided_slice %433 {offsets = [0, 2], sizes = [8, 1], strides = [1, 1]} : vector<8x8xf32> to vector<8x1xf32>
    %447 = vector.extract_strided_slice %431 {offsets = [2, 0], sizes = [1, 64], strides = [1, 1]} : vector<8x64xf32> to vector<1x64xf32>
    %448 = vector.broadcast %446 : vector<8x1xf32> to vector<8x64xf32>
    %449 = vector.broadcast %447 : vector<1x64xf32> to vector<8x64xf32>
    %450 = arith.mulf %448, %449 : vector<8x64xf32>
    %451 = arith.addf %445, %450 : vector<8x64xf32>
    %452 = vector.extract_strided_slice %433 {offsets = [0, 3], sizes = [8, 1], strides = [1, 1]} : vector<8x8xf32> to vector<8x1xf32>
    %453 = vector.extract_strided_slice %431 {offsets = [3, 0], sizes = [1, 64], strides = [1, 1]} : vector<8x64xf32> to vector<1x64xf32>
    %454 = vector.broadcast %452 : vector<8x1xf32> to vector<8x64xf32>
    %455 = vector.broadcast %453 : vector<1x64xf32> to vector<8x64xf32>
    %456 = arith.mulf %454, %455 : vector<8x64xf32>
    %457 = arith.addf %451, %456 : vector<8x64xf32>
    %458 = vector.extract_strided_slice %433 {offsets = [0, 4], sizes = [8, 1], strides = [1, 1]} : vector<8x8xf32> to vector<8x1xf32>
    %459 = vector.extract_strided_slice %431 {offsets = [4, 0], sizes = [1, 64], strides = [1, 1]} : vector<8x64xf32> to vector<1x64xf32>
    %460 = vector.broadcast %458 : vector<8x1xf32> to vector<8x64xf32>
    %461 = vector.broadcast %459 : vector<1x64xf32> to vector<8x64xf32>
    %462 = arith.mulf %460, %461 : vector<8x64xf32>
    %463 = arith.addf %457, %462 : vector<8x64xf32>
    %464 = vector.extract_strided_slice %433 {offsets = [0, 5], sizes = [8, 1], strides = [1, 1]} : vector<8x8xf32> to vector<8x1xf32>
    %465 = vector.extract_strided_slice %431 {offsets = [5, 0], sizes = [1, 64], strides = [1, 1]} : vector<8x64xf32> to vector<1x64xf32>
    %466 = vector.broadcast %464 : vector<8x1xf32> to vector<8x64xf32>
    %467 = vector.broadcast %465 : vector<1x64xf32> to vector<8x64xf32>
    %468 = arith.mulf %466, %467 : vector<8x64xf32>
    %469 = arith.addf %463, %468 : vector<8x64xf32>
    %470 = vector.extract_strided_slice %433 {offsets = [0, 6], sizes = [8, 1], strides = [1, 1]} : vector<8x8xf32> to vector<8x1xf32>
    %471 = vector.extract_strided_slice %431 {offsets = [6, 0], sizes = [1, 64], strides = [1, 1]} : vector<8x64xf32> to vector<1x64xf32>
    %472 = vector.broadcast %470 : vector<8x1xf32> to vector<8x64xf32>
    %473 = vector.broadcast %471 : vector<1x64xf32> to vector<8x64xf32>
    %474 = arith.mulf %472, %473 : vector<8x64xf32>
    %475 = arith.addf %469, %474 : vector<8x64xf32>
    %476 = vector.extract_strided_slice %433 {offsets = [0, 7], sizes = [8, 1], strides = [1, 1]} : vector<8x8xf32> to vector<8x1xf32>
    %477 = vector.extract_strided_slice %431 {offsets = [7, 0], sizes = [1, 64], strides = [1, 1]} : vector<8x64xf32> to vector<1x64xf32>
    %478 = vector.broadcast %476 : vector<8x1xf32> to vector<8x64xf32>
    %479 = vector.broadcast %477 : vector<1x64xf32> to vector<8x64xf32>
    %480 = arith.mulf %478, %479 : vector<8x64xf32>
    %481 = arith.addf %475, %480 : vector<8x64xf32>
    %c0_104 = arith.constant 0 : index
    %c2_105 = arith.constant 2 : index
    %482 = vector.load %arg16[%c0_104, %c2_105] : memref<8x82xf32, #tpu.memory_space<vmem>>, vector<8x64xf32>
    %c1_i32_106 = arith.constant 1 : i32
    %483 = vector.broadcast %c1_i32_106 : i32 to vector<1x64xi32>
    %484 = arith.addi %18, %483 : vector<1x64xi32>
    %c0_i32_107 = arith.constant 0 : i32
    %485 = vector.broadcast %c0_i32_107 : i32 to vector<1x64xi32>
    %486 = arith.cmpi sge, %484, %485 : vector<1x64xi32>
    %c1_i32_108 = arith.constant 1 : i32
    %487 = vector.broadcast %c1_i32_108 : i32 to vector<1x64xi32>
    %488 = arith.addi %18, %487 : vector<1x64xi32>
    %c8_i32_109 = arith.constant 8 : i32
    %489 = vector.broadcast %c8_i32_109 : i32 to vector<1x64xi32>
    %490 = arith.cmpi slt, %488, %489 : vector<1x64xi32>
    %491 = arith.andi %486, %490 : vector<1x64xi1>
    %cst_110 = arith.constant 0.000000e+00 : f32
    %492 = vector.shape_cast %491 : vector<1x64xi1> to vector<1x64xi1>
    %493 = vector.broadcast %492 : vector<1x64xi1> to vector<8x64xi1>
    %494 = vector.broadcast %cst_110 : f32 to vector<8x64xf32>
    %495 = arith.select %493, %482, %494 : vector<8x64xi1>, vector<8x64xf32>
    %c2_111 = arith.constant 2 : index
    %c0_112 = arith.constant 0 : index
    %c0_113 = arith.constant 0 : index
    %496 = vector.load %arg10[%c2_111, %c0_112, %c0_113] : memref<9x8x8xf32, #tpu.memory_space<vmem>>, vector<1x8x8xf32>
    %497 = vector.shape_cast %496 : vector<1x8x8xf32> to vector<8x8xf32>
    %498 = vector.extract_strided_slice %497 {offsets = [0, 0], sizes = [8, 1], strides = [1, 1]} : vector<8x8xf32> to vector<8x1xf32>
    %499 = vector.extract_strided_slice %495 {offsets = [0, 0], sizes = [1, 64], strides = [1, 1]} : vector<8x64xf32> to vector<1x64xf32>
    %500 = vector.broadcast %498 : vector<8x1xf32> to vector<8x64xf32>
    %501 = vector.broadcast %499 : vector<1x64xf32> to vector<8x64xf32>
    %502 = arith.mulf %500, %501 : vector<8x64xf32>
    %503 = arith.addf %481, %502 : vector<8x64xf32>
    %504 = vector.extract_strided_slice %497 {offsets = [0, 1], sizes = [8, 1], strides = [1, 1]} : vector<8x8xf32> to vector<8x1xf32>
    %505 = vector.extract_strided_slice %495 {offsets = [1, 0], sizes = [1, 64], strides = [1, 1]} : vector<8x64xf32> to vector<1x64xf32>
    %506 = vector.broadcast %504 : vector<8x1xf32> to vector<8x64xf32>
    %507 = vector.broadcast %505 : vector<1x64xf32> to vector<8x64xf32>
    %508 = arith.mulf %506, %507 : vector<8x64xf32>
    %509 = arith.addf %503, %508 : vector<8x64xf32>
    %510 = vector.extract_strided_slice %497 {offsets = [0, 2], sizes = [8, 1], strides = [1, 1]} : vector<8x8xf32> to vector<8x1xf32>
    %511 = vector.extract_strided_slice %495 {offsets = [2, 0], sizes = [1, 64], strides = [1, 1]} : vector<8x64xf32> to vector<1x64xf32>
    %512 = vector.broadcast %510 : vector<8x1xf32> to vector<8x64xf32>
    %513 = vector.broadcast %511 : vector<1x64xf32> to vector<8x64xf32>
    %514 = arith.mulf %512, %513 : vector<8x64xf32>
    %515 = arith.addf %509, %514 : vector<8x64xf32>
    %516 = vector.extract_strided_slice %497 {offsets = [0, 3], sizes = [8, 1], strides = [1, 1]} : vector<8x8xf32> to vector<8x1xf32>
    %517 = vector.extract_strided_slice %495 {offsets = [3, 0], sizes = [1, 64], strides = [1, 1]} : vector<8x64xf32> to vector<1x64xf32>
    %518 = vector.broadcast %516 : vector<8x1xf32> to vector<8x64xf32>
    %519 = vector.broadcast %517 : vector<1x64xf32> to vector<8x64xf32>
    %520 = arith.mulf %518, %519 : vector<8x64xf32>
    %521 = arith.addf %515, %520 : vector<8x64xf32>
    %522 = vector.extract_strided_slice %497 {offsets = [0, 4], sizes = [8, 1], strides = [1, 1]} : vector<8x8xf32> to vector<8x1xf32>
    %523 = vector.extract_strided_slice %495 {offsets = [4, 0], sizes = [1, 64], strides = [1, 1]} : vector<8x64xf32> to vector<1x64xf32>
    %524 = vector.broadcast %522 : vector<8x1xf32> to vector<8x64xf32>
    %525 = vector.broadcast %523 : vector<1x64xf32> to vector<8x64xf32>
    %526 = arith.mulf %524, %525 : vector<8x64xf32>
    %527 = arith.addf %521, %526 : vector<8x64xf32>
    %528 = vector.extract_strided_slice %497 {offsets = [0, 5], sizes = [8, 1], strides = [1, 1]} : vector<8x8xf32> to vector<8x1xf32>
    %529 = vector.extract_strided_slice %495 {offsets = [5, 0], sizes = [1, 64], strides = [1, 1]} : vector<8x64xf32> to vector<1x64xf32>
    %530 = vector.broadcast %528 : vector<8x1xf32> to vector<8x64xf32>
    %531 = vector.broadcast %529 : vector<1x64xf32> to vector<8x64xf32>
    %532 = arith.mulf %530, %531 : vector<8x64xf32>
    %533 = arith.addf %527, %532 : vector<8x64xf32>
    %534 = vector.extract_strided_slice %497 {offsets = [0, 6], sizes = [8, 1], strides = [1, 1]} : vector<8x8xf32> to vector<8x1xf32>
    %535 = vector.extract_strided_slice %495 {offsets = [6, 0], sizes = [1, 64], strides = [1, 1]} : vector<8x64xf32> to vector<1x64xf32>
    %536 = vector.broadcast %534 : vector<8x1xf32> to vector<8x64xf32>
    %537 = vector.broadcast %535 : vector<1x64xf32> to vector<8x64xf32>
    %538 = arith.mulf %536, %537 : vector<8x64xf32>
    %539 = arith.addf %533, %538 : vector<8x64xf32>
    %540 = vector.extract_strided_slice %497 {offsets = [0, 7], sizes = [8, 1], strides = [1, 1]} : vector<8x8xf32> to vector<8x1xf32>
    %541 = vector.extract_strided_slice %495 {offsets = [7, 0], sizes = [1, 64], strides = [1, 1]} : vector<8x64xf32> to vector<1x64xf32>
    %542 = vector.broadcast %540 : vector<8x1xf32> to vector<8x64xf32>
    %543 = vector.broadcast %541 : vector<1x64xf32> to vector<8x64xf32>
    %544 = arith.mulf %542, %543 : vector<8x64xf32>
    %545 = arith.addf %539, %544 : vector<8x64xf32>
    %c0_114 = arith.constant 0 : index
    %c8_115 = arith.constant 8 : index
    %546 = vector.load %arg16[%c0_114, %c8_115] : memref<8x82xf32, #tpu.memory_space<vmem>>, vector<8x64xf32>
    %c-1_i32_116 = arith.constant -1 : i32
    %547 = vector.broadcast %c-1_i32_116 : i32 to vector<1x64xi32>
    %548 = arith.addi %18, %547 : vector<1x64xi32>
    %c0_i32_117 = arith.constant 0 : i32
    %549 = vector.broadcast %c0_i32_117 : i32 to vector<1x64xi32>
    %550 = arith.cmpi sge, %548, %549 : vector<1x64xi32>
    %c-1_i32_118 = arith.constant -1 : i32
    %551 = vector.broadcast %c-1_i32_118 : i32 to vector<1x64xi32>
    %552 = arith.addi %18, %551 : vector<1x64xi32>
    %c8_i32_119 = arith.constant 8 : i32
    %553 = vector.broadcast %c8_i32_119 : i32 to vector<1x64xi32>
    %554 = arith.cmpi slt, %552, %553 : vector<1x64xi32>
    %555 = arith.andi %550, %554 : vector<1x64xi1>
    %cst_120 = arith.constant 0.000000e+00 : f32
    %556 = vector.shape_cast %555 : vector<1x64xi1> to vector<1x64xi1>
    %557 = vector.broadcast %556 : vector<1x64xi1> to vector<8x64xi1>
    %558 = vector.broadcast %cst_120 : f32 to vector<8x64xf32>
    %559 = arith.select %557, %546, %558 : vector<8x64xi1>, vector<8x64xf32>
    %c3_121 = arith.constant 3 : index
    %c0_122 = arith.constant 0 : index
    %c0_123 = arith.constant 0 : index
    %560 = vector.load %arg10[%c3_121, %c0_122, %c0_123] : memref<9x8x8xf32, #tpu.memory_space<vmem>>, vector<1x8x8xf32>
    %561 = vector.shape_cast %560 : vector<1x8x8xf32> to vector<8x8xf32>
    %562 = vector.extract_strided_slice %561 {offsets = [0, 0], sizes = [8, 1], strides = [1, 1]} : vector<8x8xf32> to vector<8x1xf32>
    %563 = vector.extract_strided_slice %559 {offsets = [0, 0], sizes = [1, 64], strides = [1, 1]} : vector<8x64xf32> to vector<1x64xf32>
    %564 = vector.broadcast %562 : vector<8x1xf32> to vector<8x64xf32>
    %565 = vector.broadcast %563 : vector<1x64xf32> to vector<8x64xf32>
    %566 = arith.mulf %564, %565 : vector<8x64xf32>
    %567 = arith.addf %545, %566 : vector<8x64xf32>
    %568 = vector.extract_strided_slice %561 {offsets = [0, 1], sizes = [8, 1], strides = [1, 1]} : vector<8x8xf32> to vector<8x1xf32>
    %569 = vector.extract_strided_slice %559 {offsets = [1, 0], sizes = [1, 64], strides = [1, 1]} : vector<8x64xf32> to vector<1x64xf32>
    %570 = vector.broadcast %568 : vector<8x1xf32> to vector<8x64xf32>
    %571 = vector.broadcast %569 : vector<1x64xf32> to vector<8x64xf32>
    %572 = arith.mulf %570, %571 : vector<8x64xf32>
    %573 = arith.addf %567, %572 : vector<8x64xf32>
    %574 = vector.extract_strided_slice %561 {offsets = [0, 2], sizes = [8, 1], strides = [1, 1]} : vector<8x8xf32> to vector<8x1xf32>
    %575 = vector.extract_strided_slice %559 {offsets = [2, 0], sizes = [1, 64], strides = [1, 1]} : vector<8x64xf32> to vector<1x64xf32>
    %576 = vector.broadcast %574 : vector<8x1xf32> to vector<8x64xf32>
    %577 = vector.broadcast %575 : vector<1x64xf32> to vector<8x64xf32>
    %578 = arith.mulf %576, %577 : vector<8x64xf32>
    %579 = arith.addf %573, %578 : vector<8x64xf32>
    %580 = vector.extract_strided_slice %561 {offsets = [0, 3], sizes = [8, 1], strides = [1, 1]} : vector<8x8xf32> to vector<8x1xf32>
    %581 = vector.extract_strided_slice %559 {offsets = [3, 0], sizes = [1, 64], strides = [1, 1]} : vector<8x64xf32> to vector<1x64xf32>
    %582 = vector.broadcast %580 : vector<8x1xf32> to vector<8x64xf32>
    %583 = vector.broadcast %581 : vector<1x64xf32> to vector<8x64xf32>
    %584 = arith.mulf %582, %583 : vector<8x64xf32>
    %585 = arith.addf %579, %584 : vector<8x64xf32>
    %586 = vector.extract_strided_slice %561 {offsets = [0, 4], sizes = [8, 1], strides = [1, 1]} : vector<8x8xf32> to vector<8x1xf32>
    %587 = vector.extract_strided_slice %559 {offsets = [4, 0], sizes = [1, 64], strides = [1, 1]} : vector<8x64xf32> to vector<1x64xf32>
    %588 = vector.broadcast %586 : vector<8x1xf32> to vector<8x64xf32>
    %589 = vector.broadcast %587 : vector<1x64xf32> to vector<8x64xf32>
    %590 = arith.mulf %588, %589 : vector<8x64xf32>
    %591 = arith.addf %585, %590 : vector<8x64xf32>
    %592 = vector.extract_strided_slice %561 {offsets = [0, 5], sizes = [8, 1], strides = [1, 1]} : vector<8x8xf32> to vector<8x1xf32>
    %593 = vector.extract_strided_slice %559 {offsets = [5, 0], sizes = [1, 64], strides = [1, 1]} : vector<8x64xf32> to vector<1x64xf32>
    %594 = vector.broadcast %592 : vector<8x1xf32> to vector<8x64xf32>
    %595 = vector.broadcast %593 : vector<1x64xf32> to vector<8x64xf32>
    %596 = arith.mulf %594, %595 : vector<8x64xf32>
    %597 = arith.addf %591, %596 : vector<8x64xf32>
    %598 = vector.extract_strided_slice %561 {offsets = [0, 6], sizes = [8, 1], strides = [1, 1]} : vector<8x8xf32> to vector<8x1xf32>
    %599 = vector.extract_strided_slice %559 {offsets = [6, 0], sizes = [1, 64], strides = [1, 1]} : vector<8x64xf32> to vector<1x64xf32>
    %600 = vector.broadcast %598 : vector<8x1xf32> to vector<8x64xf32>
    %601 = vector.broadcast %599 : vector<1x64xf32> to vector<8x64xf32>
    %602 = arith.mulf %600, %601 : vector<8x64xf32>
    %603 = arith.addf %597, %602 : vector<8x64xf32>
    %604 = vector.extract_strided_slice %561 {offsets = [0, 7], sizes = [8, 1], strides = [1, 1]} : vector<8x8xf32> to vector<8x1xf32>
    %605 = vector.extract_strided_slice %559 {offsets = [7, 0], sizes = [1, 64], strides = [1, 1]} : vector<8x64xf32> to vector<1x64xf32>
    %606 = vector.broadcast %604 : vector<8x1xf32> to vector<8x64xf32>
    %607 = vector.broadcast %605 : vector<1x64xf32> to vector<8x64xf32>
    %608 = arith.mulf %606, %607 : vector<8x64xf32>
    %609 = arith.addf %603, %608 : vector<8x64xf32>
    %c0_124 = arith.constant 0 : index
    %c9_125 = arith.constant 9 : index
    %610 = vector.load %arg16[%c0_124, %c9_125] : memref<8x82xf32, #tpu.memory_space<vmem>>, vector<8x64xf32>
    %c4_126 = arith.constant 4 : index
    %c0_127 = arith.constant 0 : index
    %c0_128 = arith.constant 0 : index
    %611 = vector.load %arg10[%c4_126, %c0_127, %c0_128] : memref<9x8x8xf32, #tpu.memory_space<vmem>>, vector<1x8x8xf32>
    %612 = vector.shape_cast %611 : vector<1x8x8xf32> to vector<8x8xf32>
    %613 = vector.extract_strided_slice %612 {offsets = [0, 0], sizes = [8, 1], strides = [1, 1]} : vector<8x8xf32> to vector<8x1xf32>
    %614 = vector.extract_strided_slice %610 {offsets = [0, 0], sizes = [1, 64], strides = [1, 1]} : vector<8x64xf32> to vector<1x64xf32>
    %615 = vector.broadcast %613 : vector<8x1xf32> to vector<8x64xf32>
    %616 = vector.broadcast %614 : vector<1x64xf32> to vector<8x64xf32>
    %617 = arith.mulf %615, %616 : vector<8x64xf32>
    %618 = arith.addf %609, %617 : vector<8x64xf32>
    %619 = vector.extract_strided_slice %612 {offsets = [0, 1], sizes = [8, 1], strides = [1, 1]} : vector<8x8xf32> to vector<8x1xf32>
    %620 = vector.extract_strided_slice %610 {offsets = [1, 0], sizes = [1, 64], strides = [1, 1]} : vector<8x64xf32> to vector<1x64xf32>
    %621 = vector.broadcast %619 : vector<8x1xf32> to vector<8x64xf32>
    %622 = vector.broadcast %620 : vector<1x64xf32> to vector<8x64xf32>
    %623 = arith.mulf %621, %622 : vector<8x64xf32>
    %624 = arith.addf %618, %623 : vector<8x64xf32>
    %625 = vector.extract_strided_slice %612 {offsets = [0, 2], sizes = [8, 1], strides = [1, 1]} : vector<8x8xf32> to vector<8x1xf32>
    %626 = vector.extract_strided_slice %610 {offsets = [2, 0], sizes = [1, 64], strides = [1, 1]} : vector<8x64xf32> to vector<1x64xf32>
    %627 = vector.broadcast %625 : vector<8x1xf32> to vector<8x64xf32>
    %628 = vector.broadcast %626 : vector<1x64xf32> to vector<8x64xf32>
    %629 = arith.mulf %627, %628 : vector<8x64xf32>
    %630 = arith.addf %624, %629 : vector<8x64xf32>
    %631 = vector.extract_strided_slice %612 {offsets = [0, 3], sizes = [8, 1], strides = [1, 1]} : vector<8x8xf32> to vector<8x1xf32>
    %632 = vector.extract_strided_slice %610 {offsets = [3, 0], sizes = [1, 64], strides = [1, 1]} : vector<8x64xf32> to vector<1x64xf32>
    %633 = vector.broadcast %631 : vector<8x1xf32> to vector<8x64xf32>
    %634 = vector.broadcast %632 : vector<1x64xf32> to vector<8x64xf32>
    %635 = arith.mulf %633, %634 : vector<8x64xf32>
    %636 = arith.addf %630, %635 : vector<8x64xf32>
    %637 = vector.extract_strided_slice %612 {offsets = [0, 4], sizes = [8, 1], strides = [1, 1]} : vector<8x8xf32> to vector<8x1xf32>
    %638 = vector.extract_strided_slice %610 {offsets = [4, 0], sizes = [1, 64], strides = [1, 1]} : vector<8x64xf32> to vector<1x64xf32>
    %639 = vector.broadcast %637 : vector<8x1xf32> to vector<8x64xf32>
    %640 = vector.broadcast %638 : vector<1x64xf32> to vector<8x64xf32>
    %641 = arith.mulf %639, %640 : vector<8x64xf32>
    %642 = arith.addf %636, %641 : vector<8x64xf32>
    %643 = vector.extract_strided_slice %612 {offsets = [0, 5], sizes = [8, 1], strides = [1, 1]} : vector<8x8xf32> to vector<8x1xf32>
    %644 = vector.extract_strided_slice %610 {offsets = [5, 0], sizes = [1, 64], strides = [1, 1]} : vector<8x64xf32> to vector<1x64xf32>
    %645 = vector.broadcast %643 : vector<8x1xf32> to vector<8x64xf32>
    %646 = vector.broadcast %644 : vector<1x64xf32> to vector<8x64xf32>
    %647 = arith.mulf %645, %646 : vector<8x64xf32>
    %648 = arith.addf %642, %647 : vector<8x64xf32>
    %649 = vector.extract_strided_slice %612 {offsets = [0, 6], sizes = [8, 1], strides = [1, 1]} : vector<8x8xf32> to vector<8x1xf32>
    %650 = vector.extract_strided_slice %610 {offsets = [6, 0], sizes = [1, 64], strides = [1, 1]} : vector<8x64xf32> to vector<1x64xf32>
    %651 = vector.broadcast %649 : vector<8x1xf32> to vector<8x64xf32>
    %652 = vector.broadcast %650 : vector<1x64xf32> to vector<8x64xf32>
    %653 = arith.mulf %651, %652 : vector<8x64xf32>
    %654 = arith.addf %648, %653 : vector<8x64xf32>
    %655 = vector.extract_strided_slice %612 {offsets = [0, 7], sizes = [8, 1], strides = [1, 1]} : vector<8x8xf32> to vector<8x1xf32>
    %656 = vector.extract_strided_slice %610 {offsets = [7, 0], sizes = [1, 64], strides = [1, 1]} : vector<8x64xf32> to vector<1x64xf32>
    %657 = vector.broadcast %655 : vector<8x1xf32> to vector<8x64xf32>
    %658 = vector.broadcast %656 : vector<1x64xf32> to vector<8x64xf32>
    %659 = arith.mulf %657, %658 : vector<8x64xf32>
    %660 = arith.addf %654, %659 : vector<8x64xf32>
    %c0_129 = arith.constant 0 : index
    %c10_130 = arith.constant 10 : index
    %661 = vector.load %arg16[%c0_129, %c10_130] : memref<8x82xf32, #tpu.memory_space<vmem>>, vector<8x64xf32>
    %c1_i32_131 = arith.constant 1 : i32
    %662 = vector.broadcast %c1_i32_131 : i32 to vector<1x64xi32>
    %663 = arith.addi %18, %662 : vector<1x64xi32>
    %c0_i32_132 = arith.constant 0 : i32
    %664 = vector.broadcast %c0_i32_132 : i32 to vector<1x64xi32>
    %665 = arith.cmpi sge, %663, %664 : vector<1x64xi32>
    %c1_i32_133 = arith.constant 1 : i32
    %666 = vector.broadcast %c1_i32_133 : i32 to vector<1x64xi32>
    %667 = arith.addi %18, %666 : vector<1x64xi32>
    %c8_i32_134 = arith.constant 8 : i32
    %668 = vector.broadcast %c8_i32_134 : i32 to vector<1x64xi32>
    %669 = arith.cmpi slt, %667, %668 : vector<1x64xi32>
    %670 = arith.andi %665, %669 : vector<1x64xi1>
    %cst_135 = arith.constant 0.000000e+00 : f32
    %671 = vector.shape_cast %670 : vector<1x64xi1> to vector<1x64xi1>
    %672 = vector.broadcast %671 : vector<1x64xi1> to vector<8x64xi1>
    %673 = vector.broadcast %cst_135 : f32 to vector<8x64xf32>
    %674 = arith.select %672, %661, %673 : vector<8x64xi1>, vector<8x64xf32>
    %c5_136 = arith.constant 5 : index
    %c0_137 = arith.constant 0 : index
    %c0_138 = arith.constant 0 : index
    %675 = vector.load %arg10[%c5_136, %c0_137, %c0_138] : memref<9x8x8xf32, #tpu.memory_space<vmem>>, vector<1x8x8xf32>
    %676 = vector.shape_cast %675 : vector<1x8x8xf32> to vector<8x8xf32>
    %677 = vector.extract_strided_slice %676 {offsets = [0, 0], sizes = [8, 1], strides = [1, 1]} : vector<8x8xf32> to vector<8x1xf32>
    %678 = vector.extract_strided_slice %674 {offsets = [0, 0], sizes = [1, 64], strides = [1, 1]} : vector<8x64xf32> to vector<1x64xf32>
    %679 = vector.broadcast %677 : vector<8x1xf32> to vector<8x64xf32>
    %680 = vector.broadcast %678 : vector<1x64xf32> to vector<8x64xf32>
    %681 = arith.mulf %679, %680 : vector<8x64xf32>
    %682 = arith.addf %660, %681 : vector<8x64xf32>
    %683 = vector.extract_strided_slice %676 {offsets = [0, 1], sizes = [8, 1], strides = [1, 1]} : vector<8x8xf32> to vector<8x1xf32>
    %684 = vector.extract_strided_slice %674 {offsets = [1, 0], sizes = [1, 64], strides = [1, 1]} : vector<8x64xf32> to vector<1x64xf32>
    %685 = vector.broadcast %683 : vector<8x1xf32> to vector<8x64xf32>
    %686 = vector.broadcast %684 : vector<1x64xf32> to vector<8x64xf32>
    %687 = arith.mulf %685, %686 : vector<8x64xf32>
    %688 = arith.addf %682, %687 : vector<8x64xf32>
    %689 = vector.extract_strided_slice %676 {offsets = [0, 2], sizes = [8, 1], strides = [1, 1]} : vector<8x8xf32> to vector<8x1xf32>
    %690 = vector.extract_strided_slice %674 {offsets = [2, 0], sizes = [1, 64], strides = [1, 1]} : vector<8x64xf32> to vector<1x64xf32>
    %691 = vector.broadcast %689 : vector<8x1xf32> to vector<8x64xf32>
    %692 = vector.broadcast %690 : vector<1x64xf32> to vector<8x64xf32>
    %693 = arith.mulf %691, %692 : vector<8x64xf32>
    %694 = arith.addf %688, %693 : vector<8x64xf32>
    %695 = vector.extract_strided_slice %676 {offsets = [0, 3], sizes = [8, 1], strides = [1, 1]} : vector<8x8xf32> to vector<8x1xf32>
    %696 = vector.extract_strided_slice %674 {offsets = [3, 0], sizes = [1, 64], strides = [1, 1]} : vector<8x64xf32> to vector<1x64xf32>
    %697 = vector.broadcast %695 : vector<8x1xf32> to vector<8x64xf32>
    %698 = vector.broadcast %696 : vector<1x64xf32> to vector<8x64xf32>
    %699 = arith.mulf %697, %698 : vector<8x64xf32>
    %700 = arith.addf %694, %699 : vector<8x64xf32>
    %701 = vector.extract_strided_slice %676 {offsets = [0, 4], sizes = [8, 1], strides = [1, 1]} : vector<8x8xf32> to vector<8x1xf32>
    %702 = vector.extract_strided_slice %674 {offsets = [4, 0], sizes = [1, 64], strides = [1, 1]} : vector<8x64xf32> to vector<1x64xf32>
    %703 = vector.broadcast %701 : vector<8x1xf32> to vector<8x64xf32>
    %704 = vector.broadcast %702 : vector<1x64xf32> to vector<8x64xf32>
    %705 = arith.mulf %703, %704 : vector<8x64xf32>
    %706 = arith.addf %700, %705 : vector<8x64xf32>
    %707 = vector.extract_strided_slice %676 {offsets = [0, 5], sizes = [8, 1], strides = [1, 1]} : vector<8x8xf32> to vector<8x1xf32>
    %708 = vector.extract_strided_slice %674 {offsets = [5, 0], sizes = [1, 64], strides = [1, 1]} : vector<8x64xf32> to vector<1x64xf32>
    %709 = vector.broadcast %707 : vector<8x1xf32> to vector<8x64xf32>
    %710 = vector.broadcast %708 : vector<1x64xf32> to vector<8x64xf32>
    %711 = arith.mulf %709, %710 : vector<8x64xf32>
    %712 = arith.addf %706, %711 : vector<8x64xf32>
    %713 = vector.extract_strided_slice %676 {offsets = [0, 6], sizes = [8, 1], strides = [1, 1]} : vector<8x8xf32> to vector<8x1xf32>
    %714 = vector.extract_strided_slice %674 {offsets = [6, 0], sizes = [1, 64], strides = [1, 1]} : vector<8x64xf32> to vector<1x64xf32>
    %715 = vector.broadcast %713 : vector<8x1xf32> to vector<8x64xf32>
    %716 = vector.broadcast %714 : vector<1x64xf32> to vector<8x64xf32>
    %717 = arith.mulf %715, %716 : vector<8x64xf32>
    %718 = arith.addf %712, %717 : vector<8x64xf32>
    %719 = vector.extract_strided_slice %676 {offsets = [0, 7], sizes = [8, 1], strides = [1, 1]} : vector<8x8xf32> to vector<8x1xf32>
    %720 = vector.extract_strided_slice %674 {offsets = [7, 0], sizes = [1, 64], strides = [1, 1]} : vector<8x64xf32> to vector<1x64xf32>
    %721 = vector.broadcast %719 : vector<8x1xf32> to vector<8x64xf32>
    %722 = vector.broadcast %720 : vector<1x64xf32> to vector<8x64xf32>
    %723 = arith.mulf %721, %722 : vector<8x64xf32>
    %724 = arith.addf %718, %723 : vector<8x64xf32>
    %c0_139 = arith.constant 0 : index
    %c16_140 = arith.constant 16 : index
    %725 = vector.load %arg16[%c0_139, %c16_140] : memref<8x82xf32, #tpu.memory_space<vmem>>, vector<8x64xf32>
    %c-1_i32_141 = arith.constant -1 : i32
    %726 = vector.broadcast %c-1_i32_141 : i32 to vector<1x64xi32>
    %727 = arith.addi %18, %726 : vector<1x64xi32>
    %c0_i32_142 = arith.constant 0 : i32
    %728 = vector.broadcast %c0_i32_142 : i32 to vector<1x64xi32>
    %729 = arith.cmpi sge, %727, %728 : vector<1x64xi32>
    %c-1_i32_143 = arith.constant -1 : i32
    %730 = vector.broadcast %c-1_i32_143 : i32 to vector<1x64xi32>
    %731 = arith.addi %18, %730 : vector<1x64xi32>
    %c8_i32_144 = arith.constant 8 : i32
    %732 = vector.broadcast %c8_i32_144 : i32 to vector<1x64xi32>
    %733 = arith.cmpi slt, %731, %732 : vector<1x64xi32>
    %734 = arith.andi %729, %733 : vector<1x64xi1>
    %cst_145 = arith.constant 0.000000e+00 : f32
    %735 = vector.shape_cast %734 : vector<1x64xi1> to vector<1x64xi1>
    %736 = vector.broadcast %735 : vector<1x64xi1> to vector<8x64xi1>
    %737 = vector.broadcast %cst_145 : f32 to vector<8x64xf32>
    %738 = arith.select %736, %725, %737 : vector<8x64xi1>, vector<8x64xf32>
    %c6_146 = arith.constant 6 : index
    %c0_147 = arith.constant 0 : index
    %c0_148 = arith.constant 0 : index
    %739 = vector.load %arg10[%c6_146, %c0_147, %c0_148] : memref<9x8x8xf32, #tpu.memory_space<vmem>>, vector<1x8x8xf32>
    %740 = vector.shape_cast %739 : vector<1x8x8xf32> to vector<8x8xf32>
    %741 = vector.extract_strided_slice %740 {offsets = [0, 0], sizes = [8, 1], strides = [1, 1]} : vector<8x8xf32> to vector<8x1xf32>
    %742 = vector.extract_strided_slice %738 {offsets = [0, 0], sizes = [1, 64], strides = [1, 1]} : vector<8x64xf32> to vector<1x64xf32>
    %743 = vector.broadcast %741 : vector<8x1xf32> to vector<8x64xf32>
    %744 = vector.broadcast %742 : vector<1x64xf32> to vector<8x64xf32>
    %745 = arith.mulf %743, %744 : vector<8x64xf32>
    %746 = arith.addf %724, %745 : vector<8x64xf32>
    %747 = vector.extract_strided_slice %740 {offsets = [0, 1], sizes = [8, 1], strides = [1, 1]} : vector<8x8xf32> to vector<8x1xf32>
    %748 = vector.extract_strided_slice %738 {offsets = [1, 0], sizes = [1, 64], strides = [1, 1]} : vector<8x64xf32> to vector<1x64xf32>
    %749 = vector.broadcast %747 : vector<8x1xf32> to vector<8x64xf32>
    %750 = vector.broadcast %748 : vector<1x64xf32> to vector<8x64xf32>
    %751 = arith.mulf %749, %750 : vector<8x64xf32>
    %752 = arith.addf %746, %751 : vector<8x64xf32>
    %753 = vector.extract_strided_slice %740 {offsets = [0, 2], sizes = [8, 1], strides = [1, 1]} : vector<8x8xf32> to vector<8x1xf32>
    %754 = vector.extract_strided_slice %738 {offsets = [2, 0], sizes = [1, 64], strides = [1, 1]} : vector<8x64xf32> to vector<1x64xf32>
    %755 = vector.broadcast %753 : vector<8x1xf32> to vector<8x64xf32>
    %756 = vector.broadcast %754 : vector<1x64xf32> to vector<8x64xf32>
    %757 = arith.mulf %755, %756 : vector<8x64xf32>
    %758 = arith.addf %752, %757 : vector<8x64xf32>
    %759 = vector.extract_strided_slice %740 {offsets = [0, 3], sizes = [8, 1], strides = [1, 1]} : vector<8x8xf32> to vector<8x1xf32>
    %760 = vector.extract_strided_slice %738 {offsets = [3, 0], sizes = [1, 64], strides = [1, 1]} : vector<8x64xf32> to vector<1x64xf32>
    %761 = vector.broadcast %759 : vector<8x1xf32> to vector<8x64xf32>
    %762 = vector.broadcast %760 : vector<1x64xf32> to vector<8x64xf32>
    %763 = arith.mulf %761, %762 : vector<8x64xf32>
    %764 = arith.addf %758, %763 : vector<8x64xf32>
    %765 = vector.extract_strided_slice %740 {offsets = [0, 4], sizes = [8, 1], strides = [1, 1]} : vector<8x8xf32> to vector<8x1xf32>
    %766 = vector.extract_strided_slice %738 {offsets = [4, 0], sizes = [1, 64], strides = [1, 1]} : vector<8x64xf32> to vector<1x64xf32>
    %767 = vector.broadcast %765 : vector<8x1xf32> to vector<8x64xf32>
    %768 = vector.broadcast %766 : vector<1x64xf32> to vector<8x64xf32>
    %769 = arith.mulf %767, %768 : vector<8x64xf32>
    %770 = arith.addf %764, %769 : vector<8x64xf32>
    %771 = vector.extract_strided_slice %740 {offsets = [0, 5], sizes = [8, 1], strides = [1, 1]} : vector<8x8xf32> to vector<8x1xf32>
    %772 = vector.extract_strided_slice %738 {offsets = [5, 0], sizes = [1, 64], strides = [1, 1]} : vector<8x64xf32> to vector<1x64xf32>
    %773 = vector.broadcast %771 : vector<8x1xf32> to vector<8x64xf32>
    %774 = vector.broadcast %772 : vector<1x64xf32> to vector<8x64xf32>
    %775 = arith.mulf %773, %774 : vector<8x64xf32>
    %776 = arith.addf %770, %775 : vector<8x64xf32>
    %777 = vector.extract_strided_slice %740 {offsets = [0, 6], sizes = [8, 1], strides = [1, 1]} : vector<8x8xf32> to vector<8x1xf32>
    %778 = vector.extract_strided_slice %738 {offsets = [6, 0], sizes = [1, 64], strides = [1, 1]} : vector<8x64xf32> to vector<1x64xf32>
    %779 = vector.broadcast %777 : vector<8x1xf32> to vector<8x64xf32>
    %780 = vector.broadcast %778 : vector<1x64xf32> to vector<8x64xf32>
    %781 = arith.mulf %779, %780 : vector<8x64xf32>
    %782 = arith.addf %776, %781 : vector<8x64xf32>
    %783 = vector.extract_strided_slice %740 {offsets = [0, 7], sizes = [8, 1], strides = [1, 1]} : vector<8x8xf32> to vector<8x1xf32>
    %784 = vector.extract_strided_slice %738 {offsets = [7, 0], sizes = [1, 64], strides = [1, 1]} : vector<8x64xf32> to vector<1x64xf32>
    %785 = vector.broadcast %783 : vector<8x1xf32> to vector<8x64xf32>
    %786 = vector.broadcast %784 : vector<1x64xf32> to vector<8x64xf32>
    %787 = arith.mulf %785, %786 : vector<8x64xf32>
    %788 = arith.addf %782, %787 : vector<8x64xf32>
    %c0_149 = arith.constant 0 : index
    %c17_150 = arith.constant 17 : index
    %789 = vector.load %arg16[%c0_149, %c17_150] : memref<8x82xf32, #tpu.memory_space<vmem>>, vector<8x64xf32>
    %c7_151 = arith.constant 7 : index
    %c0_152 = arith.constant 0 : index
    %c0_153 = arith.constant 0 : index
    %790 = vector.load %arg10[%c7_151, %c0_152, %c0_153] : memref<9x8x8xf32, #tpu.memory_space<vmem>>, vector<1x8x8xf32>
    %791 = vector.shape_cast %790 : vector<1x8x8xf32> to vector<8x8xf32>
    %792 = vector.extract_strided_slice %791 {offsets = [0, 0], sizes = [8, 1], strides = [1, 1]} : vector<8x8xf32> to vector<8x1xf32>
    %793 = vector.extract_strided_slice %789 {offsets = [0, 0], sizes = [1, 64], strides = [1, 1]} : vector<8x64xf32> to vector<1x64xf32>
    %794 = vector.broadcast %792 : vector<8x1xf32> to vector<8x64xf32>
    %795 = vector.broadcast %793 : vector<1x64xf32> to vector<8x64xf32>
    %796 = arith.mulf %794, %795 : vector<8x64xf32>
    %797 = arith.addf %788, %796 : vector<8x64xf32>
    %798 = vector.extract_strided_slice %791 {offsets = [0, 1], sizes = [8, 1], strides = [1, 1]} : vector<8x8xf32> to vector<8x1xf32>
    %799 = vector.extract_strided_slice %789 {offsets = [1, 0], sizes = [1, 64], strides = [1, 1]} : vector<8x64xf32> to vector<1x64xf32>
    %800 = vector.broadcast %798 : vector<8x1xf32> to vector<8x64xf32>
    %801 = vector.broadcast %799 : vector<1x64xf32> to vector<8x64xf32>
    %802 = arith.mulf %800, %801 : vector<8x64xf32>
    %803 = arith.addf %797, %802 : vector<8x64xf32>
    %804 = vector.extract_strided_slice %791 {offsets = [0, 2], sizes = [8, 1], strides = [1, 1]} : vector<8x8xf32> to vector<8x1xf32>
    %805 = vector.extract_strided_slice %789 {offsets = [2, 0], sizes = [1, 64], strides = [1, 1]} : vector<8x64xf32> to vector<1x64xf32>
    %806 = vector.broadcast %804 : vector<8x1xf32> to vector<8x64xf32>
    %807 = vector.broadcast %805 : vector<1x64xf32> to vector<8x64xf32>
    %808 = arith.mulf %806, %807 : vector<8x64xf32>
    %809 = arith.addf %803, %808 : vector<8x64xf32>
    %810 = vector.extract_strided_slice %791 {offsets = [0, 3], sizes = [8, 1], strides = [1, 1]} : vector<8x8xf32> to vector<8x1xf32>
    %811 = vector.extract_strided_slice %789 {offsets = [3, 0], sizes = [1, 64], strides = [1, 1]} : vector<8x64xf32> to vector<1x64xf32>
    %812 = vector.broadcast %810 : vector<8x1xf32> to vector<8x64xf32>
    %813 = vector.broadcast %811 : vector<1x64xf32> to vector<8x64xf32>
    %814 = arith.mulf %812, %813 : vector<8x64xf32>
    %815 = arith.addf %809, %814 : vector<8x64xf32>
    %816 = vector.extract_strided_slice %791 {offsets = [0, 4], sizes = [8, 1], strides = [1, 1]} : vector<8x8xf32> to vector<8x1xf32>
    %817 = vector.extract_strided_slice %789 {offsets = [4, 0], sizes = [1, 64], strides = [1, 1]} : vector<8x64xf32> to vector<1x64xf32>
    %818 = vector.broadcast %816 : vector<8x1xf32> to vector<8x64xf32>
    %819 = vector.broadcast %817 : vector<1x64xf32> to vector<8x64xf32>
    %820 = arith.mulf %818, %819 : vector<8x64xf32>
    %821 = arith.addf %815, %820 : vector<8x64xf32>
    %822 = vector.extract_strided_slice %791 {offsets = [0, 5], sizes = [8, 1], strides = [1, 1]} : vector<8x8xf32> to vector<8x1xf32>
    %823 = vector.extract_strided_slice %789 {offsets = [5, 0], sizes = [1, 64], strides = [1, 1]} : vector<8x64xf32> to vector<1x64xf32>
    %824 = vector.broadcast %822 : vector<8x1xf32> to vector<8x64xf32>
    %825 = vector.broadcast %823 : vector<1x64xf32> to vector<8x64xf32>
    %826 = arith.mulf %824, %825 : vector<8x64xf32>
    %827 = arith.addf %821, %826 : vector<8x64xf32>
    %828 = vector.extract_strided_slice %791 {offsets = [0, 6], sizes = [8, 1], strides = [1, 1]} : vector<8x8xf32> to vector<8x1xf32>
    %829 = vector.extract_strided_slice %789 {offsets = [6, 0], sizes = [1, 64], strides = [1, 1]} : vector<8x64xf32> to vector<1x64xf32>
    %830 = vector.broadcast %828 : vector<8x1xf32> to vector<8x64xf32>
    %831 = vector.broadcast %829 : vector<1x64xf32> to vector<8x64xf32>
    %832 = arith.mulf %830, %831 : vector<8x64xf32>
    %833 = arith.addf %827, %832 : vector<8x64xf32>
    %834 = vector.extract_strided_slice %791 {offsets = [0, 7], sizes = [8, 1], strides = [1, 1]} : vector<8x8xf32> to vector<8x1xf32>
    %835 = vector.extract_strided_slice %789 {offsets = [7, 0], sizes = [1, 64], strides = [1, 1]} : vector<8x64xf32> to vector<1x64xf32>
    %836 = vector.broadcast %834 : vector<8x1xf32> to vector<8x64xf32>
    %837 = vector.broadcast %835 : vector<1x64xf32> to vector<8x64xf32>
    %838 = arith.mulf %836, %837 : vector<8x64xf32>
    %839 = arith.addf %833, %838 : vector<8x64xf32>
    %c0_154 = arith.constant 0 : index
    %c18_155 = arith.constant 18 : index
    %840 = vector.load %arg16[%c0_154, %c18_155] : memref<8x82xf32, #tpu.memory_space<vmem>>, vector<8x64xf32>
    %c1_i32_156 = arith.constant 1 : i32
    %841 = vector.broadcast %c1_i32_156 : i32 to vector<1x64xi32>
    %842 = arith.addi %18, %841 : vector<1x64xi32>
    %c0_i32_157 = arith.constant 0 : i32
    %843 = vector.broadcast %c0_i32_157 : i32 to vector<1x64xi32>
    %844 = arith.cmpi sge, %842, %843 : vector<1x64xi32>
    %c1_i32_158 = arith.constant 1 : i32
    %845 = vector.broadcast %c1_i32_158 : i32 to vector<1x64xi32>
    %846 = arith.addi %18, %845 : vector<1x64xi32>
    %c8_i32_159 = arith.constant 8 : i32
    %847 = vector.broadcast %c8_i32_159 : i32 to vector<1x64xi32>
    %848 = arith.cmpi slt, %846, %847 : vector<1x64xi32>
    %849 = arith.andi %844, %848 : vector<1x64xi1>
    %cst_160 = arith.constant 0.000000e+00 : f32
    %850 = vector.shape_cast %849 : vector<1x64xi1> to vector<1x64xi1>
    %851 = vector.broadcast %850 : vector<1x64xi1> to vector<8x64xi1>
    %852 = vector.broadcast %cst_160 : f32 to vector<8x64xf32>
    %853 = arith.select %851, %840, %852 : vector<8x64xi1>, vector<8x64xf32>
    %c8_161 = arith.constant 8 : index
    %c0_162 = arith.constant 0 : index
    %c0_163 = arith.constant 0 : index
    %854 = vector.load %arg10[%c8_161, %c0_162, %c0_163] : memref<9x8x8xf32, #tpu.memory_space<vmem>>, vector<1x8x8xf32>
    %855 = vector.shape_cast %854 : vector<1x8x8xf32> to vector<8x8xf32>
    %856 = vector.extract_strided_slice %855 {offsets = [0, 0], sizes = [8, 1], strides = [1, 1]} : vector<8x8xf32> to vector<8x1xf32>
    %857 = vector.extract_strided_slice %853 {offsets = [0, 0], sizes = [1, 64], strides = [1, 1]} : vector<8x64xf32> to vector<1x64xf32>
    %858 = vector.broadcast %856 : vector<8x1xf32> to vector<8x64xf32>
    %859 = vector.broadcast %857 : vector<1x64xf32> to vector<8x64xf32>
    %860 = arith.mulf %858, %859 : vector<8x64xf32>
    %861 = arith.addf %839, %860 : vector<8x64xf32>
    %862 = vector.extract_strided_slice %855 {offsets = [0, 1], sizes = [8, 1], strides = [1, 1]} : vector<8x8xf32> to vector<8x1xf32>
    %863 = vector.extract_strided_slice %853 {offsets = [1, 0], sizes = [1, 64], strides = [1, 1]} : vector<8x64xf32> to vector<1x64xf32>
    %864 = vector.broadcast %862 : vector<8x1xf32> to vector<8x64xf32>
    %865 = vector.broadcast %863 : vector<1x64xf32> to vector<8x64xf32>
    %866 = arith.mulf %864, %865 : vector<8x64xf32>
    %867 = arith.addf %861, %866 : vector<8x64xf32>
    %868 = vector.extract_strided_slice %855 {offsets = [0, 2], sizes = [8, 1], strides = [1, 1]} : vector<8x8xf32> to vector<8x1xf32>
    %869 = vector.extract_strided_slice %853 {offsets = [2, 0], sizes = [1, 64], strides = [1, 1]} : vector<8x64xf32> to vector<1x64xf32>
    %870 = vector.broadcast %868 : vector<8x1xf32> to vector<8x64xf32>
    %871 = vector.broadcast %869 : vector<1x64xf32> to vector<8x64xf32>
    %872 = arith.mulf %870, %871 : vector<8x64xf32>
    %873 = arith.addf %867, %872 : vector<8x64xf32>
    %874 = vector.extract_strided_slice %855 {offsets = [0, 3], sizes = [8, 1], strides = [1, 1]} : vector<8x8xf32> to vector<8x1xf32>
    %875 = vector.extract_strided_slice %853 {offsets = [3, 0], sizes = [1, 64], strides = [1, 1]} : vector<8x64xf32> to vector<1x64xf32>
    %876 = vector.broadcast %874 : vector<8x1xf32> to vector<8x64xf32>
    %877 = vector.broadcast %875 : vector<1x64xf32> to vector<8x64xf32>
    %878 = arith.mulf %876, %877 : vector<8x64xf32>
    %879 = arith.addf %873, %878 : vector<8x64xf32>
    %880 = vector.extract_strided_slice %855 {offsets = [0, 4], sizes = [8, 1], strides = [1, 1]} : vector<8x8xf32> to vector<8x1xf32>
    %881 = vector.extract_strided_slice %853 {offsets = [4, 0], sizes = [1, 64], strides = [1, 1]} : vector<8x64xf32> to vector<1x64xf32>
    %882 = vector.broadcast %880 : vector<8x1xf32> to vector<8x64xf32>
    %883 = vector.broadcast %881 : vector<1x64xf32> to vector<8x64xf32>
    %884 = arith.mulf %882, %883 : vector<8x64xf32>
    %885 = arith.addf %879, %884 : vector<8x64xf32>
    %886 = vector.extract_strided_slice %855 {offsets = [0, 5], sizes = [8, 1], strides = [1, 1]} : vector<8x8xf32> to vector<8x1xf32>
    %887 = vector.extract_strided_slice %853 {offsets = [5, 0], sizes = [1, 64], strides = [1, 1]} : vector<8x64xf32> to vector<1x64xf32>
    %888 = vector.broadcast %886 : vector<8x1xf32> to vector<8x64xf32>
    %889 = vector.broadcast %887 : vector<1x64xf32> to vector<8x64xf32>
    %890 = arith.mulf %888, %889 : vector<8x64xf32>
    %891 = arith.addf %885, %890 : vector<8x64xf32>
    %892 = vector.extract_strided_slice %855 {offsets = [0, 6], sizes = [8, 1], strides = [1, 1]} : vector<8x8xf32> to vector<8x1xf32>
    %893 = vector.extract_strided_slice %853 {offsets = [6, 0], sizes = [1, 64], strides = [1, 1]} : vector<8x64xf32> to vector<1x64xf32>
    %894 = vector.broadcast %892 : vector<8x1xf32> to vector<8x64xf32>
    %895 = vector.broadcast %893 : vector<1x64xf32> to vector<8x64xf32>
    %896 = arith.mulf %894, %895 : vector<8x64xf32>
    %897 = arith.addf %891, %896 : vector<8x64xf32>
    %898 = vector.extract_strided_slice %855 {offsets = [0, 7], sizes = [8, 1], strides = [1, 1]} : vector<8x8xf32> to vector<8x1xf32>
    %899 = vector.extract_strided_slice %853 {offsets = [7, 0], sizes = [1, 64], strides = [1, 1]} : vector<8x64xf32> to vector<1x64xf32>
    %900 = vector.broadcast %898 : vector<8x1xf32> to vector<8x64xf32>
    %901 = vector.broadcast %899 : vector<1x64xf32> to vector<8x64xf32>
    %902 = arith.mulf %900, %901 : vector<8x64xf32>
    %903 = arith.addf %897, %902 : vector<8x64xf32>
    %c0_164 = arith.constant 0 : index
    %c0_165 = arith.constant 0 : index
    %904 = vector.load %arg11[%c0_164, %c0_165] : memref<8x1xf32, #tpu.memory_space<vmem>>, vector<8x1xf32>
    %905 = vector.broadcast %904 : vector<8x1xf32> to vector<8x64xf32>
    %906 = arith.addf %903, %905 : vector<8x64xf32>
    %c0_166 = arith.constant 0 : index
    %c0_167 = arith.constant 0 : index
    %907 = vector.load %arg6[%c0_166, %c0_167] : memref<4x1xf32, #tpu.memory_space<vmem>>, vector<4x1xf32>
    %908 = vector.broadcast %907 : vector<4x1xf32> to vector<4x64xf32>
    %909 = arith.mulf %1, %908 : vector<4x64xf32>
    %c0_168 = arith.constant 0 : index
    %c0_169 = arith.constant 0 : index
    %910 = vector.load %arg7[%c0_168, %c0_169] : memref<4x1xf32, #tpu.memory_space<vmem>>, vector<4x1xf32>
    %911 = vector.broadcast %910 : vector<4x1xf32> to vector<4x64xf32>
    %912 = arith.addf %909, %911 : vector<4x64xf32>
    %cst_170 = arith.constant 0.000000e+00 : f32
    %913 = vector.broadcast %cst_170 : f32 to vector<4x64xf32>
    %914 = arith.maximumf %912, %913 : vector<4x64xf32>
    %cst_171 = arith.constant 0.000000e+00 : f32
    %915 = vector.broadcast %cst_171 : f32 to vector<4x82xf32>
    %c0_172 = arith.constant 0 : index
    %c0_173 = arith.constant 0 : index
    %916 = vector.load %arg15[%c0_172, %c0_173] : memref<4x82xf32, #tpu.memory_space<vmem>>, vector<4x82xf32>
    tpu.vector_store %arg15[%c0_172, %c0_173], %915 {strides = array<i32>} : memref<4x82xf32, #tpu.memory_space<vmem>>, vector<4x82xf32>,
    %c0_174 = arith.constant 0 : index
    %c9_175 = arith.constant 9 : index
    %917 = vector.load %arg15[%c0_174, %c9_175] : memref<4x82xf32, #tpu.memory_space<vmem>>, vector<4x64xf32>
    tpu.vector_store %arg15[%c0_174, %c9_175], %914 {strides = array<i32>} : memref<4x82xf32, #tpu.memory_space<vmem>>, vector<4x64xf32>,
    %cst_176 = arith.constant 0.000000e+00 : f32
    %918 = vector.broadcast %cst_176 : f32 to vector<8x64xf32>
    %c0_177 = arith.constant 0 : index
    %c0_178 = arith.constant 0 : index
    %919 = vector.load %arg15[%c0_177, %c0_178] : memref<4x82xf32, #tpu.memory_space<vmem>>, vector<4x64xf32>
    %c-1_i32_179 = arith.constant -1 : i32
    %920 = vector.broadcast %c-1_i32_179 : i32 to vector<1x64xi32>
    %921 = arith.addi %18, %920 : vector<1x64xi32>
    %c0_i32_180 = arith.constant 0 : i32
    %922 = vector.broadcast %c0_i32_180 : i32 to vector<1x64xi32>
    %923 = arith.cmpi sge, %921, %922 : vector<1x64xi32>
    %c-1_i32_181 = arith.constant -1 : i32
    %924 = vector.broadcast %c-1_i32_181 : i32 to vector<1x64xi32>
    %925 = arith.addi %18, %924 : vector<1x64xi32>
    %c8_i32_182 = arith.constant 8 : i32
    %926 = vector.broadcast %c8_i32_182 : i32 to vector<1x64xi32>
    %927 = arith.cmpi slt, %925, %926 : vector<1x64xi32>
    %928 = arith.andi %923, %927 : vector<1x64xi1>
    %cst_183 = arith.constant 0.000000e+00 : f32
    %929 = vector.shape_cast %928 : vector<1x64xi1> to vector<1x64xi1>
    %930 = vector.broadcast %929 : vector<1x64xi1> to vector<4x64xi1>
    %931 = vector.broadcast %cst_183 : f32 to vector<4x64xf32>
    %932 = arith.select %930, %919, %931 : vector<4x64xi1>, vector<4x64xf32>
    %c0_184 = arith.constant 0 : index
    %c0_185 = arith.constant 0 : index
    %c0_186 = arith.constant 0 : index
    %933 = vector.load %arg12[%c0_184, %c0_185, %c0_186] : memref<9x8x4xf32, #tpu.memory_space<vmem>>, vector<1x8x4xf32>
    %934 = vector.shape_cast %933 : vector<1x8x4xf32> to vector<8x4xf32>
    %935 = vector.extract_strided_slice %934 {offsets = [0, 0], sizes = [8, 1], strides = [1, 1]} : vector<8x4xf32> to vector<8x1xf32>
    %936 = vector.extract_strided_slice %932 {offsets = [0, 0], sizes = [1, 64], strides = [1, 1]} : vector<4x64xf32> to vector<1x64xf32>
    %937 = vector.broadcast %935 : vector<8x1xf32> to vector<8x64xf32>
    %938 = vector.broadcast %936 : vector<1x64xf32> to vector<8x64xf32>
    %939 = arith.mulf %937, %938 : vector<8x64xf32>
    %940 = arith.addf %918, %939 : vector<8x64xf32>
    %941 = vector.extract_strided_slice %934 {offsets = [0, 1], sizes = [8, 1], strides = [1, 1]} : vector<8x4xf32> to vector<8x1xf32>
    %942 = vector.extract_strided_slice %932 {offsets = [1, 0], sizes = [1, 64], strides = [1, 1]} : vector<4x64xf32> to vector<1x64xf32>
    %943 = vector.broadcast %941 : vector<8x1xf32> to vector<8x64xf32>
    %944 = vector.broadcast %942 : vector<1x64xf32> to vector<8x64xf32>
    %945 = arith.mulf %943, %944 : vector<8x64xf32>
    %946 = arith.addf %940, %945 : vector<8x64xf32>
    %947 = vector.extract_strided_slice %934 {offsets = [0, 2], sizes = [8, 1], strides = [1, 1]} : vector<8x4xf32> to vector<8x1xf32>
    %948 = vector.extract_strided_slice %932 {offsets = [2, 0], sizes = [1, 64], strides = [1, 1]} : vector<4x64xf32> to vector<1x64xf32>
    %949 = vector.broadcast %947 : vector<8x1xf32> to vector<8x64xf32>
    %950 = vector.broadcast %948 : vector<1x64xf32> to vector<8x64xf32>
    %951 = arith.mulf %949, %950 : vector<8x64xf32>
    %952 = arith.addf %946, %951 : vector<8x64xf32>
    %953 = vector.extract_strided_slice %934 {offsets = [0, 3], sizes = [8, 1], strides = [1, 1]} : vector<8x4xf32> to vector<8x1xf32>
    %954 = vector.extract_strided_slice %932 {offsets = [3, 0], sizes = [1, 64], strides = [1, 1]} : vector<4x64xf32> to vector<1x64xf32>
    %955 = vector.broadcast %953 : vector<8x1xf32> to vector<8x64xf32>
    %956 = vector.broadcast %954 : vector<1x64xf32> to vector<8x64xf32>
    %957 = arith.mulf %955, %956 : vector<8x64xf32>
    %958 = arith.addf %952, %957 : vector<8x64xf32>
    %c0_187 = arith.constant 0 : index
    %c1_188 = arith.constant 1 : index
    %959 = vector.load %arg15[%c0_187, %c1_188] : memref<4x82xf32, #tpu.memory_space<vmem>>, vector<4x64xf32>
    %c1_189 = arith.constant 1 : index
    %c0_190 = arith.constant 0 : index
    %c0_191 = arith.constant 0 : index
    %960 = vector.load %arg12[%c1_189, %c0_190, %c0_191] : memref<9x8x4xf32, #tpu.memory_space<vmem>>, vector<1x8x4xf32>
    %961 = vector.shape_cast %960 : vector<1x8x4xf32> to vector<8x4xf32>
    %962 = vector.extract_strided_slice %961 {offsets = [0, 0], sizes = [8, 1], strides = [1, 1]} : vector<8x4xf32> to vector<8x1xf32>
    %963 = vector.extract_strided_slice %959 {offsets = [0, 0], sizes = [1, 64], strides = [1, 1]} : vector<4x64xf32> to vector<1x64xf32>
    %964 = vector.broadcast %962 : vector<8x1xf32> to vector<8x64xf32>
    %965 = vector.broadcast %963 : vector<1x64xf32> to vector<8x64xf32>
    %966 = arith.mulf %964, %965 : vector<8x64xf32>
    %967 = arith.addf %958, %966 : vector<8x64xf32>
    %968 = vector.extract_strided_slice %961 {offsets = [0, 1], sizes = [8, 1], strides = [1, 1]} : vector<8x4xf32> to vector<8x1xf32>
    %969 = vector.extract_strided_slice %959 {offsets = [1, 0], sizes = [1, 64], strides = [1, 1]} : vector<4x64xf32> to vector<1x64xf32>
    %970 = vector.broadcast %968 : vector<8x1xf32> to vector<8x64xf32>
    %971 = vector.broadcast %969 : vector<1x64xf32> to vector<8x64xf32>
    %972 = arith.mulf %970, %971 : vector<8x64xf32>
    %973 = arith.addf %967, %972 : vector<8x64xf32>
    %974 = vector.extract_strided_slice %961 {offsets = [0, 2], sizes = [8, 1], strides = [1, 1]} : vector<8x4xf32> to vector<8x1xf32>
    %975 = vector.extract_strided_slice %959 {offsets = [2, 0], sizes = [1, 64], strides = [1, 1]} : vector<4x64xf32> to vector<1x64xf32>
    %976 = vector.broadcast %974 : vector<8x1xf32> to vector<8x64xf32>
    %977 = vector.broadcast %975 : vector<1x64xf32> to vector<8x64xf32>
    %978 = arith.mulf %976, %977 : vector<8x64xf32>
    %979 = arith.addf %973, %978 : vector<8x64xf32>
    %980 = vector.extract_strided_slice %961 {offsets = [0, 3], sizes = [8, 1], strides = [1, 1]} : vector<8x4xf32> to vector<8x1xf32>
    %981 = vector.extract_strided_slice %959 {offsets = [3, 0], sizes = [1, 64], strides = [1, 1]} : vector<4x64xf32> to vector<1x64xf32>
    %982 = vector.broadcast %980 : vector<8x1xf32> to vector<8x64xf32>
    %983 = vector.broadcast %981 : vector<1x64xf32> to vector<8x64xf32>
    %984 = arith.mulf %982, %983 : vector<8x64xf32>
    %985 = arith.addf %979, %984 : vector<8x64xf32>
    %c0_192 = arith.constant 0 : index
    %c2_193 = arith.constant 2 : index
    %986 = vector.load %arg15[%c0_192, %c2_193] : memref<4x82xf32, #tpu.memory_space<vmem>>, vector<4x64xf32>
    %c1_i32_194 = arith.constant 1 : i32
    %987 = vector.broadcast %c1_i32_194 : i32 to vector<1x64xi32>
    %988 = arith.addi %18, %987 : vector<1x64xi32>
    %c0_i32_195 = arith.constant 0 : i32
    %989 = vector.broadcast %c0_i32_195 : i32 to vector<1x64xi32>
    %990 = arith.cmpi sge, %988, %989 : vector<1x64xi32>
    %c1_i32_196 = arith.constant 1 : i32
    %991 = vector.broadcast %c1_i32_196 : i32 to vector<1x64xi32>
    %992 = arith.addi %18, %991 : vector<1x64xi32>
    %c8_i32_197 = arith.constant 8 : i32
    %993 = vector.broadcast %c8_i32_197 : i32 to vector<1x64xi32>
    %994 = arith.cmpi slt, %992, %993 : vector<1x64xi32>
    %995 = arith.andi %990, %994 : vector<1x64xi1>
    %cst_198 = arith.constant 0.000000e+00 : f32
    %996 = vector.shape_cast %995 : vector<1x64xi1> to vector<1x64xi1>
    %997 = vector.broadcast %996 : vector<1x64xi1> to vector<4x64xi1>
    %998 = vector.broadcast %cst_198 : f32 to vector<4x64xf32>
    %999 = arith.select %997, %986, %998 : vector<4x64xi1>, vector<4x64xf32>
    %c2_199 = arith.constant 2 : index
    %c0_200 = arith.constant 0 : index
    %c0_201 = arith.constant 0 : index
    %1000 = vector.load %arg12[%c2_199, %c0_200, %c0_201] : memref<9x8x4xf32, #tpu.memory_space<vmem>>, vector<1x8x4xf32>
    %1001 = vector.shape_cast %1000 : vector<1x8x4xf32> to vector<8x4xf32>
    %1002 = vector.extract_strided_slice %1001 {offsets = [0, 0], sizes = [8, 1], strides = [1, 1]} : vector<8x4xf32> to vector<8x1xf32>
    %1003 = vector.extract_strided_slice %999 {offsets = [0, 0], sizes = [1, 64], strides = [1, 1]} : vector<4x64xf32> to vector<1x64xf32>
    %1004 = vector.broadcast %1002 : vector<8x1xf32> to vector<8x64xf32>
    %1005 = vector.broadcast %1003 : vector<1x64xf32> to vector<8x64xf32>
    %1006 = arith.mulf %1004, %1005 : vector<8x64xf32>
    %1007 = arith.addf %985, %1006 : vector<8x64xf32>
    %1008 = vector.extract_strided_slice %1001 {offsets = [0, 1], sizes = [8, 1], strides = [1, 1]} : vector<8x4xf32> to vector<8x1xf32>
    %1009 = vector.extract_strided_slice %999 {offsets = [1, 0], sizes = [1, 64], strides = [1, 1]} : vector<4x64xf32> to vector<1x64xf32>
    %1010 = vector.broadcast %1008 : vector<8x1xf32> to vector<8x64xf32>
    %1011 = vector.broadcast %1009 : vector<1x64xf32> to vector<8x64xf32>
    %1012 = arith.mulf %1010, %1011 : vector<8x64xf32>
    %1013 = arith.addf %1007, %1012 : vector<8x64xf32>
    %1014 = vector.extract_strided_slice %1001 {offsets = [0, 2], sizes = [8, 1], strides = [1, 1]} : vector<8x4xf32> to vector<8x1xf32>
    %1015 = vector.extract_strided_slice %999 {offsets = [2, 0], sizes = [1, 64], strides = [1, 1]} : vector<4x64xf32> to vector<1x64xf32>
    %1016 = vector.broadcast %1014 : vector<8x1xf32> to vector<8x64xf32>
    %1017 = vector.broadcast %1015 : vector<1x64xf32> to vector<8x64xf32>
    %1018 = arith.mulf %1016, %1017 : vector<8x64xf32>
    %1019 = arith.addf %1013, %1018 : vector<8x64xf32>
    %1020 = vector.extract_strided_slice %1001 {offsets = [0, 3], sizes = [8, 1], strides = [1, 1]} : vector<8x4xf32> to vector<8x1xf32>
    %1021 = vector.extract_strided_slice %999 {offsets = [3, 0], sizes = [1, 64], strides = [1, 1]} : vector<4x64xf32> to vector<1x64xf32>
    %1022 = vector.broadcast %1020 : vector<8x1xf32> to vector<8x64xf32>
    %1023 = vector.broadcast %1021 : vector<1x64xf32> to vector<8x64xf32>
    %1024 = arith.mulf %1022, %1023 : vector<8x64xf32>
    %1025 = arith.addf %1019, %1024 : vector<8x64xf32>
    %c0_202 = arith.constant 0 : index
    %c8_203 = arith.constant 8 : index
    %1026 = vector.load %arg15[%c0_202, %c8_203] : memref<4x82xf32, #tpu.memory_space<vmem>>, vector<4x64xf32>
    %c-1_i32_204 = arith.constant -1 : i32
    %1027 = vector.broadcast %c-1_i32_204 : i32 to vector<1x64xi32>
    %1028 = arith.addi %18, %1027 : vector<1x64xi32>
    %c0_i32_205 = arith.constant 0 : i32
    %1029 = vector.broadcast %c0_i32_205 : i32 to vector<1x64xi32>
    %1030 = arith.cmpi sge, %1028, %1029 : vector<1x64xi32>
    %c-1_i32_206 = arith.constant -1 : i32
    %1031 = vector.broadcast %c-1_i32_206 : i32 to vector<1x64xi32>
    %1032 = arith.addi %18, %1031 : vector<1x64xi32>
    %c8_i32_207 = arith.constant 8 : i32
    %1033 = vector.broadcast %c8_i32_207 : i32 to vector<1x64xi32>
    %1034 = arith.cmpi slt, %1032, %1033 : vector<1x64xi32>
    %1035 = arith.andi %1030, %1034 : vector<1x64xi1>
    %cst_208 = arith.constant 0.000000e+00 : f32
    %1036 = vector.shape_cast %1035 : vector<1x64xi1> to vector<1x64xi1>
    %1037 = vector.broadcast %1036 : vector<1x64xi1> to vector<4x64xi1>
    %1038 = vector.broadcast %cst_208 : f32 to vector<4x64xf32>
    %1039 = arith.select %1037, %1026, %1038 : vector<4x64xi1>, vector<4x64xf32>
    %c3_209 = arith.constant 3 : index
    %c0_210 = arith.constant 0 : index
    %c0_211 = arith.constant 0 : index
    %1040 = vector.load %arg12[%c3_209, %c0_210, %c0_211] : memref<9x8x4xf32, #tpu.memory_space<vmem>>, vector<1x8x4xf32>
    %1041 = vector.shape_cast %1040 : vector<1x8x4xf32> to vector<8x4xf32>
    %1042 = vector.extract_strided_slice %1041 {offsets = [0, 0], sizes = [8, 1], strides = [1, 1]} : vector<8x4xf32> to vector<8x1xf32>
    %1043 = vector.extract_strided_slice %1039 {offsets = [0, 0], sizes = [1, 64], strides = [1, 1]} : vector<4x64xf32> to vector<1x64xf32>
    %1044 = vector.broadcast %1042 : vector<8x1xf32> to vector<8x64xf32>
    %1045 = vector.broadcast %1043 : vector<1x64xf32> to vector<8x64xf32>
    %1046 = arith.mulf %1044, %1045 : vector<8x64xf32>
    %1047 = arith.addf %1025, %1046 : vector<8x64xf32>
    %1048 = vector.extract_strided_slice %1041 {offsets = [0, 1], sizes = [8, 1], strides = [1, 1]} : vector<8x4xf32> to vector<8x1xf32>
    %1049 = vector.extract_strided_slice %1039 {offsets = [1, 0], sizes = [1, 64], strides = [1, 1]} : vector<4x64xf32> to vector<1x64xf32>
    %1050 = vector.broadcast %1048 : vector<8x1xf32> to vector<8x64xf32>
    %1051 = vector.broadcast %1049 : vector<1x64xf32> to vector<8x64xf32>
    %1052 = arith.mulf %1050, %1051 : vector<8x64xf32>
    %1053 = arith.addf %1047, %1052 : vector<8x64xf32>
    %1054 = vector.extract_strided_slice %1041 {offsets = [0, 2], sizes = [8, 1], strides = [1, 1]} : vector<8x4xf32> to vector<8x1xf32>
    %1055 = vector.extract_strided_slice %1039 {offsets = [2, 0], sizes = [1, 64], strides = [1, 1]} : vector<4x64xf32> to vector<1x64xf32>
    %1056 = vector.broadcast %1054 : vector<8x1xf32> to vector<8x64xf32>
    %1057 = vector.broadcast %1055 : vector<1x64xf32> to vector<8x64xf32>
    %1058 = arith.mulf %1056, %1057 : vector<8x64xf32>
    %1059 = arith.addf %1053, %1058 : vector<8x64xf32>
    %1060 = vector.extract_strided_slice %1041 {offsets = [0, 3], sizes = [8, 1], strides = [1, 1]} : vector<8x4xf32> to vector<8x1xf32>
    %1061 = vector.extract_strided_slice %1039 {offsets = [3, 0], sizes = [1, 64], strides = [1, 1]} : vector<4x64xf32> to vector<1x64xf32>
    %1062 = vector.broadcast %1060 : vector<8x1xf32> to vector<8x64xf32>
    %1063 = vector.broadcast %1061 : vector<1x64xf32> to vector<8x64xf32>
    %1064 = arith.mulf %1062, %1063 : vector<8x64xf32>
    %1065 = arith.addf %1059, %1064 : vector<8x64xf32>
    %c0_212 = arith.constant 0 : index
    %c9_213 = arith.constant 9 : index
    %1066 = vector.load %arg15[%c0_212, %c9_213] : memref<4x82xf32, #tpu.memory_space<vmem>>, vector<4x64xf32>
    %c4_214 = arith.constant 4 : index
    %c0_215 = arith.constant 0 : index
    %c0_216 = arith.constant 0 : index
    %1067 = vector.load %arg12[%c4_214, %c0_215, %c0_216] : memref<9x8x4xf32, #tpu.memory_space<vmem>>, vector<1x8x4xf32>
    %1068 = vector.shape_cast %1067 : vector<1x8x4xf32> to vector<8x4xf32>
    %1069 = vector.extract_strided_slice %1068 {offsets = [0, 0], sizes = [8, 1], strides = [1, 1]} : vector<8x4xf32> to vector<8x1xf32>
    %1070 = vector.extract_strided_slice %1066 {offsets = [0, 0], sizes = [1, 64], strides = [1, 1]} : vector<4x64xf32> to vector<1x64xf32>
    %1071 = vector.broadcast %1069 : vector<8x1xf32> to vector<8x64xf32>
    %1072 = vector.broadcast %1070 : vector<1x64xf32> to vector<8x64xf32>
    %1073 = arith.mulf %1071, %1072 : vector<8x64xf32>
    %1074 = arith.addf %1065, %1073 : vector<8x64xf32>
    %1075 = vector.extract_strided_slice %1068 {offsets = [0, 1], sizes = [8, 1], strides = [1, 1]} : vector<8x4xf32> to vector<8x1xf32>
    %1076 = vector.extract_strided_slice %1066 {offsets = [1, 0], sizes = [1, 64], strides = [1, 1]} : vector<4x64xf32> to vector<1x64xf32>
    %1077 = vector.broadcast %1075 : vector<8x1xf32> to vector<8x64xf32>
    %1078 = vector.broadcast %1076 : vector<1x64xf32> to vector<8x64xf32>
    %1079 = arith.mulf %1077, %1078 : vector<8x64xf32>
    %1080 = arith.addf %1074, %1079 : vector<8x64xf32>
    %1081 = vector.extract_strided_slice %1068 {offsets = [0, 2], sizes = [8, 1], strides = [1, 1]} : vector<8x4xf32> to vector<8x1xf32>
    %1082 = vector.extract_strided_slice %1066 {offsets = [2, 0], sizes = [1, 64], strides = [1, 1]} : vector<4x64xf32> to vector<1x64xf32>
    %1083 = vector.broadcast %1081 : vector<8x1xf32> to vector<8x64xf32>
    %1084 = vector.broadcast %1082 : vector<1x64xf32> to vector<8x64xf32>
    %1085 = arith.mulf %1083, %1084 : vector<8x64xf32>
    %1086 = arith.addf %1080, %1085 : vector<8x64xf32>
    %1087 = vector.extract_strided_slice %1068 {offsets = [0, 3], sizes = [8, 1], strides = [1, 1]} : vector<8x4xf32> to vector<8x1xf32>
    %1088 = vector.extract_strided_slice %1066 {offsets = [3, 0], sizes = [1, 64], strides = [1, 1]} : vector<4x64xf32> to vector<1x64xf32>
    %1089 = vector.broadcast %1087 : vector<8x1xf32> to vector<8x64xf32>
    %1090 = vector.broadcast %1088 : vector<1x64xf32> to vector<8x64xf32>
    %1091 = arith.mulf %1089, %1090 : vector<8x64xf32>
    %1092 = arith.addf %1086, %1091 : vector<8x64xf32>
    %c0_217 = arith.constant 0 : index
    %c10_218 = arith.constant 10 : index
    %1093 = vector.load %arg15[%c0_217, %c10_218] : memref<4x82xf32, #tpu.memory_space<vmem>>, vector<4x64xf32>
    %c1_i32_219 = arith.constant 1 : i32
    %1094 = vector.broadcast %c1_i32_219 : i32 to vector<1x64xi32>
    %1095 = arith.addi %18, %1094 : vector<1x64xi32>
    %c0_i32_220 = arith.constant 0 : i32
    %1096 = vector.broadcast %c0_i32_220 : i32 to vector<1x64xi32>
    %1097 = arith.cmpi sge, %1095, %1096 : vector<1x64xi32>
    %c1_i32_221 = arith.constant 1 : i32
    %1098 = vector.broadcast %c1_i32_221 : i32 to vector<1x64xi32>
    %1099 = arith.addi %18, %1098 : vector<1x64xi32>
    %c8_i32_222 = arith.constant 8 : i32
    %1100 = vector.broadcast %c8_i32_222 : i32 to vector<1x64xi32>
    %1101 = arith.cmpi slt, %1099, %1100 : vector<1x64xi32>
    %1102 = arith.andi %1097, %1101 : vector<1x64xi1>
    %cst_223 = arith.constant 0.000000e+00 : f32
    %1103 = vector.shape_cast %1102 : vector<1x64xi1> to vector<1x64xi1>
    %1104 = vector.broadcast %1103 : vector<1x64xi1> to vector<4x64xi1>
    %1105 = vector.broadcast %cst_223 : f32 to vector<4x64xf32>
    %1106 = arith.select %1104, %1093, %1105 : vector<4x64xi1>, vector<4x64xf32>
    %c5_224 = arith.constant 5 : index
    %c0_225 = arith.constant 0 : index
    %c0_226 = arith.constant 0 : index
    %1107 = vector.load %arg12[%c5_224, %c0_225, %c0_226] : memref<9x8x4xf32, #tpu.memory_space<vmem>>, vector<1x8x4xf32>
    %1108 = vector.shape_cast %1107 : vector<1x8x4xf32> to vector<8x4xf32>
    %1109 = vector.extract_strided_slice %1108 {offsets = [0, 0], sizes = [8, 1], strides = [1, 1]} : vector<8x4xf32> to vector<8x1xf32>
    %1110 = vector.extract_strided_slice %1106 {offsets = [0, 0], sizes = [1, 64], strides = [1, 1]} : vector<4x64xf32> to vector<1x64xf32>
    %1111 = vector.broadcast %1109 : vector<8x1xf32> to vector<8x64xf32>
    %1112 = vector.broadcast %1110 : vector<1x64xf32> to vector<8x64xf32>
    %1113 = arith.mulf %1111, %1112 : vector<8x64xf32>
    %1114 = arith.addf %1092, %1113 : vector<8x64xf32>
    %1115 = vector.extract_strided_slice %1108 {offsets = [0, 1], sizes = [8, 1], strides = [1, 1]} : vector<8x4xf32> to vector<8x1xf32>
    %1116 = vector.extract_strided_slice %1106 {offsets = [1, 0], sizes = [1, 64], strides = [1, 1]} : vector<4x64xf32> to vector<1x64xf32>
    %1117 = vector.broadcast %1115 : vector<8x1xf32> to vector<8x64xf32>
    %1118 = vector.broadcast %1116 : vector<1x64xf32> to vector<8x64xf32>
    %1119 = arith.mulf %1117, %1118 : vector<8x64xf32>
    %1120 = arith.addf %1114, %1119 : vector<8x64xf32>
    %1121 = vector.extract_strided_slice %1108 {offsets = [0, 2], sizes = [8, 1], strides = [1, 1]} : vector<8x4xf32> to vector<8x1xf32>
    %1122 = vector.extract_strided_slice %1106 {offsets = [2, 0], sizes = [1, 64], strides = [1, 1]} : vector<4x64xf32> to vector<1x64xf32>
    %1123 = vector.broadcast %1121 : vector<8x1xf32> to vector<8x64xf32>
    %1124 = vector.broadcast %1122 : vector<1x64xf32> to vector<8x64xf32>
    %1125 = arith.mulf %1123, %1124 : vector<8x64xf32>
    %1126 = arith.addf %1120, %1125 : vector<8x64xf32>
    %1127 = vector.extract_strided_slice %1108 {offsets = [0, 3], sizes = [8, 1], strides = [1, 1]} : vector<8x4xf32> to vector<8x1xf32>
    %1128 = vector.extract_strided_slice %1106 {offsets = [3, 0], sizes = [1, 64], strides = [1, 1]} : vector<4x64xf32> to vector<1x64xf32>
    %1129 = vector.broadcast %1127 : vector<8x1xf32> to vector<8x64xf32>
    %1130 = vector.broadcast %1128 : vector<1x64xf32> to vector<8x64xf32>
    %1131 = arith.mulf %1129, %1130 : vector<8x64xf32>
    %1132 = arith.addf %1126, %1131 : vector<8x64xf32>
    %c0_227 = arith.constant 0 : index
    %c16_228 = arith.constant 16 : index
    %1133 = vector.load %arg15[%c0_227, %c16_228] : memref<4x82xf32, #tpu.memory_space<vmem>>, vector<4x64xf32>
    %c-1_i32_229 = arith.constant -1 : i32
    %1134 = vector.broadcast %c-1_i32_229 : i32 to vector<1x64xi32>
    %1135 = arith.addi %18, %1134 : vector<1x64xi32>
    %c0_i32_230 = arith.constant 0 : i32
    %1136 = vector.broadcast %c0_i32_230 : i32 to vector<1x64xi32>
    %1137 = arith.cmpi sge, %1135, %1136 : vector<1x64xi32>
    %c-1_i32_231 = arith.constant -1 : i32
    %1138 = vector.broadcast %c-1_i32_231 : i32 to vector<1x64xi32>
    %1139 = arith.addi %18, %1138 : vector<1x64xi32>
    %c8_i32_232 = arith.constant 8 : i32
    %1140 = vector.broadcast %c8_i32_232 : i32 to vector<1x64xi32>
    %1141 = arith.cmpi slt, %1139, %1140 : vector<1x64xi32>
    %1142 = arith.andi %1137, %1141 : vector<1x64xi1>
    %cst_233 = arith.constant 0.000000e+00 : f32
    %1143 = vector.shape_cast %1142 : vector<1x64xi1> to vector<1x64xi1>
    %1144 = vector.broadcast %1143 : vector<1x64xi1> to vector<4x64xi1>
    %1145 = vector.broadcast %cst_233 : f32 to vector<4x64xf32>
    %1146 = arith.select %1144, %1133, %1145 : vector<4x64xi1>, vector<4x64xf32>
    %c6_234 = arith.constant 6 : index
    %c0_235 = arith.constant 0 : index
    %c0_236 = arith.constant 0 : index
    %1147 = vector.load %arg12[%c6_234, %c0_235, %c0_236] : memref<9x8x4xf32, #tpu.memory_space<vmem>>, vector<1x8x4xf32>
    %1148 = vector.shape_cast %1147 : vector<1x8x4xf32> to vector<8x4xf32>
    %1149 = vector.extract_strided_slice %1148 {offsets = [0, 0], sizes = [8, 1], strides = [1, 1]} : vector<8x4xf32> to vector<8x1xf32>
    %1150 = vector.extract_strided_slice %1146 {offsets = [0, 0], sizes = [1, 64], strides = [1, 1]} : vector<4x64xf32> to vector<1x64xf32>
    %1151 = vector.broadcast %1149 : vector<8x1xf32> to vector<8x64xf32>
    %1152 = vector.broadcast %1150 : vector<1x64xf32> to vector<8x64xf32>
    %1153 = arith.mulf %1151, %1152 : vector<8x64xf32>
    %1154 = arith.addf %1132, %1153 : vector<8x64xf32>
    %1155 = vector.extract_strided_slice %1148 {offsets = [0, 1], sizes = [8, 1], strides = [1, 1]} : vector<8x4xf32> to vector<8x1xf32>
    %1156 = vector.extract_strided_slice %1146 {offsets = [1, 0], sizes = [1, 64], strides = [1, 1]} : vector<4x64xf32> to vector<1x64xf32>
    %1157 = vector.broadcast %1155 : vector<8x1xf32> to vector<8x64xf32>
    %1158 = vector.broadcast %1156 : vector<1x64xf32> to vector<8x64xf32>
    %1159 = arith.mulf %1157, %1158 : vector<8x64xf32>
    %1160 = arith.addf %1154, %1159 : vector<8x64xf32>
    %1161 = vector.extract_strided_slice %1148 {offsets = [0, 2], sizes = [8, 1], strides = [1, 1]} : vector<8x4xf32> to vector<8x1xf32>
    %1162 = vector.extract_strided_slice %1146 {offsets = [2, 0], sizes = [1, 64], strides = [1, 1]} : vector<4x64xf32> to vector<1x64xf32>
    %1163 = vector.broadcast %1161 : vector<8x1xf32> to vector<8x64xf32>
    %1164 = vector.broadcast %1162 : vector<1x64xf32> to vector<8x64xf32>
    %1165 = arith.mulf %1163, %1164 : vector<8x64xf32>
    %1166 = arith.addf %1160, %1165 : vector<8x64xf32>
    %1167 = vector.extract_strided_slice %1148 {offsets = [0, 3], sizes = [8, 1], strides = [1, 1]} : vector<8x4xf32> to vector<8x1xf32>
    %1168 = vector.extract_strided_slice %1146 {offsets = [3, 0], sizes = [1, 64], strides = [1, 1]} : vector<4x64xf32> to vector<1x64xf32>
    %1169 = vector.broadcast %1167 : vector<8x1xf32> to vector<8x64xf32>
    %1170 = vector.broadcast %1168 : vector<1x64xf32> to vector<8x64xf32>
    %1171 = arith.mulf %1169, %1170 : vector<8x64xf32>
    %1172 = arith.addf %1166, %1171 : vector<8x64xf32>
    %c0_237 = arith.constant 0 : index
    %c17_238 = arith.constant 17 : index
    %1173 = vector.load %arg15[%c0_237, %c17_238] : memref<4x82xf32, #tpu.memory_space<vmem>>, vector<4x64xf32>
    %c7_239 = arith.constant 7 : index
    %c0_240 = arith.constant 0 : index
    %c0_241 = arith.constant 0 : index
    %1174 = vector.load %arg12[%c7_239, %c0_240, %c0_241] : memref<9x8x4xf32, #tpu.memory_space<vmem>>, vector<1x8x4xf32>
    %1175 = vector.shape_cast %1174 : vector<1x8x4xf32> to vector<8x4xf32>
    %1176 = vector.extract_strided_slice %1175 {offsets = [0, 0], sizes = [8, 1], strides = [1, 1]} : vector<8x4xf32> to vector<8x1xf32>
    %1177 = vector.extract_strided_slice %1173 {offsets = [0, 0], sizes = [1, 64], strides = [1, 1]} : vector<4x64xf32> to vector<1x64xf32>
    %1178 = vector.broadcast %1176 : vector<8x1xf32> to vector<8x64xf32>
    %1179 = vector.broadcast %1177 : vector<1x64xf32> to vector<8x64xf32>
    %1180 = arith.mulf %1178, %1179 : vector<8x64xf32>
    %1181 = arith.addf %1172, %1180 : vector<8x64xf32>
    %1182 = vector.extract_strided_slice %1175 {offsets = [0, 1], sizes = [8, 1], strides = [1, 1]} : vector<8x4xf32> to vector<8x1xf32>
    %1183 = vector.extract_strided_slice %1173 {offsets = [1, 0], sizes = [1, 64], strides = [1, 1]} : vector<4x64xf32> to vector<1x64xf32>
    %1184 = vector.broadcast %1182 : vector<8x1xf32> to vector<8x64xf32>
    %1185 = vector.broadcast %1183 : vector<1x64xf32> to vector<8x64xf32>
    %1186 = arith.mulf %1184, %1185 : vector<8x64xf32>
    %1187 = arith.addf %1181, %1186 : vector<8x64xf32>
    %1188 = vector.extract_strided_slice %1175 {offsets = [0, 2], sizes = [8, 1], strides = [1, 1]} : vector<8x4xf32> to vector<8x1xf32>
    %1189 = vector.extract_strided_slice %1173 {offsets = [2, 0], sizes = [1, 64], strides = [1, 1]} : vector<4x64xf32> to vector<1x64xf32>
    %1190 = vector.broadcast %1188 : vector<8x1xf32> to vector<8x64xf32>
    %1191 = vector.broadcast %1189 : vector<1x64xf32> to vector<8x64xf32>
    %1192 = arith.mulf %1190, %1191 : vector<8x64xf32>
    %1193 = arith.addf %1187, %1192 : vector<8x64xf32>
    %1194 = vector.extract_strided_slice %1175 {offsets = [0, 3], sizes = [8, 1], strides = [1, 1]} : vector<8x4xf32> to vector<8x1xf32>
    %1195 = vector.extract_strided_slice %1173 {offsets = [3, 0], sizes = [1, 64], strides = [1, 1]} : vector<4x64xf32> to vector<1x64xf32>
    %1196 = vector.broadcast %1194 : vector<8x1xf32> to vector<8x64xf32>
    %1197 = vector.broadcast %1195 : vector<1x64xf32> to vector<8x64xf32>
    %1198 = arith.mulf %1196, %1197 : vector<8x64xf32>
    %1199 = arith.addf %1193, %1198 : vector<8x64xf32>
    %c0_242 = arith.constant 0 : index
    %c18_243 = arith.constant 18 : index
    %1200 = vector.load %arg15[%c0_242, %c18_243] : memref<4x82xf32, #tpu.memory_space<vmem>>, vector<4x64xf32>
    %c1_i32_244 = arith.constant 1 : i32
    %1201 = vector.broadcast %c1_i32_244 : i32 to vector<1x64xi32>
    %1202 = arith.addi %18, %1201 : vector<1x64xi32>
    %c0_i32_245 = arith.constant 0 : i32
    %1203 = vector.broadcast %c0_i32_245 : i32 to vector<1x64xi32>
    %1204 = arith.cmpi sge, %1202, %1203 : vector<1x64xi32>
    %c1_i32_246 = arith.constant 1 : i32
    %1205 = vector.broadcast %c1_i32_246 : i32 to vector<1x64xi32>
    %1206 = arith.addi %18, %1205 : vector<1x64xi32>
    %c8_i32_247 = arith.constant 8 : i32
    %1207 = vector.broadcast %c8_i32_247 : i32 to vector<1x64xi32>
    %1208 = arith.cmpi slt, %1206, %1207 : vector<1x64xi32>
    %1209 = arith.andi %1204, %1208 : vector<1x64xi1>
    %cst_248 = arith.constant 0.000000e+00 : f32
    %1210 = vector.shape_cast %1209 : vector<1x64xi1> to vector<1x64xi1>
    %1211 = vector.broadcast %1210 : vector<1x64xi1> to vector<4x64xi1>
    %1212 = vector.broadcast %cst_248 : f32 to vector<4x64xf32>
    %1213 = arith.select %1211, %1200, %1212 : vector<4x64xi1>, vector<4x64xf32>
    %c8_249 = arith.constant 8 : index
    %c0_250 = arith.constant 0 : index
    %c0_251 = arith.constant 0 : index
    %1214 = vector.load %arg12[%c8_249, %c0_250, %c0_251] : memref<9x8x4xf32, #tpu.memory_space<vmem>>, vector<1x8x4xf32>
    %1215 = vector.shape_cast %1214 : vector<1x8x4xf32> to vector<8x4xf32>
    %1216 = vector.extract_strided_slice %1215 {offsets = [0, 0], sizes = [8, 1], strides = [1, 1]} : vector<8x4xf32> to vector<8x1xf32>
    %1217 = vector.extract_strided_slice %1213 {offsets = [0, 0], sizes = [1, 64], strides = [1, 1]} : vector<4x64xf32> to vector<1x64xf32>
    %1218 = vector.broadcast %1216 : vector<8x1xf32> to vector<8x64xf32>
    %1219 = vector.broadcast %1217 : vector<1x64xf32> to vector<8x64xf32>
    %1220 = arith.mulf %1218, %1219 : vector<8x64xf32>
    %1221 = arith.addf %1199, %1220 : vector<8x64xf32>
    %1222 = vector.extract_strided_slice %1215 {offsets = [0, 1], sizes = [8, 1], strides = [1, 1]} : vector<8x4xf32> to vector<8x1xf32>
    %1223 = vector.extract_strided_slice %1213 {offsets = [1, 0], sizes = [1, 64], strides = [1, 1]} : vector<4x64xf32> to vector<1x64xf32>
    %1224 = vector.broadcast %1222 : vector<8x1xf32> to vector<8x64xf32>
    %1225 = vector.broadcast %1223 : vector<1x64xf32> to vector<8x64xf32>
    %1226 = arith.mulf %1224, %1225 : vector<8x64xf32>
    %1227 = arith.addf %1221, %1226 : vector<8x64xf32>
    %1228 = vector.extract_strided_slice %1215 {offsets = [0, 2], sizes = [8, 1], strides = [1, 1]} : vector<8x4xf32> to vector<8x1xf32>
    %1229 = vector.extract_strided_slice %1213 {offsets = [2, 0], sizes = [1, 64], strides = [1, 1]} : vector<4x64xf32> to vector<1x64xf32>
    %1230 = vector.broadcast %1228 : vector<8x1xf32> to vector<8x64xf32>
    %1231 = vector.broadcast %1229 : vector<1x64xf32> to vector<8x64xf32>
    %1232 = arith.mulf %1230, %1231 : vector<8x64xf32>
    %1233 = arith.addf %1227, %1232 : vector<8x64xf32>
    %1234 = vector.extract_strided_slice %1215 {offsets = [0, 3], sizes = [8, 1], strides = [1, 1]} : vector<8x4xf32> to vector<8x1xf32>
    %1235 = vector.extract_strided_slice %1213 {offsets = [3, 0], sizes = [1, 64], strides = [1, 1]} : vector<4x64xf32> to vector<1x64xf32>
    %1236 = vector.broadcast %1234 : vector<8x1xf32> to vector<8x64xf32>
    %1237 = vector.broadcast %1235 : vector<1x64xf32> to vector<8x64xf32>
    %1238 = arith.mulf %1236, %1237 : vector<8x64xf32>
    %1239 = arith.addf %1233, %1238 : vector<8x64xf32>
    %c0_252 = arith.constant 0 : index
    %c0_253 = arith.constant 0 : index
    %1240 = vector.load %arg13[%c0_252, %c0_253] : memref<8x1xf32, #tpu.memory_space<vmem>>, vector<8x1xf32>
    %1241 = vector.broadcast %1240 : vector<8x1xf32> to vector<8x64xf32>
    %1242 = arith.addf %1239, %1241 : vector<8x64xf32>
    %1243 = arith.addf %906, %1242 : vector<8x64xf32>
    %c0_254 = arith.constant 0 : index
    %c0_255 = arith.constant 0 : index
    %c0_256 = arith.constant 0 : index
    %1244 = vector.load %arg14[%c0_254, %c0_255, %c0_256] : memref<1x8x64xf32, #tpu.memory_space<vmem>>, vector<1x8x64xf32>
    %1245 = vector.shape_cast %1244 : vector<1x8x64xf32> to vector<8x64xf32>
    %1246 = vector.shape_cast %1243 : vector<8x64xf32> to vector<1x8x64xf32>
    tpu.vector_store %arg14[%c0_254, %c0_255, %c0_256], %1246 {strides = array<i32>} : memref<1x8x64xf32, #tpu.memory_space<vmem>>, vector<1x8x64xf32>,
    return
  }
  func.func @transform_0(%arg0: i32) -> (i32, i32, i32) {
    %c0_i32 = arith.constant 0 : i32
    %c0_i32_0 = arith.constant 0 : i32
    %c0_i32_1 = arith.constant 0 : i32
    return %arg0, %c0_i32, %c0_i32_0 : i32, i32, i32
  }
  func.func @transform_1(%arg0: i32) -> (i32, i32) {
    %c0_i32 = arith.constant 0 : i32
    %c0_i32_0 = arith.constant 0 : i32
    %c0_i32_1 = arith.constant 0 : i32
    return %c0_i32, %c0_i32_0 : i32, i32
  }
  func.func @transform_2(%arg0: i32) -> (i32, i32) {
    %c0_i32 = arith.constant 0 : i32
    %c0_i32_0 = arith.constant 0 : i32
    %c0_i32_1 = arith.constant 0 : i32
    return %c0_i32, %c0_i32_0 : i32, i32
  }
  func.func @transform_3(%arg0: i32) -> (i32, i32) {
    %c0_i32 = arith.constant 0 : i32
    %c0_i32_0 = arith.constant 0 : i32
    %c0_i32_1 = arith.constant 0 : i32
    return %c0_i32, %c0_i32_0 : i32, i32
  }
  func.func @transform_4(%arg0: i32) -> (i32, i32) {
    %c0_i32 = arith.constant 0 : i32
    %c0_i32_0 = arith.constant 0 : i32
    %c0_i32_1 = arith.constant 0 : i32
    return %c0_i32, %c0_i32_0 : i32, i32
  }
  func.func @transform_5(%arg0: i32) -> (i32, i32) {
    %c0_i32 = arith.constant 0 : i32
    %c0_i32_0 = arith.constant 0 : i32
    %c0_i32_1 = arith.constant 0 : i32
    return %c0_i32, %c0_i32_0 : i32, i32
  }
  func.func @transform_6(%arg0: i32) -> (i32, i32) {
    %c0_i32 = arith.constant 0 : i32
    %c0_i32_0 = arith.constant 0 : i32
    %c0_i32_1 = arith.constant 0 : i32
    return %c0_i32, %c0_i32_0 : i32, i32
  }
  func.func @transform_7(%arg0: i32) -> (i32, i32, i32) {
    %c0_i32 = arith.constant 0 : i32
    %c0_i32_0 = arith.constant 0 : i32
    %c0_i32_1 = arith.constant 0 : i32
    %c0_i32_2 = arith.constant 0 : i32
    return %c0_i32, %c0_i32_0, %c0_i32_1 : i32, i32, i32
  }
  func.func @transform_8(%arg0: i32) -> (i32, i32) {
    %c0_i32 = arith.constant 0 : i32
    %c0_i32_0 = arith.constant 0 : i32
    %c0_i32_1 = arith.constant 0 : i32
    return %c0_i32, %c0_i32_0 : i32, i32
  }
  func.func @transform_9(%arg0: i32) -> (i32, i32, i32) {
    %c0_i32 = arith.constant 0 : i32
    %c0_i32_0 = arith.constant 0 : i32
    %c0_i32_1 = arith.constant 0 : i32
    %c0_i32_2 = arith.constant 0 : i32
    return %c0_i32, %c0_i32_0, %c0_i32_1 : i32, i32, i32
  }
  func.func @transform_10(%arg0: i32) -> (i32, i32) {
    %c0_i32 = arith.constant 0 : i32
    %c0_i32_0 = arith.constant 0 : i32
    %c0_i32_1 = arith.constant 0 : i32
    return %c0_i32, %c0_i32_0 : i32, i32
  }
  func.func @transform_11(%arg0: i32) -> (i32, i32, i32) {
    %c0_i32 = arith.constant 0 : i32
    %c0_i32_0 = arith.constant 0 : i32
    %c0_i32_1 = arith.constant 0 : i32
    %c0_i32_2 = arith.constant 0 : i32
    return %c0_i32, %c0_i32_0, %c0_i32_1 : i32, i32, i32
  }
  func.func @transform_12(%arg0: i32) -> (i32, i32) {
    %c0_i32 = arith.constant 0 : i32
    %c0_i32_0 = arith.constant 0 : i32
    %c0_i32_1 = arith.constant 0 : i32
    return %c0_i32, %c0_i32_0 : i32, i32
  }
  func.func @transform_13(%arg0: i32) -> (i32, i32, i32) {
    %c0_i32 = arith.constant 0 : i32
    %c0_i32_0 = arith.constant 0 : i32
    %c0_i32_1 = arith.constant 0 : i32
    return %arg0, %c0_i32, %c0_i32_0 : i32, i32, i32
  }
}

</mosaic_0001>

<llo_original>
// kernel: tpu_custom_call.1
$region0: #{tpu_custom_call.1}
  #allocation0 [shape = 'u32[]', space=smem, size = 0x4, offset = 0x4, fixed_abs, tag = 'smem constant byte address 0x4 - core index']
  #allocation1 [shape = 'u32[72,128]{1,0:T(1,128)}', space=vmem, size = 0x9000, scoped, tag = 'internal scratch']
  #allocation2 [shape = 'f32[4,82]{1,0:T(4,128)}', space=vmem, size = 0x800, scoped, tag = 'scratch operand']
  #allocation3 [shape = 'f32[8,82]{1,0:T(8,128)}', space=vmem, size = 0x1000, scoped, tag = 'scratch operand']
  %s0 = inlined_call_operand.vmem [shape: f32[2,4,64], index: 0, kind: input, shape index: {}]
  %s1 = inlined_call_operand.vmem [shape: f32[4,1], index: 1, kind: input, shape index: {}]
  %s2 = inlined_call_operand.vmem [shape: f32[4,1], index: 2, kind: input, shape index: {}]
  %s3 = inlined_call_operand.vmem [shape: f32[8,1], index: 3, kind: input, shape index: {}]
  %s4 = inlined_call_operand.vmem [shape: f32[8,1], index: 4, kind: input, shape index: {}]
  %s5 = inlined_call_operand.vmem [shape: f32[4,1], index: 5, kind: input, shape index: {}]
  %s6 = inlined_call_operand.vmem [shape: f32[4,1], index: 6, kind: input, shape index: {}]
  %s7 = inlined_call_operand.vmem [shape: f32[9,8,4], index: 7, kind: input, shape index: {}]
  %s8 = inlined_call_operand.vmem [shape: f32[8,1], index: 8, kind: input, shape index: {}]
  %s9 = inlined_call_operand.vmem [shape: f32[9,8,8], index: 9, kind: input, shape index: {}]
  %s10 = inlined_call_operand.vmem [shape: f32[8,1], index: 10, kind: input, shape index: {}]
  %s11 = inlined_call_operand.vmem [shape: f32[9,8,4], index: 11, kind: input, shape index: {}]
  %s12 = inlined_call_operand.vmem [shape: f32[8,1], index: 12, kind: input, shape index: {}]
  %s13 = inlined_call_operand.hbm [shape: f32[2,8,64], index: 13, kind: output, shape index: {}]
  %s14 = sld [smem:[#allocation0]]
  $region85: #{tpu_custom_call.1} parent=0
    _
  %s16 = ssub.s32 1, %s14
  %s17 = scalar_select 0, %s16, %s14
  $region1: #{tpu_custom_call.1} parent=0
    #allocation4 [shape = 'u8[8192]{0}', space=vmem, size = 0x2000, scoped, tag = 'output window, operand 0']
    #allocation5 [shape = 's32[2]{0}', space=sflag, size = 0x8, scoped, tag = 'scoped memory for tpu_custom_call.1']
    %18 = vsyncpa [#allocation5], 0
    %s19 = scalar_lea.sflag [#allocation5], 1
    %20 = vsyncpa %s19, 0
    loop: start=0, step=1, limit=4
    $region2: #{tpu_custom_call.1} parent=1 // loop_pre_header
      _
    $region3: #{tpu_custom_call.1} parent=1 // loop_header
      %s22 = sphi 0, %s26
      %p23 = scmp.ge.s32.totalorder %s22, 4
      %s32 = sphi 0, %s34
      %s35 = sphi 0, %s32
      %s36 = sphi 0, %s35
      %s52 = sphi 0, %s36
      %s56 = sphi 0, %s56
      %s58 = sphi 0, %s56
      %s59 = sphi 0, %s58
      %s73 = sphi 0, %s59
      %s77 = sphi 0, %s77
      %s79 = sphi 0, %s77
      %s80 = sphi 0, %s79
      %s94 = sphi 0, %s80
      %s98 = sphi 0, %s98
      %s100 = sphi 0, %s98
      %s101 = sphi 0, %s100
      %s115 = sphi 0, %s101
      %s119 = sphi 0, %s119
      %s121 = sphi 0, %s119
      %s122 = sphi 0, %s121
      %s136 = sphi 0, %s122
      %s140 = sphi 0, %s140
      %s142 = sphi 0, %s140
      %s143 = sphi 0, %s142
      %s157 = sphi 0, %s143
      %s161 = sphi 0, %s161
      %s163 = sphi 0, %s161
      %s164 = sphi 0, %s163
      %s178 = sphi 0, %s164
      %s182 = sphi 0, %s182
      %s184 = sphi 0, %s182
      %s185 = sphi 0, %s184
      %s199 = sphi 0, %s185
      %s203 = sphi 0, %s203
      %s205 = sphi 0, %s203
      %s206 = sphi 0, %s205
      %s220 = sphi 0, %s206
      %s224 = sphi 0, %s224
      %s226 = sphi 0, %s224
      %s227 = sphi 0, %s226
      %s241 = sphi 0, %s227
      %s245 = sphi 0, %s245
      %s247 = sphi 0, %s245
      %s248 = sphi 0, %s247
      %s262 = sphi 0, %s248
      %s266 = sphi 0, %s266
      %s268 = sphi 0, %s266
      %s269 = sphi 0, %s268
      %s283 = sphi 0, %s269
      %s287 = sphi 0, %s287
      %s289 = sphi 0, %s287
      %s290 = sphi 0, %s289
      %s304 = sphi 0, %s290
      %s310 = sphi 0, %s312
      %s313 = sphi 0, %s310
      %s314 = sphi 0, %s313
      %s330 = sphi 0, %s314
    $region4: #{tpu_custom_call.1} parent=1 // loop_header_branch
      %25 = sbr.rel (%p23) target = $region8
    $region5: #{tpu_custom_call.1} parent=1 // loop_body
      %s27 = ssub.s32 %s22, 1
      %s28 = ssub.s32 %s22, 2
      %s29 = sadd.s32 %s22, 1
      %s30 = ssub.s32 %s22, %s29
      %p31 = scmp.eq.s32.totalorder %s30, 0
      %s33 = sadd.s32 %s32, 1
      %s34 = scalar_select %p31, %s32, %s33
      %p37 = pneg %p31
      %p38 = scmp.eq.s32.totalorder %s22, 1
      %p39 = por %p37, %p38
      %p40 = scmp.ne.s32.totalorder %s32, %s35
      %p41 = scmp.eq.s32.totalorder %s22, 0
      %p42 = por %p40, %p41
      %p43 = scmp.ne.s32.totalorder %s32, %s35
      %p44 = scmp.eq.s32.totalorder %s27, 1
      %p45 = por %p43, %p44
      %p46 = scmp.ne.s32.totalorder %s35, %s36
      %p47 = scmp.eq.s32.totalorder %s27, 0
      %p48 = por %p46, %p47
      %p49 = scmp.ne.s32.totalorder %s35, %s36
      %p50 = scmp.eq.s32.totalorder %s28, 1
      %p51 = por %p49, %p50
      %p53 = scmp.ne.s32.totalorder %s36, %s52
      %p54 = scmp.eq.s32.totalorder %s28, 0
      %p55 = por %p53, %p54
      %s57 = sadd.s32 %s56, 1
      %p60 = scmp.eq.s32.totalorder %s22, 1
      %p61 = scmp.ne.s32.totalorder %s56, %s58
      %p62 = scmp.eq.s32.totalorder %s22, 0
      %p63 = por %p61, %p62
      %p64 = scmp.ne.s32.totalorder %s56, %s58
      %p65 = scmp.eq.s32.totalorder %s27, 1
      %p66 = por %p64, %p65
      %p67 = scmp.ne.s32.totalorder %s58, %s59
      %p68 = scmp.eq.s32.totalorder %s27, 0
      %p69 = por %p67, %p68
      %p70 = scmp.ne.s32.totalorder %s58, %s59
      %p71 = scmp.eq.s32.totalorder %s28, 1
      %p72 = por %p70, %p71
      %p74 = scmp.ne.s32.totalorder %s59, %s73
      %p75 = scmp.eq.s32.totalorder %s28, 0
      %p76 = por %p74, %p75
      %s78 = sadd.s32 %s77, 1
      %p81 = scmp.eq.s32.totalorder %s22, 1
      %p82 = scmp.ne.s32.totalorder %s77, %s79
      %p83 = scmp.eq.s32.totalorder %s22, 0
      %p84 = por %p82, %p83
      %p85 = scmp.ne.s32.totalorder %s77, %s79
      %p86 = scmp.eq.s32.totalorder %s27, 1
      %p87 = por %p85, %p86
      %p88 = scmp.ne.s32.totalorder %s79, %s80
      %p89 = scmp.eq.s32.totalorder %s27, 0
      %p90 = por %p88, %p89
      %p91 = scmp.ne.s32.totalorder %s79, %s80
      %p92 = scmp.eq.s32.totalorder %s28, 1
      %p93 = por %p91, %p92
      %p95 = scmp.ne.s32.totalorder %s80, %s94
      %p96 = scmp.eq.s32.totalorder %s28, 0
      %p97 = por %p95, %p96
      %s99 = sadd.s32 %s98, 1
      %p102 = scmp.eq.s32.totalorder %s22, 1
      %p103 = scmp.ne.s32.totalorder %s98, %s100
      %p104 = scmp.eq.s32.totalorder %s22, 0
      %p105 = por %p103, %p104
      %p106 = scmp.ne.s32.totalorder %s98, %s100
      %p107 = scmp.eq.s32.totalorder %s27, 1
      %p108 = por %p106, %p107
      %p109 = scmp.ne.s32.totalorder %s100, %s101
      %p110 = scmp.eq.s32.totalorder %s27, 0
      %p111 = por %p109, %p110
      %p112 = scmp.ne.s32.totalorder %s100, %s101
      %p113 = scmp.eq.s32.totalorder %s28, 1
      %p114 = por %p112, %p113
      %p116 = scmp.ne.s32.totalorder %s101, %s115
      %p117 = scmp.eq.s32.totalorder %s28, 0
      %p118 = por %p116, %p117
      %s120 = sadd.s32 %s119, 1
      %p123 = scmp.eq.s32.totalorder %s22, 1
      %p124 = scmp.ne.s32.totalorder %s119, %s121
      %p125 = scmp.eq.s32.totalorder %s22, 0
      %p126 = por %p124, %p125
      %p127 = scmp.ne.s32.totalorder %s119, %s121
      %p128 = scmp.eq.s32.totalorder %s27, 1
      %p129 = por %p127, %p128
      %p130 = scmp.ne.s32.totalorder %s121, %s122
      %p131 = scmp.eq.s32.totalorder %s27, 0
      %p132 = por %p130, %p131
      %p133 = scmp.ne.s32.totalorder %s121, %s122
      %p134 = scmp.eq.s32.totalorder %s28, 1
      %p135 = por %p133, %p134
      %p137 = scmp.ne.s32.totalorder %s122, %s136
      %p138 = scmp.eq.s32.totalorder %s28, 0
      %p139 = por %p137, %p138
      %s141 = sadd.s32 %s140, 1
      %p144 = scmp.eq.s32.totalorder %s22, 1
      %p145 = scmp.ne.s32.totalorder %s140, %s142
      %p146 = scmp.eq.s32.totalorder %s22, 0
      %p147 = por %p145, %p146
      %p148 = scmp.ne.s32.totalorder %s140, %s142
      %p149 = scmp.eq.s32.totalorder %s27, 1
      %p150 = por %p148, %p149
      %p151 = scmp.ne.s32.totalorder %s142, %s143
      %p152 = scmp.eq.s32.totalorder %s27, 0
      %p153 = por %p151, %p152
      %p154 = scmp.ne.s32.totalorder %s142, %s143
      %p155 = scmp.eq.s32.totalorder %s28, 1
      %p156 = por %p154, %p155
      %p158 = scmp.ne.s32.totalorder %s143, %s157
      %p159 = scmp.eq.s32.totalorder %s28, 0
      %p160 = por %p158, %p159
      %s162 = sadd.s32 %s161, 1
      %p165 = scmp.eq.s32.totalorder %s22, 1
      %p166 = scmp.ne.s32.totalorder %s161, %s163
      %p167 = scmp.eq.s32.totalorder %s22, 0
      %p168 = por %p166, %p167
      %p169 = scmp.ne.s32.totalorder %s161, %s163
      %p170 = scmp.eq.s32.totalorder %s27, 1
      %p171 = por %p169, %p170
      %p172 = scmp.ne.s32.totalorder %s163, %s164
      %p173 = scmp.eq.s32.totalorder %s27, 0
      %p174 = por %p172, %p173
      %p175 = scmp.ne.s32.totalorder %s163, %s164
      %p176 = scmp.eq.s32.totalorder %s28, 1
      %p177 = por %p175, %p176
      %p179 = scmp.ne.s32.totalorder %s164, %s178
      %p180 = scmp.eq.s32.totalorder %s28, 0
      %p181 = por %p179, %p180
      %s183 = sadd.s32 %s182, 1
      %p186 = scmp.eq.s32.totalorder %s22, 1
      %p187 = scmp.ne.s32.totalorder %s182, %s184
      %p188 = scmp.eq.s32.totalorder %s22, 0
      %p189 = por %p187, %p188
      %p190 = scmp.ne.s32.totalorder %s182, %s184
      %p191 = scmp.eq.s32.totalorder %s27, 1
      %p192 = por %p190, %p191
      %p193 = scmp.ne.s32.totalorder %s184, %s185
      %p194 = scmp.eq.s32.totalorder %s27, 0
      %p195 = por %p193, %p194
      %p196 = scmp.ne.s32.totalorder %s184, %s185
      %p197 = scmp.eq.s32.totalorder %s28, 1
      %p198 = por %p196, %p197
      %p200 = scmp.ne.s32.totalorder %s185, %s199
      %p201 = scmp.eq.s32.totalorder %s28, 0
      %p202 = por %p200, %p201
      %s204 = sadd.s32 %s203, 1
      %p207 = scmp.eq.s32.totalorder %s22, 1
      %p208 = scmp.ne.s32.totalorder %s203, %s205
      %p209 = scmp.eq.s32.totalorder %s22, 0
      %p210 = por %p208, %p209
      %p211 = scmp.ne.s32.totalorder %s203, %s205
      %p212 = scmp.eq.s32.totalorder %s27, 1
      %p213 = por %p211, %p212
      %p214 = scmp.ne.s32.totalorder %s205, %s206
      %p215 = scmp.eq.s32.totalorder %s27, 0
      %p216 = por %p214, %p215
      %p217 = scmp.ne.s32.totalorder %s205, %s206
      %p218 = scmp.eq.s32.totalorder %s28, 1
      %p219 = por %p217, %p218
      %p221 = scmp.ne.s32.totalorder %s206, %s220
      %p222 = scmp.eq.s32.totalorder %s28, 0
      %p223 = por %p221, %p222
      %s225 = sadd.s32 %s224, 1
      %p228 = scmp.eq.s32.totalorder %s22, 1
      %p229 = scmp.ne.s32.totalorder %s224, %s226
      %p230 = scmp.eq.s32.totalorder %s22, 0
      %p231 = por %p229, %p230
      %p232 = scmp.ne.s32.totalorder %s224, %s226
      %p233 = scmp.eq.s32.totalorder %s27, 1
      %p234 = por %p232, %p233
      %p235 = scmp.ne.s32.totalorder %s226, %s227
      %p236 = scmp.eq.s32.totalorder %s27, 0
      %p237 = por %p235, %p236
      %p238 = scmp.ne.s32.totalorder %s226, %s227
      %p239 = scmp.eq.s32.totalorder %s28, 1
      %p240 = por %p238, %p239
      %p242 = scmp.ne.s32.totalorder %s227, %s241
      %p243 = scmp.eq.s32.totalorder %s28, 0
      %p244 = por %p242, %p243
      %s246 = sadd.s32 %s245, 1
      %p249 = scmp.eq.s32.totalorder %s22, 1
      %p250 = scmp.ne.s32.totalorder %s245, %s247
      %p251 = scmp.eq.s32.totalorder %s22, 0
      %p252 = por %p250, %p251
      %p253 = scmp.ne.s32.totalorder %s245, %s247
      %p254 = scmp.eq.s32.totalorder %s27, 1
      %p255 = por %p253, %p254
      %p256 = scmp.ne.s32.totalorder %s247, %s248
      %p257 = scmp.eq.s32.totalorder %s27, 0
      %p258 = por %p256, %p257
      %p259 = scmp.ne.s32.totalorder %s247, %s248
      %p260 = scmp.eq.s32.totalorder %s28, 1
      %p261 = por %p259, %p260
      %p263 = scmp.ne.s32.totalorder %s248, %s262
      %p264 = scmp.eq.s32.totalorder %s28, 0
      %p265 = por %p263, %p264
      %s267 = sadd.s32 %s266, 1
      %p270 = scmp.eq.s32.totalorder %s22, 1
      %p271 = scmp.ne.s32.totalorder %s266, %s268
      %p272 = scmp.eq.s32.totalorder %s22, 0
      %p273 = por %p271, %p272
      %p274 = scmp.ne.s32.totalorder %s266, %s268
      %p275 = scmp.eq.s32.totalorder %s27, 1
      %p276 = por %p274, %p275
      %p277 = scmp.ne.s32.totalorder %s268, %s269
      %p278 = scmp.eq.s32.totalorder %s27, 0
      %p279 = por %p277, %p278
      %p280 = scmp.ne.s32.totalorder %s268, %s269
      %p281 = scmp.eq.s32.totalorder %s28, 1
      %p282 = por %p280, %p281
      %p284 = scmp.ne.s32.totalorder %s269, %s283
      %p285 = scmp.eq.s32.totalorder %s28, 0
      %p286 = por %p284, %p285
      %s288 = sadd.s32 %s287, 1
      %p291 = scmp.eq.s32.totalorder %s22, 1
      %p292 = scmp.ne.s32.totalorder %s287, %s289
      %p293 = scmp.eq.s32.totalorder %s22, 0
      %p294 = por %p292, %p293
      %p295 = scmp.ne.s32.totalorder %s287, %s289
      %p296 = scmp.eq.s32.totalorder %s27, 1
      %p297 = por %p295, %p296
      %p298 = scmp.ne.s32.totalorder %s289, %s290
      %p299 = scmp.eq.s32.totalorder %s27, 0
      %p300 = por %p298, %p299
      %p301 = scmp.ne.s32.totalorder %s289, %s290
      %p302 = scmp.eq.s32.totalorder %s28, 1
      %p303 = por %p301, %p302
      %p305 = scmp.ne.s32.totalorder %s290, %s304
      %p306 = scmp.eq.s32.totalorder %s28, 0
      %p307 = por %p305, %p306
      %s308 = ssub.s32 %s22, %s29
      %p309 = scmp.eq.s32.totalorder %s308, 0
      %s311 = sadd.s32 %s310, 1
      %s312 = scalar_select %p309, %s310, %s311
      %p315 = pneg %p309
      %p316 = scmp.eq.s32.totalorder %s22, 1
      %p317 = por %p315, %p316
      %p318 = scmp.ne.s32.totalorder %s310, %s313
      %p319 = scmp.eq.s32.totalorder %s22, 0
      %p320 = por %p318, %p319
      %p321 = scmp.ne.s32.totalorder %s310, %s313
      %p322 = scmp.eq.s32.totalorder %s27, 1
      %p323 = por %p321, %p322
      %p324 = scmp.ne.s32.totalorder %s313, %s314
      %p325 = scmp.eq.s32.totalorder %s27, 0
      %p326 = por %p324, %p325
      %p327 = scmp.ne.s32.totalorder %s313, %s314
      %p328 = scmp.eq.s32.totalorder %s28, 1
      %p329 = por %p327, %p328
      %p331 = scmp.ne.s32.totalorder %s314, %s330
      %p332 = scmp.eq.s32.totalorder %s28, 0
      %p333 = por %p331, %p332
      %p334 = scmp.le.s32.totalorder 1, %s22
      %p335 = scmp.lt.s32.totalorder %s22, 3
      %p336 = pnand %p334, %p335
      %p337 = pneg %p336
      // Predicated region
      $region9: #{tpu_custom_call.1} parent=5 // pred_check
        _
      $region10: #{tpu_custom_call.1} parent=5 // pred_check_branch
        %339 = sbr.rel (%p336) target = $region12
      $region11: #{tpu_custom_call.1} parent=5 // pred_region
        %s340 = ssub.s32 %s22, 1
        // Predicated region
        $region13: #{tpu_custom_call.1} parent=11 // pred_check
          %p341 = pneg %p69
        $region14: #{tpu_custom_call.1} parent=11 // pred_check_branch
          %343 = sbr.rel (%p341) target = $region16
        $region15: #{tpu_custom_call.1} parent=11 // pred_region
          _
        $region16: #{tpu_custom_call.1} parent=11 // pred_fallthru
          _
        // Predicated region
        $region17: #{tpu_custom_call.1} parent=11 // pred_check
          %p344 = pneg %p90
        $region18: #{tpu_custom_call.1} parent=11 // pred_check_branch
          %346 = sbr.rel (%p344) target = $region20
        $region19: #{tpu_custom_call.1} parent=11 // pred_region
          _
        $region20: #{tpu_custom_call.1} parent=11 // pred_fallthru
          _
        // Predicated region
        $region21: #{tpu_custom_call.1} parent=11 // pred_check
          %p347 = pneg %p111
        $region22: #{tpu_custom_call.1} parent=11 // pred_check_branch
          %349 = sbr.rel (%p347) target = $region24
        $region23: #{tpu_custom_call.1} parent=11 // pred_region
          _
        $region24: #{tpu_custom_call.1} parent=11 // pred_fallthru
          _
        // Predicated region
        $region25: #{tpu_custom_call.1} parent=11 // pred_check
          %p350 = pneg %p132
        $region26: #{tpu_custom_call.1} parent=11 // pred_check_branch
          %352 = sbr.rel (%p350) target = $region28
        $region27: #{tpu_custom_call.1} parent=11 // pred_region
          _
        $region28: #{tpu_custom_call.1} parent=11 // pred_fallthru
          _
        // Predicated region
        $region29: #{tpu_custom_call.1} parent=11 // pred_check
          %p353 = pneg %p153
        $region30: #{tpu_custom_call.1} parent=11 // pred_check_branch
          %355 = sbr.rel (%p353) target = $region32
        $region31: #{tpu_custom_call.1} parent=11 // pred_region
          _
        $region32: #{tpu_custom_call.1} parent=11 // pred_fallthru
          _
        // Predicated region
        $region33: #{tpu_custom_call.1} parent=11 // pred_check
          %p356 = pneg %p174
        $region34: #{tpu_custom_call.1} parent=11 // pred_check_branch
          %358 = sbr.rel (%p356) target = $region36
        $region35: #{tpu_custom_call.1} parent=11 // pred_region
          _
        $region36: #{tpu_custom_call.1} parent=11 // pred_fallthru
          _
        // Predicated region
        $region37: #{tpu_custom_call.1} parent=11 // pred_check
          %p359 = pneg %p195
        $region38: #{tpu_custom_call.1} parent=11 // pred_check_branch
          %361 = sbr.rel (%p359) target = $region40
        $region39: #{tpu_custom_call.1} parent=11 // pred_region
          _
        $region40: #{tpu_custom_call.1} parent=11 // pred_fallthru
          _
        // Predicated region
        $region41: #{tpu_custom_call.1} parent=11 // pred_check
          %p362 = pneg %p216
        $region42: #{tpu_custom_call.1} parent=11 // pred_check_branch
          %364 = sbr.rel (%p362) target = $region44
        $region43: #{tpu_custom_call.1} parent=11 // pred_region
          _
        $region44: #{tpu_custom_call.1} parent=11 // pred_fallthru
          _
        // Predicated region
        $region45: #{tpu_custom_call.1} parent=11 // pred_check
          %p365 = pneg %p237
        $region46: #{tpu_custom_call.1} parent=11 // pred_check_branch
          %367 = sbr.rel (%p365) target = $region48
        $region47: #{tpu_custom_call.1} parent=11 // pred_region
          _
        $region48: #{tpu_custom_call.1} parent=11 // pred_fallthru
          _
        // Predicated region
        $region49: #{tpu_custom_call.1} parent=11 // pred_check
          %p368 = pneg %p258
        $region50: #{tpu_custom_call.1} parent=11 // pred_check_branch
          %370 = sbr.rel (%p368) target = $region52
        $region51: #{tpu_custom_call.1} parent=11 // pred_region
          _
        $region52: #{tpu_custom_call.1} parent=11 // pred_fallthru
          _
        // Predicated region
        $region53: #{tpu_custom_call.1} parent=11 // pred_check
          %p371 = pneg %p279
        $region54: #{tpu_custom_call.1} parent=11 // pred_check_branch
          %373 = sbr.rel (%p371) target = $region56
        $region55: #{tpu_custom_call.1} parent=11 // pred_region
          _
        $region56: #{tpu_custom_call.1} parent=11 // pred_fallthru
          _
        // Predicated region
        $region57: #{tpu_custom_call.1} parent=11 // pred_check
          %p374 = pneg %p300
        $region58: #{tpu_custom_call.1} parent=11 // pred_check_branch
          %376 = sbr.rel (%p374) target = $region60
        $region59: #{tpu_custom_call.1} parent=11 // pred_region
          _
        $region60: #{tpu_custom_call.1} parent=11 // pred_fallthru
          _
      $region12: #{tpu_custom_call.1} parent=5 // pred_fallthru
        _
      %p377 = scmp.lt.s32.totalorder %s22, 2
      // Predicated region
      $region61: #{tpu_custom_call.1} parent=5 // pred_check
        %p378 = pneg %p377
      $region62: #{tpu_custom_call.1} parent=5 // pred_check_branch
        %380 = sbr.rel (%p378) target = $region64
      $region63: #{tpu_custom_call.1} parent=5 // pred_region
        // Predicated region
        $region65: #{tpu_custom_call.1} parent=63 // pred_check
          %p381 = pneg %p42
        $region66: #{tpu_custom_call.1} parent=63 // pred_check_branch
          %383 = sbr.rel (%p381) target = $region68
        $region67: #{tpu_custom_call.1} parent=63 // pred_region
          %p384 = scmp.lt.s32.totalorder %s22, 1
          %s385 = scalar_select %p384, %s22, 1
          %s386 = smul.addr %s385, 4
          %s387 = scalar_lea.vmem %s0, %s386
        $region68: #{tpu_custom_call.1} parent=63 // pred_fallthru
          _
      $region64: #{tpu_custom_call.1} parent=5 // pred_fallthru
        _
      %p388 = scmp.le.s32.totalorder 1, %s22
      %p389 = scmp.lt.s32.totalorder %s22, 3
      %p390 = pnand %p388, %p389
      %p391 = pneg %p390
      // Predicated region
      $region69: #{tpu_custom_call.1} parent=5 // pred_check
        _
      $region70: #{tpu_custom_call.1} parent=5 // pred_check_branch
        %393 = sbr.rel (%p390) target = $region72
      $region71: #{tpu_custom_call.1} parent=5 // pred_region
        %s394 = ssub.s32 %s22, 1
        %p395 = scmp.lt.s32.totalorder %s27, 1
        %s396 = scalar_select %p395, %s27, 1
        %s397 = smul.addr %s396, 4
        %s398 = scalar_lea.vmem %s0, %s397
        %p399 = pneg %p48
        %p400 = pneg %p45
        %p401 = pneg %p69
        %p402 = pneg %p66
        %p403 = pneg %p90
        %p404 = pneg %p87
        %p405 = pneg %p111
        %p406 = pneg %p108
        %p407 = pneg %p132
        %p408 = pneg %p129
        %p409 = pneg %p153
        %p410 = pneg %p150
        %p411 = pneg %p174
        %p412 = pneg %p171
        %p413 = pneg %p195
        %p414 = pneg %p192
        %p415 = pneg %p216
        %p416 = pneg %p213
        %p417 = pneg %p237
        %p418 = pneg %p234
        %p419 = pneg %p258
        %p420 = pneg %p255
        %p421 = pneg %p279
        %p422 = pneg %p276
        %p423 = pneg %p300
        %p424 = pneg %p297
        %p425 = pneg %p326
        %p426 = pneg %p323
        %s427 = sand.u32 %s313, 1
        %s428 = scalar_lea.sflag [#allocation5], %s427
        %s429 = sand.u32 %s313, 1
        %s430 = smul.addr %s429, 8
        %s431 = scalar_lea.vmem [#allocation4], %s430
        %p432 = scmp.lt.s32.totalorder %s27, 1
        %s433 = scalar_select %p432, %s27, 1
        %s434 = smul.addr %s433, 4
        %s435 = scalar_lea.vmem %s0, %s434
        %v436 = vld [vmem:[%s435] sm:$0xf]
        %v437 = vlaneseq
        %v438 = vand.u32 %v437, 127
        %vm439 = vcmp.lt.s32.totalorder %v438, 0
        %v440 = vsub.s32 0, %v438
        %v441 = vsel %vm439, %v440, %v438
        %v442 = vshrl.u32 %v441, 3
        %v443 = vand.u32 %v441, 7
        %v444 = vsub.s32 0, %v443
        %v445 = vsel %vm439, %v444, %v443
        %vm446 = vcmp.ne.s32.totalorder %v445, 0
        %vm447 = vcmp.lt.s32.totalorder %v445, 0
        %vm448 = vmand %vm447, %vm446
        %v449 = vadd.s32 %v445, 8
        %v450 = vsel %vm448, %v449, %v445
        %v451 = vld [vmem:[%s1] sm:$0xf]
        %453 = vset.pattern.permute.xlu0 0
        %454 = vperm.xlu0 %453, %v451
        %v455 = vpop.permute.xlu0 %454
        %v457 = vmul.f32 %v436, %v455
        %v458 = vld [vmem:[%s2] sm:$0xf]
        %460 = vset.pattern.permute.xlu0 0
        %461 = vperm.xlu0 %460, %v458
        %v462 = vpop.permute.xlu0 %461
        %v464 = vadd.f32 %v457, %v462
        %v465 = vmax.f32 %v464, 0.0
        %vm466 = vcmask 666624
        %467 = vst.msk [vmem:[#allocation2] sm:$0xf] %vm466, 0.0
        %469 = vrot.lane.b32.xlu0 %v465, 9
        %v470 = vpop.permute.xlu0 %469
        %vm472 = vcmask 592968
        %473 = vst.msk [vmem:[#allocation2] sm:$0xf] %vm472, %v470
        %v474 = vld [vmem:[#allocation2] sm:$0xf]
        %v475 = vadd.s32 %v450, 4294967295
        %vm476 = vcmp.ge.s32.totalorder %v475, 0
        %vm477 = vcmp.lt.s32.totalorder %v475, 8
        %vm478 = vmand %vm476, %vm477
        %v479 = vsel %vm478, 1, 0
        %vm480 = vcmp.eq.s32.totalorder %v479, 1
        %v481 = vsel %vm480, %v474, 0.0
        %v482 = vld [vmem:[%s7] sm:$0xff]
        %484 = vset.pattern.permute.xlu0 0
        %485 = vperm.xlu0 %484, %v482
        %v486 = vpop.permute.xlu0 %485
        %v488 = vperm.slane %v481, 0
        %v489 = vmul.f32 %v486, %v488
        %v490 = vadd.f32 %v489, 0.0
        %491 = vset.pattern.permute.xlu0 1
        %492 = vperm.xlu0 %491, %v482
        %v493 = vpop.permute.xlu0 %492
        %v495 = vperm.slane %v481, 1
        %v496 = vmul.f32 %v493, %v495
        %v497 = vadd.f32 %v490, %v496
        %498 = vset.pattern.permute.xlu0 2
        %499 = vperm.xlu0 %498, %v482
        %v500 = vpop.permute.xlu0 %499
        %v502 = vperm.slane %v481, 2
        %v503 = vmul.f32 %v500, %v502
        %v504 = vadd.f32 %v497, %v503
        %505 = vset.pattern.permute.xlu0 3
        %506 = vperm.xlu0 %505, %v482
        %v507 = vpop.permute.xlu0 %506
        %v509 = vperm.slane %v481, 3
        %v510 = vmul.f32 %v507, %v509
        %v511 = vadd.f32 %v504, %v510
        %s512 = scalar_lea.vmem %s7, 8
        %v513 = vld [vmem:[%s512] sm:$0xff]
        %515 = vset.pattern.permute.xlu0 0
        %516 = vperm.xlu0 %515, %v513
        %v517 = vpop.permute.xlu0 %516
        %v519 = vperm.slane %v474, 0
        %v520 = vmul.f32 %v517, %v519
        %522 = vrot.lane.b32.xlu0 %v520, 127
        %v523 = vpop.permute.xlu0 %522
        %v525 = vadd.f32 %v511, %v523
        %526 = vset.pattern.permute.xlu0 1
        %527 = vperm.xlu0 %526, %v513
        %v528 = vpop.permute.xlu0 %527
        %v530 = vperm.slane %v474, 1
        %v531 = vmul.f32 %v528, %v530
        %533 = vrot.lane.b32.xlu0 %v531, 127
        %v534 = vpop.permute.xlu0 %533
        %v536 = vadd.f32 %v525, %v534
        %537 = vset.pattern.permute.xlu0 2
        %538 = vperm.xlu0 %537, %v513
        %v539 = vpop.permute.xlu0 %538
        %v541 = vperm.slane %v474, 2
        %v542 = vmul.f32 %v539, %v541
        %544 = vrot.lane.b32.xlu0 %v542, 127
        %v545 = vpop.permute.xlu0 %544
        %v547 = vadd.f32 %v536, %v545
        %548 = vset.pattern.permute.xlu0 3
        %549 = vperm.xlu0 %548, %v513
        %v550 = vpop.permute.xlu0 %549
        %v552 = vperm.slane %v474, 3
        %v553 = vmul.f32 %v550, %v552
        %555 = vrot.lane.b32.xlu0 %v553, 127
        %v556 = vpop.permute.xlu0 %555
        %v558 = vadd.f32 %v547, %v556
        %v559 = vadd.s32 %v450, 1
        %vm560 = vcmp.ge.s32.totalorder %v559, 0
        %vm561 = vcmp.lt.s32.totalorder %v559, 8
        %vm562 = vmand %vm560, %vm561
        %v563 = vsel %vm562, 1, 0
        %vm564 = vcmp.eq.s32.totalorder %v563, 1
        %566 = vrot.lane.b32.xlu0 %v474, 126
        %v567 = vpop.permute.xlu0 %566
        %v569 = vsel %vm564, %v567, 0.0
        %s570 = scalar_lea.vmem %s7, 16
        %v571 = vld [vmem:[%s570] sm:$0xff]
        %573 = vset.pattern.permute.xlu0 0
        %574 = vperm.xlu0 %573, %v571
        %v575 = vpop.permute.xlu0 %574
        %v577 = vperm.slane %v569, 0
        %v578 = vmul.f32 %v575, %v577
        %v579 = vadd.f32 %v558, %v578
        %580 = vset.pattern.permute.xlu0 1
        %581 = vperm.xlu0 %580, %v571
        %v582 = vpop.permute.xlu0 %581
        %v584 = vperm.slane %v569, 1
        %v585 = vmul.f32 %v582, %v584
        %v586 = vadd.f32 %v579, %v585
        %587 = vset.pattern.permute.xlu0 2
        %588 = vperm.xlu0 %587, %v571
        %v589 = vpop.permute.xlu0 %588
        %v591 = vperm.slane %v569, 2
        %v592 = vmul.f32 %v589, %v591
        %v593 = vadd.f32 %v586, %v592
        %594 = vset.pattern.permute.xlu0 3
        %595 = vperm.xlu0 %594, %v571
        %v596 = vpop.permute.xlu0 %595
        %v598 = vperm.slane %v569, 3
        %v599 = vmul.f32 %v596, %v598
        %v600 = vadd.f32 %v593, %v599
        %601 = vrot.lane.b32.xlu0 %v474, 120
        %v602 = vpop.permute.xlu0 %601
        %v604 = vsel %vm480, %v602, 0.0
        %s605 = scalar_lea.vmem %s7, 24
        %v606 = vld [vmem:[%s605] sm:$0xff]
        %608 = vset.pattern.permute.xlu0 0
        %609 = vperm.xlu0 %608, %v606
        %v610 = vpop.permute.xlu0 %609
        %v612 = vperm.slane %v604, 0
        %v613 = vmul.f32 %v610, %v612
        %v614 = vadd.f32 %v600, %v613
        %615 = vset.pattern.permute.xlu0 1
        %616 = vperm.xlu0 %615, %v606
        %v617 = vpop.permute.xlu0 %616
        %v619 = vperm.slane %v604, 1
        %v620 = vmul.f32 %v617, %v619
        %v621 = vadd.f32 %v614, %v620
        %622 = vset.pattern.permute.xlu0 2
        %623 = vperm.xlu0 %622, %v606
        %v624 = vpop.permute.xlu0 %623
        %v626 = vperm.slane %v604, 2
        %v627 = vmul.f32 %v624, %v626
        %v628 = vadd.f32 %v621, %v627
        %629 = vset.pattern.permute.xlu0 3
        %630 = vperm.xlu0 %629, %v606
        %v631 = vpop.permute.xlu0 %630
        %v633 = vperm.slane %v604, 3
        %v634 = vmul.f32 %v631, %v633
        %v635 = vadd.f32 %v628, %v634
        %s636 = scalar_lea.vmem %s7, 32
        %v637 = vld [vmem:[%s636] sm:$0xff]
        %639 = vset.pattern.permute.xlu0 0
        %640 = vperm.xlu0 %639, %v637
        %v641 = vpop.permute.xlu0 %640
        %v643 = vmul.f32 %v641, %v519
        %645 = vrot.lane.b32.xlu0 %v643, 119
        %v646 = vpop.permute.xlu0 %645
        %v648 = vadd.f32 %v635, %v646
        %649 = vset.pattern.permute.xlu0 1
        %650 = vperm.xlu0 %649, %v637
        %v651 = vpop.permute.xlu0 %650
        %v653 = vmul.f32 %v651, %v530
        %655 = vrot.lane.b32.xlu0 %v653, 119
        %v656 = vpop.permute.xlu0 %655
        %v658 = vadd.f32 %v648, %v656
        %659 = vset.pattern.permute.xlu0 2
        %660 = vperm.xlu0 %659, %v637
        %v661 = vpop.permute.xlu0 %660
        %v663 = vmul.f32 %v661, %v541
        %665 = vrot.lane.b32.xlu0 %v663, 119
        %v666 = vpop.permute.xlu0 %665
        %v668 = vadd.f32 %v658, %v666
        %669 = vset.pattern.permute.xlu0 3
        %670 = vperm.xlu0 %669, %v637
        %v671 = vpop.permute.xlu0 %670
        %v673 = vmul.f32 %v671, %v552
        %675 = vrot.lane.b32.xlu0 %v673, 119
        %v676 = vpop.permute.xlu0 %675
        %v678 = vadd.f32 %v668, %v676
        %679 = vrot.lane.b32.xlu0 %v474, 118
        %v680 = vpop.permute.xlu0 %679
        %v682 = vsel %vm564, %v680, 0.0
        %s683 = scalar_lea.vmem %s7, 40
        %v684 = vld [vmem:[%s683] sm:$0xff]
        %686 = vset.pattern.permute.xlu0 0
        %687 = vperm.xlu0 %686, %v684
        %v688 = vpop.permute.xlu0 %687
        %v690 = vperm.slane %v682, 0
        %v691 = vmul.f32 %v688, %v690
        %v692 = vadd.f32 %v678, %v691
        %693 = vset.pattern.permute.xlu0 1
        %694 = vperm.xlu0 %693, %v684
        %v695 = vpop.permute.xlu0 %694
        %v697 = vperm.slane %v682, 1
        %v698 = vmul.f32 %v695, %v697
        %v699 = vadd.f32 %v692, %v698
        %700 = vset.pattern.permute.xlu0 2
        %701 = vperm.xlu0 %700, %v684
        %v702 = vpop.permute.xlu0 %701
        %v704 = vperm.slane %v682, 2
        %v705 = vmul.f32 %v702, %v704
        %v706 = vadd.f32 %v699, %v705
        %707 = vset.pattern.permute.xlu0 3
        %708 = vperm.xlu0 %707, %v684
        %v709 = vpop.permute.xlu0 %708
        %v711 = vperm.slane %v682, 3
        %v712 = vmul.f32 %v709, %v711
        %v713 = vadd.f32 %v706, %v712
        %714 = vrot.lane.b32.xlu0 %v474, 112
        %v715 = vpop.permute.xlu0 %714
        %v717 = vsel %vm480, %v715, 0.0
        %s718 = scalar_lea.vmem %s7, 48
        %v719 = vld [vmem:[%s718] sm:$0xff]
        %721 = vset.pattern.permute.xlu0 0
        %722 = vperm.xlu0 %721, %v719
        %v723 = vpop.permute.xlu0 %722
        %v725 = vperm.slane %v717, 0
        %v726 = vmul.f32 %v723, %v725
        %v727 = vadd.f32 %v713, %v726
        %728 = vset.pattern.permute.xlu0 1
        %729 = vperm.xlu0 %728, %v719
        %v730 = vpop.permute.xlu0 %729
        %v732 = vperm.slane %v717, 1
        %v733 = vmul.f32 %v730, %v732
        %v734 = vadd.f32 %v727, %v733
        %735 = vset.pattern.permute.xlu0 2
        %736 = vperm.xlu0 %735, %v719
        %v737 = vpop.permute.xlu0 %736
        %v739 = vperm.slane %v717, 2
        %v740 = vmul.f32 %v737, %v739
        %v741 = vadd.f32 %v734, %v740
        %742 = vset.pattern.permute.xlu0 3
        %743 = vperm.xlu0 %742, %v719
        %v744 = vpop.permute.xlu0 %743
        %v746 = vperm.slane %v717, 3
        %v747 = vmul.f32 %v744, %v746
        %v748 = vadd.f32 %v741, %v747
        %s749 = scalar_lea.vmem %s7, 56
        %v750 = vld [vmem:[%s749] sm:$0xff]
        %752 = vset.pattern.permute.xlu0 0
        %753 = vperm.xlu0 %752, %v750
        %v754 = vpop.permute.xlu0 %753
        %v756 = vmul.f32 %v754, %v519
        %758 = vrot.lane.b32.xlu0 %v756, 111
        %v759 = vpop.permute.xlu0 %758
        %v761 = vadd.f32 %v748, %v759
        %762 = vset.pattern.permute.xlu0 1
        %763 = vperm.xlu0 %762, %v750
        %v764 = vpop.permute.xlu0 %763
        %v766 = vmul.f32 %v764, %v530
        %768 = vrot.lane.b32.xlu0 %v766, 111
        %v769 = vpop.permute.xlu0 %768
        %v771 = vadd.f32 %v761, %v769
        %772 = vset.pattern.permute.xlu0 2
        %773 = vperm.xlu0 %772, %v750
        %v774 = vpop.permute.xlu0 %773
        %v776 = vmul.f32 %v774, %v541
        %778 = vrot.lane.b32.xlu0 %v776, 111
        %v779 = vpop.permute.xlu0 %778
        %v781 = vadd.f32 %v771, %v779
        %782 = vset.pattern.permute.xlu0 3
        %783 = vperm.xlu0 %782, %v750
        %v784 = vpop.permute.xlu0 %783
        %v786 = vmul.f32 %v784, %v552
        %788 = vrot.lane.b32.xlu0 %v786, 111
        %v789 = vpop.permute.xlu0 %788
        %v791 = vadd.f32 %v781, %v789
        %792 = vrot.lane.b32.xlu0 %v474, 110
        %v793 = vpop.permute.xlu0 %792
        %v795 = vsel %vm564, %v793, 0.0
        %s796 = scalar_lea.vmem %s7, 64
        %v797 = vld [vmem:[%s796] sm:$0xff]
        %799 = vset.pattern.permute.xlu0 0
        %800 = vperm.xlu0 %799, %v797
        %v801 = vpop.permute.xlu0 %800
        %v803 = vperm.slane %v795, 0
        %v804 = vmul.f32 %v801, %v803
        %v805 = vadd.f32 %v791, %v804
        %806 = vset.pattern.permute.xlu0 1
        %807 = vperm.xlu0 %806, %v797
        %v808 = vpop.permute.xlu0 %807
        %v810 = vperm.slane %v795, 1
        %v811 = vmul.f32 %v808, %v810
        %v812 = vadd.f32 %v805, %v811
        %813 = vset.pattern.permute.xlu0 2
        %814 = vperm.xlu0 %813, %v797
        %v815 = vpop.permute.xlu0 %814
        %v817 = vperm.slane %v795, 2
        %v818 = vmul.f32 %v815, %v817
        %v819 = vadd.f32 %v812, %v818
        %820 = vset.pattern.permute.xlu0 3
        %821 = vperm.xlu0 %820, %v797
        %v822 = vpop.permute.xlu0 %821
        %v824 = vperm.slane %v795, 3
        %v825 = vmul.f32 %v822, %v824
        %v826 = vadd.f32 %v819, %v825
        %v827 = vld [vmem:[%s8] sm:$0xff]
        %829 = vset.pattern.permute.xlu0 0
        %830 = vperm.xlu0 %829, %v827
        %v831 = vpop.permute.xlu0 %830
        %v833 = vadd.f32 %v826, %v831
        %v834 = vld [vmem:[%s3] sm:$0xff]
        %836 = vset.pattern.permute.xlu0 0
        %837 = vperm.xlu0 %836, %v834
        %v838 = vpop.permute.xlu0 %837
        %v840 = vmul.f32 %v833, %v838
        %v841 = vld [vmem:[%s4] sm:$0xff]
        %843 = vset.pattern.permute.xlu0 0
        %844 = vperm.xlu0 %843, %v841
        %v845 = vpop.permute.xlu0 %844
        %v847 = vadd.f32 %v840, %v845
        %v848 = vmax.f32 %v847, 0.0
        %vm849 = vcmask 670720
        %850 = vst.msk [vmem:[#allocation3] sm:$0xff] %vm849, 0.0
        %852 = vrot.lane.b32.xlu0 %v848, 9
        %v853 = vpop.permute.xlu0 %852
        %vm855 = vcmask 597064
        %856 = vst.msk [vmem:[#allocation3] sm:$0xff] %vm855, %v853
        %v857 = vld [vmem:[#allocation3] sm:$0xff]
        %v858 = vsel %vm480, %v857, 0.0
        %v859 = vld [vmem:[%s9] sm:$0xff]
        %861 = vset.pattern.permute.xlu0 0
        %862 = vperm.xlu0 %861, %v859
        %v863 = vpop.permute.xlu0 %862
        %v865 = vperm.slane %v858, 0
        %v866 = vmul.f32 %v863, %v865
        %v867 = vadd.f32 %v866, 0.0
        %868 = vset.pattern.permute.xlu0 1
        %869 = vperm.xlu0 %868, %v859
        %v870 = vpop.permute.xlu0 %869
        %v872 = vperm.slane %v858, 1
        %v873 = vmul.f32 %v870, %v872
        %v874 = vadd.f32 %v867, %v873
        %875 = vset.pattern.permute.xlu0 2
        %876 = vperm.xlu0 %875, %v859
        %v877 = vpop.permute.xlu0 %876
        %v879 = vperm.slane %v858, 2
        %v880 = vmul.f32 %v877, %v879
        %v881 = vadd.f32 %v874, %v880
        %882 = vset.pattern.permute.xlu0 3
        %883 = vperm.xlu0 %882, %v859
        %v884 = vpop.permute.xlu0 %883
        %v886 = vperm.slane %v858, 3
        %v887 = vmul.f32 %v884, %v886
        %v888 = vadd.f32 %v881, %v887
        %889 = vset.pattern.permute.xlu0 4
        %890 = vperm.xlu0 %889, %v859
        %v891 = vpop.permute.xlu0 %890
        %v893 = vperm.slane %v858, 4
        %v894 = vmul.f32 %v891, %v893
        %v895 = vadd.f32 %v888, %v894
        %896 = vset.pattern.permute.xlu0 5
        %897 = vperm.xlu0 %896, %v859
        %v898 = vpop.permute.xlu0 %897
        %v900 = vperm.slane %v858, 5
        %v901 = vmul.f32 %v898, %v900
        %v902 = vadd.f32 %v895, %v901
        %903 = vset.pattern.permute.xlu0 6
        %904 = vperm.xlu0 %903, %v859
        %v905 = vpop.permute.xlu0 %904
        %v907 = vperm.slane %v858, 6
        %v908 = vmul.f32 %v905, %v907
        %v909 = vadd.f32 %v902, %v908
        %910 = vset.pattern.permute.xlu0 7
        %911 = vperm.xlu0 %910, %v859
        %v912 = vpop.permute.xlu0 %911
        %v914 = vperm.slane %v858, 7
        %v915 = vmul.f32 %v912, %v914
        %v916 = vadd.f32 %v909, %v915
        %s917 = scalar_lea.vmem %s9, 8
        %v918 = vld [vmem:[%s917] sm:$0xff]
        %920 = vset.pattern.permute.xlu0 0
        %921 = vperm.xlu0 %920, %v918
        %v922 = vpop.permute.xlu0 %921
        %v924 = vperm.slane %v857, 0
        %v925 = vmul.f32 %v922, %v924
        %927 = vrot.lane.b32.xlu0 %v925, 127
        %v928 = vpop.permute.xlu0 %927
        %v930 = vadd.f32 %v916, %v928
        %931 = vset.pattern.permute.xlu0 1
        %932 = vperm.xlu0 %931, %v918
        %v933 = vpop.permute.xlu0 %932
        %v935 = vperm.slane %v857, 1
        %v936 = vmul.f32 %v933, %v935
        %938 = vrot.lane.b32.xlu0 %v936, 127
        %v939 = vpop.permute.xlu0 %938
        %v941 = vadd.f32 %v930, %v939
        %942 = vset.pattern.permute.xlu0 2
        %943 = vperm.xlu0 %942, %v918
        %v944 = vpop.permute.xlu0 %943
        %v946 = vperm.slane %v857, 2
        %v947 = vmul.f32 %v944, %v946
        %949 = vrot.lane.b32.xlu0 %v947, 127
        %v950 = vpop.permute.xlu0 %949
        %v952 = vadd.f32 %v941, %v950
        %953 = vset.pattern.permute.xlu0 3
        %954 = vperm.xlu0 %953, %v918
        %v955 = vpop.permute.xlu0 %954
        %v957 = vperm.slane %v857, 3
        %v958 = vmul.f32 %v955, %v957
        %960 = vrot.lane.b32.xlu0 %v958, 127
        %v961 = vpop.permute.xlu0 %960
        %v963 = vadd.f32 %v952, %v961
        %964 = vset.pattern.permute.xlu0 4
        %965 = vperm.xlu0 %964, %v918
        %v966 = vpop.permute.xlu0 %965
        %v968 = vperm.slane %v857, 4
        %v969 = vmul.f32 %v966, %v968
        %971 = vrot.lane.b32.xlu0 %v969, 127
        %v972 = vpop.permute.xlu0 %971
        %v974 = vadd.f32 %v963, %v972
        %975 = vset.pattern.permute.xlu0 5
        %976 = vperm.xlu0 %975, %v918
        %v977 = vpop.permute.xlu0 %976
        %v979 = vperm.slane %v857, 5
        %v980 = vmul.f32 %v977, %v979
        %982 = vrot.lane.b32.xlu0 %v980, 127
        %v983 = vpop.permute.xlu0 %982
        %v985 = vadd.f32 %v974, %v983
        %986 = vset.pattern.permute.xlu0 6
        %987 = vperm.xlu0 %986, %v918
        %v988 = vpop.permute.xlu0 %987
        %v990 = vperm.slane %v857, 6
        %v991 = vmul.f32 %v988, %v990
        %993 = vrot.lane.b32.xlu0 %v991, 127
        %v994 = vpop.permute.xlu0 %993
        %v996 = vadd.f32 %v985, %v994
        %997 = vset.pattern.permute.xlu0 7
        %998 = vperm.xlu0 %997, %v918
        %v999 = vpop.permute.xlu0 %998
        %v1001 = vperm.slane %v857, 7
        %v1002 = vmul.f32 %v999, %v1001
        %1004 = vrot.lane.b32.xlu0 %v1002, 127
        %v1005 = vpop.permute.xlu0 %1004
        %v1007 = vadd.f32 %v996, %v1005
        %1009 = vrot.lane.b32.xlu0 %v857, 126
        %v1010 = vpop.permute.xlu0 %1009
        %v1012 = vsel %vm564, %v1010, 0.0
        %s1013 = scalar_lea.vmem %s9, 16
        %v1014 = vld [vmem:[%s1013] sm:$0xff]
        %1016 = vset.pattern.permute.xlu0 0
        %1017 = vperm.xlu0 %1016, %v1014
        %v1018 = vpop.permute.xlu0 %1017
        %v1020 = vperm.slane %v1012, 0
        %v1021 = vmul.f32 %v1018, %v1020
        %v1022 = vadd.f32 %v1007, %v1021
        %1023 = vset.pattern.permute.xlu0 1
        %1024 = vperm.xlu0 %1023, %v1014
        %v1025 = vpop.permute.xlu0 %1024
        %v1027 = vperm.slane %v1012, 1
        %v1028 = vmul.f32 %v1025, %v1027
        %v1029 = vadd.f32 %v1022, %v1028
        %1030 = vset.pattern.permute.xlu0 2
        %1031 = vperm.xlu0 %1030, %v1014
        %v1032 = vpop.permute.xlu0 %1031
        %v1034 = vperm.slane %v1012, 2
        %v1035 = vmul.f32 %v1032, %v1034
        %v1036 = vadd.f32 %v1029, %v1035
        %1037 = vset.pattern.permute.xlu0 3
        %1038 = vperm.xlu0 %1037, %v1014
        %v1039 = vpop.permute.xlu0 %1038
        %v1041 = vperm.slane %v1012, 3
        %v1042 = vmul.f32 %v1039, %v1041
        %v1043 = vadd.f32 %v1036, %v1042
        %1044 = vset.pattern.permute.xlu0 4
        %1045 = vperm.xlu0 %1044, %v1014
        %v1046 = vpop.permute.xlu0 %1045
        %v1048 = vperm.slane %v1012, 4
        %v1049 = vmul.f32 %v1046, %v1048
        %v1050 = vadd.f32 %v1043, %v1049
        %1051 = vset.pattern.permute.xlu0 5
        %1052 = vperm.xlu0 %1051, %v1014
        %v1053 = vpop.permute.xlu0 %1052
        %v1055 = vperm.slane %v1012, 5
        %v1056 = vmul.f32 %v1053, %v1055
        %v1057 = vadd.f32 %v1050, %v1056
        %1058 = vset.pattern.permute.xlu0 6
        %1059 = vperm.xlu0 %1058, %v1014
        %v1060 = vpop.permute.xlu0 %1059
        %v1062 = vperm.slane %v1012, 6
        %v1063 = vmul.f32 %v1060, %v1062
        %v1064 = vadd.f32 %v1057, %v1063
        %1065 = vset.pattern.permute.xlu0 7
        %1066 = vperm.xlu0 %1065, %v1014
        %v1067 = vpop.permute.xlu0 %1066
        %v1069 = vperm.slane %v1012, 7
        %v1070 = vmul.f32 %v1067, %v1069
        %v1071 = vadd.f32 %v1064, %v1070
        %1072 = vrot.lane.b32.xlu0 %v857, 120
        %v1073 = vpop.permute.xlu0 %1072
        %v1075 = vsel %vm480, %v1073, 0.0
        %s1076 = scalar_lea.vmem %s9, 24
        %v1077 = vld [vmem:[%s1076] sm:$0xff]
        %1079 = vset.pattern.permute.xlu0 0
        %1080 = vperm.xlu0 %1079, %v1077
        %v1081 = vpop.permute.xlu0 %1080
        %v1083 = vperm.slane %v1075, 0
        %v1084 = vmul.f32 %v1081, %v1083
        %v1085 = vadd.f32 %v1071, %v1084
        %1086 = vset.pattern.permute.xlu0 1
        %1087 = vperm.xlu0 %1086, %v1077
        %v1088 = vpop.permute.xlu0 %1087
        %v1090 = vperm.slane %v1075, 1
        %v1091 = vmul.f32 %v1088, %v1090
        %v1092 = vadd.f32 %v1085, %v1091
        %1093 = vset.pattern.permute.xlu0 2
        %1094 = vperm.xlu0 %1093, %v1077
        %v1095 = vpop.permute.xlu0 %1094
        %v1097 = vperm.slane %v1075, 2
        %v1098 = vmul.f32 %v1095, %v1097
        %v1099 = vadd.f32 %v1092, %v1098
        %1100 = vset.pattern.permute.xlu0 3
        %1101 = vperm.xlu0 %1100, %v1077
        %v1102 = vpop.permute.xlu0 %1101
        %v1104 = vperm.slane %v1075, 3
        %v1105 = vmul.f32 %v1102, %v1104
        %v1106 = vadd.f32 %v1099, %v1105
        %1107 = vset.pattern.permute.xlu0 4
        %1108 = vperm.xlu0 %1107, %v1077
        %v1109 = vpop.permute.xlu0 %1108
        %v1111 = vperm.slane %v1075, 4
        %v1112 = vmul.f32 %v1109, %v1111
        %v1113 = vadd.f32 %v1106, %v1112
        %1114 = vset.pattern.permute.xlu0 5
        %1115 = vperm.xlu0 %1114, %v1077
        %v1116 = vpop.permute.xlu0 %1115
        %v1118 = vperm.slane %v1075, 5
        %v1119 = vmul.f32 %v1116, %v1118
        %v1120 = vadd.f32 %v1113, %v1119
        %1121 = vset.pattern.permute.xlu0 6
        %1122 = vperm.xlu0 %1121, %v1077
        %v1123 = vpop.permute.xlu0 %1122
        %v1125 = vperm.slane %v1075, 6
        %v1126 = vmul.f32 %v1123, %v1125
        %v1127 = vadd.f32 %v1120, %v1126
        %1128 = vset.pattern.permute.xlu0 7
        %1129 = vperm.xlu0 %1128, %v1077
        %v1130 = vpop.permute.xlu0 %1129
        %v1132 = vperm.slane %v1075, 7
        %v1133 = vmul.f32 %v1130, %v1132
        %v1134 = vadd.f32 %v1127, %v1133
        %s1135 = scalar_lea.vmem %s9, 32
        %v1136 = vld [vmem:[%s1135] sm:$0xff]
        %1138 = vset.pattern.permute.xlu0 0
        %1139 = vperm.xlu0 %1138, %v1136
        %v1140 = vpop.permute.xlu0 %1139
        %v1142 = vmul.f32 %v1140, %v924
        %1144 = vrot.lane.b32.xlu0 %v1142, 119
        %v1145 = vpop.permute.xlu0 %1144
        %v1147 = vadd.f32 %v1134, %v1145
        %1148 = vset.pattern.permute.xlu0 1
        %1149 = vperm.xlu0 %1148, %v1136
        %v1150 = vpop.permute.xlu0 %1149
        %v1152 = vmul.f32 %v1150, %v935
        %1154 = vrot.lane.b32.xlu0 %v1152, 119
        %v1155 = vpop.permute.xlu0 %1154
        %v1157 = vadd.f32 %v1147, %v1155
        %1158 = vset.pattern.permute.xlu0 2
        %1159 = vperm.xlu0 %1158, %v1136
        %v1160 = vpop.permute.xlu0 %1159
        %v1162 = vmul.f32 %v1160, %v946
        %1164 = vrot.lane.b32.xlu0 %v1162, 119
        %v1165 = vpop.permute.xlu0 %1164
        %v1167 = vadd.f32 %v1157, %v1165
        %1168 = vset.pattern.permute.xlu0 3
        %1169 = vperm.xlu0 %1168, %v1136
        %v1170 = vpop.permute.xlu0 %1169
        %v1172 = vmul.f32 %v1170, %v957
        %1174 = vrot.lane.b32.xlu0 %v1172, 119
        %v1175 = vpop.permute.xlu0 %1174
        %v1177 = vadd.f32 %v1167, %v1175
        %1178 = vset.pattern.permute.xlu0 4
        %1179 = vperm.xlu0 %1178, %v1136
        %v1180 = vpop.permute.xlu0 %1179
        %v1182 = vmul.f32 %v1180, %v968
        %1184 = vrot.lane.b32.xlu0 %v1182, 119
        %v1185 = vpop.permute.xlu0 %1184
        %v1187 = vadd.f32 %v1177, %v1185
        %1188 = vset.pattern.permute.xlu0 5
        %1189 = vperm.xlu0 %1188, %v1136
        %v1190 = vpop.permute.xlu0 %1189
        %v1192 = vmul.f32 %v1190, %v979
        %1194 = vrot.lane.b32.xlu0 %v1192, 119
        %v1195 = vpop.permute.xlu0 %1194
        %v1197 = vadd.f32 %v1187, %v1195
        %1198 = vset.pattern.permute.xlu0 6
        %1199 = vperm.xlu0 %1198, %v1136
        %v1200 = vpop.permute.xlu0 %1199
        %v1202 = vmul.f32 %v1200, %v990
        %1204 = vrot.lane.b32.xlu0 %v1202, 119
        %v1205 = vpop.permute.xlu0 %1204
        %v1207 = vadd.f32 %v1197, %v1205
        %1208 = vset.pattern.permute.xlu0 7
        %1209 = vperm.xlu0 %1208, %v1136
        %v1210 = vpop.permute.xlu0 %1209
        %v1212 = vmul.f32 %v1210, %v1001
        %1214 = vrot.lane.b32.xlu0 %v1212, 119
        %v1215 = vpop.permute.xlu0 %1214
        %v1217 = vadd.f32 %v1207, %v1215
        %1218 = vrot.lane.b32.xlu0 %v857, 118
        %v1219 = vpop.permute.xlu0 %1218
        %v1221 = vsel %vm564, %v1219, 0.0
        %s1222 = scalar_lea.vmem %s9, 40
        %v1223 = vld [vmem:[%s1222] sm:$0xff]
        %1225 = vset.pattern.permute.xlu0 0
        %1226 = vperm.xlu0 %1225, %v1223
        %v1227 = vpop.permute.xlu0 %1226
        %v1229 = vperm.slane %v1221, 0
        %v1230 = vmul.f32 %v1227, %v1229
        %v1231 = vadd.f32 %v1217, %v1230
        %1232 = vset.pattern.permute.xlu0 1
        %1233 = vperm.xlu0 %1232, %v1223
        %v1234 = vpop.permute.xlu0 %1233
        %v1236 = vperm.slane %v1221, 1
        %v1237 = vmul.f32 %v1234, %v1236
        %v1238 = vadd.f32 %v1231, %v1237
        %1239 = vset.pattern.permute.xlu0 2
        %1240 = vperm.xlu0 %1239, %v1223
        %v1241 = vpop.permute.xlu0 %1240
        %v1243 = vperm.slane %v1221, 2
        %v1244 = vmul.f32 %v1241, %v1243
        %v1245 = vadd.f32 %v1238, %v1244
        %1246 = vset.pattern.permute.xlu0 3
        %1247 = vperm.xlu0 %1246, %v1223
        %v1248 = vpop.permute.xlu0 %1247
        %v1250 = vperm.slane %v1221, 3
        %v1251 = vmul.f32 %v1248, %v1250
        %v1252 = vadd.f32 %v1245, %v1251
        %1253 = vset.pattern.permute.xlu0 4
        %1254 = vperm.xlu0 %1253, %v1223
        %v1255 = vpop.permute.xlu0 %1254
        %v1257 = vperm.slane %v1221, 4
        %v1258 = vmul.f32 %v1255, %v1257
        %v1259 = vadd.f32 %v1252, %v1258
        %1260 = vset.pattern.permute.xlu0 5
        %1261 = vperm.xlu0 %1260, %v1223
        %v1262 = vpop.permute.xlu0 %1261
        %v1264 = vperm.slane %v1221, 5
        %v1265 = vmul.f32 %v1262, %v1264
        %v1266 = vadd.f32 %v1259, %v1265
        %1267 = vset.pattern.permute.xlu0 6
        %1268 = vperm.xlu0 %1267, %v1223
        %v1269 = vpop.permute.xlu0 %1268
        %v1271 = vperm.slane %v1221, 6
        %v1272 = vmul.f32 %v1269, %v1271
        %v1273 = vadd.f32 %v1266, %v1272
        %1274 = vset.pattern.permute.xlu0 7
        %1275 = vperm.xlu0 %1274, %v1223
        %v1276 = vpop.permute.xlu0 %1275
        %v1278 = vperm.slane %v1221, 7
        %v1279 = vmul.f32 %v1276, %v1278
        %v1280 = vadd.f32 %v1273, %v1279
        %1281 = vrot.lane.b32.xlu0 %v857, 112
        %v1282 = vpop.permute.xlu0 %1281
        %v1284 = vsel %vm480, %v1282, 0.0
        %s1285 = scalar_lea.vmem %s9, 48
        %v1286 = vld [vmem:[%s1285] sm:$0xff]
        %1288 = vset.pattern.permute.xlu0 0
        %1289 = vperm.xlu0 %1288, %v1286
        %v1290 = vpop.permute.xlu0 %1289
        %v1292 = vperm.slane %v1284, 0
        %v1293 = vmul.f32 %v1290, %v1292
        %v1294 = vadd.f32 %v1280, %v1293
        %1295 = vset.pattern.permute.xlu0 1
        %1296 = vperm.xlu0 %1295, %v1286
        %v1297 = vpop.permute.xlu0 %1296
        %v1299 = vperm.slane %v1284, 1
        %v1300 = vmul.f32 %v1297, %v1299
        %v1301 = vadd.f32 %v1294, %v1300
        %1302 = vset.pattern.permute.xlu0 2
        %1303 = vperm.xlu0 %1302, %v1286
        %v1304 = vpop.permute.xlu0 %1303
        %v1306 = vperm.slane %v1284, 2
        %v1307 = vmul.f32 %v1304, %v1306
        %v1308 = vadd.f32 %v1301, %v1307
        %1309 = vset.pattern.permute.xlu0 3
        %1310 = vperm.xlu0 %1309, %v1286
        %v1311 = vpop.permute.xlu0 %1310
        %v1313 = vperm.slane %v1284, 3
        %v1314 = vmul.f32 %v1311, %v1313
        %v1315 = vadd.f32 %v1308, %v1314
        %1316 = vset.pattern.permute.xlu0 4
        %1317 = vperm.xlu0 %1316, %v1286
        %v1318 = vpop.permute.xlu0 %1317
        %v1320 = vperm.slane %v1284, 4
        %v1321 = vmul.f32 %v1318, %v1320
        %v1322 = vadd.f32 %v1315, %v1321
        %1323 = vset.pattern.permute.xlu0 5
        %1324 = vperm.xlu0 %1323, %v1286
        %v1325 = vpop.permute.xlu0 %1324
        %v1327 = vperm.slane %v1284, 5
        %v1328 = vmul.f32 %v1325, %v1327
        %v1329 = vadd.f32 %v1322, %v1328
        %1330 = vset.pattern.permute.xlu0 6
        %1331 = vperm.xlu0 %1330, %v1286
        %v1332 = vpop.permute.xlu0 %1331
        %v1334 = vperm.slane %v1284, 6
        %v1335 = vmul.f32 %v1332, %v1334
        %v1336 = vadd.f32 %v1329, %v1335
        %1337 = vset.pattern.permute.xlu0 7
        %1338 = vperm.xlu0 %1337, %v1286
        %v1339 = vpop.permute.xlu0 %1338
        %v1341 = vperm.slane %v1284, 7
        %v1342 = vmul.f32 %v1339, %v1341
        %v1343 = vadd.f32 %v1336, %v1342
        %s1344 = scalar_lea.vmem %s9, 56
        %v1345 = vld [vmem:[%s1344] sm:$0xff]
        %1347 = vset.pattern.permute.xlu0 0
        %1348 = vperm.xlu0 %1347, %v1345
        %v1349 = vpop.permute.xlu0 %1348
        %v1351 = vmul.f32 %v1349, %v924
        %1353 = vrot.lane.b32.xlu0 %v1351, 111
        %v1354 = vpop.permute.xlu0 %1353
        %v1356 = vadd.f32 %v1343, %v1354
        %1357 = vset.pattern.permute.xlu0 1
        %1358 = vperm.xlu0 %1357, %v1345
        %v1359 = vpop.permute.xlu0 %1358
        %v1361 = vmul.f32 %v1359, %v935
        %1363 = vrot.lane.b32.xlu0 %v1361, 111
        %v1364 = vpop.permute.xlu0 %1363
        %v1366 = vadd.f32 %v1356, %v1364
        %1367 = vset.pattern.permute.xlu0 2
        %1368 = vperm.xlu0 %1367, %v1345
        %v1369 = vpop.permute.xlu0 %1368
        %v1371 = vmul.f32 %v1369, %v946
        %1373 = vrot.lane.b32.xlu0 %v1371, 111
        %v1374 = vpop.permute.xlu0 %1373
        %v1376 = vadd.f32 %v1366, %v1374
        %1377 = vset.pattern.permute.xlu0 3
        %1378 = vperm.xlu0 %1377, %v1345
        %v1379 = vpop.permute.xlu0 %1378
        %v1381 = vmul.f32 %v1379, %v957
        %1383 = vrot.lane.b32.xlu0 %v1381, 111
        %v1384 = vpop.permute.xlu0 %1383
        %v1386 = vadd.f32 %v1376, %v1384
        %1387 = vset.pattern.permute.xlu0 4
        %1388 = vperm.xlu0 %1387, %v1345
        %v1389 = vpop.permute.xlu0 %1388
        %v1391 = vmul.f32 %v1389, %v968
        %1393 = vrot.lane.b32.xlu0 %v1391, 111
        %v1394 = vpop.permute.xlu0 %1393
        %v1396 = vadd.f32 %v1386, %v1394
        %1397 = vset.pattern.permute.xlu0 5
        %1398 = vperm.xlu0 %1397, %v1345
        %v1399 = vpop.permute.xlu0 %1398
        %v1401 = vmul.f32 %v1399, %v979
        %1403 = vrot.lane.b32.xlu0 %v1401, 111
        %v1404 = vpop.permute.xlu0 %1403
        %v1406 = vadd.f32 %v1396, %v1404
        %1407 = vset.pattern.permute.xlu0 6
        %1408 = vperm.xlu0 %1407, %v1345
        %v1409 = vpop.permute.xlu0 %1408
        %v1411 = vmul.f32 %v1409, %v990
        %1413 = vrot.lane.b32.xlu0 %v1411, 111
        %v1414 = vpop.permute.xlu0 %1413
        %v1416 = vadd.f32 %v1406, %v1414
        %1417 = vset.pattern.permute.xlu0 7
        %1418 = vperm.xlu0 %1417, %v1345
        %v1419 = vpop.permute.xlu0 %1418
        %v1421 = vmul.f32 %v1419, %v1001
        %1423 = vrot.lane.b32.xlu0 %v1421, 111
        %v1424 = vpop.permute.xlu0 %1423
        %v1426 = vadd.f32 %v1416, %v1424
        %1427 = vrot.lane.b32.xlu0 %v857, 110
        %v1428 = vpop.permute.xlu0 %1427
        %v1430 = vsel %vm564, %v1428, 0.0
        %s1431 = scalar_lea.vmem %s9, 64
        %v1432 = vld [vmem:[%s1431] sm:$0xff]
        %1434 = vset.pattern.permute.xlu0 0
        %1435 = vperm.xlu0 %1434, %v1432
        %v1436 = vpop.permute.xlu0 %1435
        %v1438 = vperm.slane %v1430, 0
        %v1439 = vmul.f32 %v1436, %v1438
        %v1440 = vadd.f32 %v1426, %v1439
        %1441 = vset.pattern.permute.xlu0 1
        %1442 = vperm.xlu0 %1441, %v1432
        %v1443 = vpop.permute.xlu0 %1442
        %v1445 = vperm.slane %v1430, 1
        %v1446 = vmul.f32 %v1443, %v1445
        %v1447 = vadd.f32 %v1440, %v1446
        %1448 = vset.pattern.permute.xlu0 2
        %1449 = vperm.xlu0 %1448, %v1432
        %v1450 = vpop.permute.xlu0 %1449
        %v1452 = vperm.slane %v1430, 2
        %v1453 = vmul.f32 %v1450, %v1452
        %v1454 = vadd.f32 %v1447, %v1453
        %1455 = vset.pattern.permute.xlu0 3
        %1456 = vperm.xlu0 %1455, %v1432
        %v1457 = vpop.permute.xlu0 %1456
        %v1459 = vperm.slane %v1430, 3
        %v1460 = vmul.f32 %v1457, %v1459
        %v1461 = vadd.f32 %v1454, %v1460
        %1462 = vset.pattern.permute.xlu0 4
        %1463 = vperm.xlu0 %1462, %v1432
        %v1464 = vpop.permute.xlu0 %1463
        %v1466 = vperm.slane %v1430, 4
        %v1467 = vmul.f32 %v1464, %v1466
        %v1468 = vadd.f32 %v1461, %v1467
        %1469 = vset.pattern.permute.xlu0 5
        %1470 = vperm.xlu0 %1469, %v1432
        %v1471 = vpop.permute.xlu0 %1470
        %v1473 = vperm.slane %v1430, 5
        %v1474 = vmul.f32 %v1471, %v1473
        %v1475 = vadd.f32 %v1468, %v1474
        %1476 = vset.pattern.permute.xlu0 6
        %1477 = vperm.xlu0 %1476, %v1432
        %v1478 = vpop.permute.xlu0 %1477
        %v1480 = vperm.slane %v1430, 6
        %v1481 = vmul.f32 %v1478, %v1480
        %v1482 = vadd.f32 %v1475, %v1481
        %1483 = vset.pattern.permute.xlu0 7
        %1484 = vperm.xlu0 %1483, %v1432
        %v1485 = vpop.permute.xlu0 %1484
        %v1487 = vperm.slane %v1430, 7
        %v1488 = vmul.f32 %v1485, %v1487
        %v1489 = vadd.f32 %v1482, %v1488
        %v1490 = vld [vmem:[%s10] sm:$0xff]
        %1492 = vset.pattern.permute.xlu0 0
        %1493 = vperm.xlu0 %1492, %v1490
        %v1494 = vpop.permute.xlu0 %1493
        %v1496 = vadd.f32 %v1489, %v1494
        %v1497 = vld [vmem:[%s5] sm:$0xf]
        %1499 = vset.pattern.permute.xlu0 0
        %1500 = vperm.xlu0 %1499, %v1497
        %v1501 = vpop.permute.xlu0 %1500
        %v1503 = vmul.f32 %v436, %v1501
        %v1504 = vld [vmem:[%s6] sm:$0xf]
        %1506 = vset.pattern.permute.xlu0 0
        %1507 = vperm.xlu0 %1506, %v1504
        %v1508 = vpop.permute.xlu0 %1507
        %v1510 = vadd.f32 %v1503, %v1508
        %v1511 = vmax.f32 %v1510, 0.0
        %1512 = vst.msk [vmem:[#allocation2] sm:$0xf] %vm466, 0.0
        %1514 = vrot.lane.b32.xlu0 %v1511, 9
        %v1515 = vpop.permute.xlu0 %1514
        %1517 = vst.msk [vmem:[#allocation2] sm:$0xf] %vm472, %v1515
        %v1518 = vld [vmem:[#allocation2] sm:$0xf]
        %v1519 = vsel %vm480, %v1518, 0.0
        %v1520 = vld [vmem:[%s11] sm:$0xff]
        %1522 = vset.pattern.permute.xlu0 0
        %1523 = vperm.xlu0 %1522, %v1520
        %v1524 = vpop.permute.xlu0 %1523
        %v1526 = vperm.slane %v1519, 0
        %v1527 = vmul.f32 %v1524, %v1526
        %v1528 = vadd.f32 %v1527, 0.0
        %1529 = vset.pattern.permute.xlu0 1
        %1530 = vperm.xlu0 %1529, %v1520
        %v1531 = vpop.permute.xlu0 %1530
        %v1533 = vperm.slane %v1519, 1
        %v1534 = vmul.f32 %v1531, %v1533
        %v1535 = vadd.f32 %v1528, %v1534
        %1536 = vset.pattern.permute.xlu0 2
        %1537 = vperm.xlu0 %1536, %v1520
        %v1538 = vpop.permute.xlu0 %1537
        %v1540 = vperm.slane %v1519, 2
        %v1541 = vmul.f32 %v1538, %v1540
        %v1542 = vadd.f32 %v1535, %v1541
        %1543 = vset.pattern.permute.xlu0 3
        %1544 = vperm.xlu0 %1543, %v1520
        %v1545 = vpop.permute.xlu0 %1544
        %v1547 = vperm.slane %v1519, 3
        %v1548 = vmul.f32 %v1545, %v1547
        %v1549 = vadd.f32 %v1542, %v1548
        %s1550 = scalar_lea.vmem %s11, 8
        %v1551 = vld [vmem:[%s1550] sm:$0xff]
        %1553 = vset.pattern.permute.xlu0 0
        %1554 = vperm.xlu0 %1553, %v1551
        %v1555 = vpop.permute.xlu0 %1554
        %v1557 = vperm.slane %v1518, 0
        %v1558 = vmul.f32 %v1555, %v1557
        %1560 = vrot.lane.b32.xlu0 %v1558, 127
        %v1561 = vpop.permute.xlu0 %1560
        %v1563 = vadd.f32 %v1549, %v1561
        %1564 = vset.pattern.permute.xlu0 1
        %1565 = vperm.xlu0 %1564, %v1551
        %v1566 = vpop.permute.xlu0 %1565
        %v1568 = vperm.slane %v1518, 1
        %v1569 = vmul.f32 %v1566, %v1568
        %1571 = vrot.lane.b32.xlu0 %v1569, 127
        %v1572 = vpop.permute.xlu0 %1571
        %v1574 = vadd.f32 %v1563, %v1572
        %1575 = vset.pattern.permute.xlu0 2
        %1576 = vperm.xlu0 %1575, %v1551
        %v1577 = vpop.permute.xlu0 %1576
        %v1579 = vperm.slane %v1518, 2
        %v1580 = vmul.f32 %v1577, %v1579
        %1582 = vrot.lane.b32.xlu0 %v1580, 127
        %v1583 = vpop.permute.xlu0 %1582
        %v1585 = vadd.f32 %v1574, %v1583
        %1586 = vset.pattern.permute.xlu0 3
        %1587 = vperm.xlu0 %1586, %v1551
        %v1588 = vpop.permute.xlu0 %1587
        %v1590 = vperm.slane %v1518, 3
        %v1591 = vmul.f32 %v1588, %v1590
        %1593 = vrot.lane.b32.xlu0 %v1591, 127
        %v1594 = vpop.permute.xlu0 %1593
        %v1596 = vadd.f32 %v1585, %v1594
        %1598 = vrot.lane.b32.xlu0 %v1518, 126
        %v1599 = vpop.permute.xlu0 %1598
        %v1601 = vsel %vm564, %v1599, 0.0
        %s1602 = scalar_lea.vmem %s11, 16
        %v1603 = vld [vmem:[%s1602] sm:$0xff]
        %1605 = vset.pattern.permute.xlu0 0
        %1606 = vperm.xlu0 %1605, %v1603
        %v1607 = vpop.permute.xlu0 %1606
        %v1609 = vperm.slane %v1601, 0
        %v1610 = vmul.f32 %v1607, %v1609
        %v1611 = vadd.f32 %v1596, %v1610
        %1612 = vset.pattern.permute.xlu0 1
        %1613 = vperm.xlu0 %1612, %v1603
        %v1614 = vpop.permute.xlu0 %1613
        %v1616 = vperm.slane %v1601, 1
        %v1617 = vmul.f32 %v1614, %v1616
        %v1618 = vadd.f32 %v1611, %v1617
        %1619 = vset.pattern.permute.xlu0 2
        %1620 = vperm.xlu0 %1619, %v1603
        %v1621 = vpop.permute.xlu0 %1620
        %v1623 = vperm.slane %v1601, 2
        %v1624 = vmul.f32 %v1621, %v1623
        %v1625 = vadd.f32 %v1618, %v1624
        %1626 = vset.pattern.permute.xlu0 3
        %1627 = vperm.xlu0 %1626, %v1603
        %v1628 = vpop.permute.xlu0 %1627
        %v1630 = vperm.slane %v1601, 3
        %v1631 = vmul.f32 %v1628, %v1630
        %v1632 = vadd.f32 %v1625, %v1631
        %1633 = vrot.lane.b32.xlu0 %v1518, 120
        %v1634 = vpop.permute.xlu0 %1633
        %v1636 = vsel %vm480, %v1634, 0.0
        %s1637 = scalar_lea.vmem %s11, 24
        %v1638 = vld [vmem:[%s1637] sm:$0xff]
        %1640 = vset.pattern.permute.xlu0 0
        %1641 = vperm.xlu0 %1640, %v1638
        %v1642 = vpop.permute.xlu0 %1641
        %v1644 = vperm.slane %v1636, 0
        %v1645 = vmul.f32 %v1642, %v1644
        %v1646 = vadd.f32 %v1632, %v1645
        %1647 = vset.pattern.permute.xlu0 1
        %1648 = vperm.xlu0 %1647, %v1638
        %v1649 = vpop.permute.xlu0 %1648
        %v1651 = vperm.slane %v1636, 1
        %v1652 = vmul.f32 %v1649, %v1651
        %v1653 = vadd.f32 %v1646, %v1652
        %1654 = vset.pattern.permute.xlu0 2
        %1655 = vperm.xlu0 %1654, %v1638
        %v1656 = vpop.permute.xlu0 %1655
        %v1658 = vperm.slane %v1636, 2
        %v1659 = vmul.f32 %v1656, %v1658
        %v1660 = vadd.f32 %v1653, %v1659
        %1661 = vset.pattern.permute.xlu0 3
        %1662 = vperm.xlu0 %1661, %v1638
        %v1663 = vpop.permute.xlu0 %1662
        %v1665 = vperm.slane %v1636, 3
        %v1666 = vmul.f32 %v1663, %v1665
        %v1667 = vadd.f32 %v1660, %v1666
        %s1668 = scalar_lea.vmem %s11, 32
        %v1669 = vld [vmem:[%s1668] sm:$0xff]
        %1671 = vset.pattern.permute.xlu0 0
        %1672 = vperm.xlu0 %1671, %v1669
        %v1673 = vpop.permute.xlu0 %1672
        %v1675 = vmul.f32 %v1673, %v1557
        %1677 = vrot.lane.b32.xlu0 %v1675, 119
        %v1678 = vpop.permute.xlu0 %1677
        %v1680 = vadd.f32 %v1667, %v1678
        %1681 = vset.pattern.permute.xlu0 1
        %1682 = vperm.xlu0 %1681, %v1669
        %v1683 = vpop.permute.xlu0 %1682
        %v1685 = vmul.f32 %v1683, %v1568
        %1687 = vrot.lane.b32.xlu0 %v1685, 119
        %v1688 = vpop.permute.xlu0 %1687
        %v1690 = vadd.f32 %v1680, %v1688
        %1691 = vset.pattern.permute.xlu0 2
        %1692 = vperm.xlu0 %1691, %v1669
        %v1693 = vpop.permute.xlu0 %1692
        %v1695 = vmul.f32 %v1693, %v1579
        %1697 = vrot.lane.b32.xlu0 %v1695, 119
        %v1698 = vpop.permute.xlu0 %1697
        %v1700 = vadd.f32 %v1690, %v1698
        %1701 = vset.pattern.permute.xlu0 3
        %1702 = vperm.xlu0 %1701, %v1669
        %v1703 = vpop.permute.xlu0 %1702
        %v1705 = vmul.f32 %v1703, %v1590
        %1707 = vrot.lane.b32.xlu0 %v1705, 119
        %v1708 = vpop.permute.xlu0 %1707
        %v1710 = vadd.f32 %v1700, %v1708
        %1711 = vrot.lane.b32.xlu0 %v1518, 118
        %v1712 = vpop.permute.xlu0 %1711
        %v1714 = vsel %vm564, %v1712, 0.0
        %s1715 = scalar_lea.vmem %s11, 40
        %v1716 = vld [vmem:[%s1715] sm:$0xff]
        %1718 = vset.pattern.permute.xlu0 0
        %1719 = vperm.xlu0 %1718, %v1716
        %v1720 = vpop.permute.xlu0 %1719
        %v1722 = vperm.slane %v1714, 0
        %v1723 = vmul.f32 %v1720, %v1722
        %v1724 = vadd.f32 %v1710, %v1723
        %1725 = vset.pattern.permute.xlu0 1
        %1726 = vperm.xlu0 %1725, %v1716
        %v1727 = vpop.permute.xlu0 %1726
        %v1729 = vperm.slane %v1714, 1
        %v1730 = vmul.f32 %v1727, %v1729
        %v1731 = vadd.f32 %v1724, %v1730
        %1732 = vset.pattern.permute.xlu0 2
        %1733 = vperm.xlu0 %1732, %v1716
        %v1734 = vpop.permute.xlu0 %1733
        %v1736 = vperm.slane %v1714, 2
        %v1737 = vmul.f32 %v1734, %v1736
        %v1738 = vadd.f32 %v1731, %v1737
        %1739 = vset.pattern.permute.xlu0 3
        %1740 = vperm.xlu0 %1739, %v1716
        %v1741 = vpop.permute.xlu0 %1740
        %v1743 = vperm.slane %v1714, 3
        %v1744 = vmul.f32 %v1741, %v1743
        %v1745 = vadd.f32 %v1738, %v1744
        %1746 = vrot.lane.b32.xlu0 %v1518, 112
        %v1747 = vpop.permute.xlu0 %1746
        %v1749 = vsel %vm480, %v1747, 0.0
        %s1750 = scalar_lea.vmem %s11, 48
        %v1751 = vld [vmem:[%s1750] sm:$0xff]
        %1753 = vset.pattern.permute.xlu0 0
        %1754 = vperm.xlu0 %1753, %v1751
        %v1755 = vpop.permute.xlu0 %1754
        %v1757 = vperm.slane %v1749, 0
        %v1758 = vmul.f32 %v1755, %v1757
        %v1759 = vadd.f32 %v1745, %v1758
        %1760 = vset.pattern.permute.xlu0 1
        %1761 = vperm.xlu0 %1760, %v1751
        %v1762 = vpop.permute.xlu0 %1761
        %v1764 = vperm.slane %v1749, 1
        %v1765 = vmul.f32 %v1762, %v1764
        %v1766 = vadd.f32 %v1759, %v1765
        %1767 = vset.pattern.permute.xlu0 2
        %1768 = vperm.xlu0 %1767, %v1751
        %v1769 = vpop.permute.xlu0 %1768
        %v1771 = vperm.slane %v1749, 2
        %v1772 = vmul.f32 %v1769, %v1771
        %v1773 = vadd.f32 %v1766, %v1772
        %1774 = vset.pattern.permute.xlu0 3
        %1775 = vperm.xlu0 %1774, %v1751
        %v1776 = vpop.permute.xlu0 %1775
        %v1778 = vperm.slane %v1749, 3
        %v1779 = vmul.f32 %v1776, %v1778
        %v1780 = vadd.f32 %v1773, %v1779
        %s1781 = scalar_lea.vmem %s11, 56
        %v1782 = vld [vmem:[%s1781] sm:$0xff]
        %1784 = vset.pattern.permute.xlu0 0
        %1785 = vperm.xlu0 %1784, %v1782
        %v1786 = vpop.permute.xlu0 %1785
        %v1788 = vmul.f32 %v1786, %v1557
        %1790 = vrot.lane.b32.xlu0 %v1788, 111
        %v1791 = vpop.permute.xlu0 %1790
        %v1793 = vadd.f32 %v1780, %v1791
        %1794 = vset.pattern.permute.xlu0 1
        %1795 = vperm.xlu0 %1794, %v1782
        %v1796 = vpop.permute.xlu0 %1795
        %v1798 = vmul.f32 %v1796, %v1568
        %1800 = vrot.lane.b32.xlu0 %v1798, 111
        %v1801 = vpop.permute.xlu0 %1800
        %v1803 = vadd.f32 %v1793, %v1801
        %1804 = vset.pattern.permute.xlu0 2
        %1805 = vperm.xlu0 %1804, %v1782
        %v1806 = vpop.permute.xlu0 %1805
        %v1808 = vmul.f32 %v1806, %v1579
        %1810 = vrot.lane.b32.xlu0 %v1808, 111
        %v1811 = vpop.permute.xlu0 %1810
        %v1813 = vadd.f32 %v1803, %v1811
        %1814 = vset.pattern.permute.xlu0 3
        %1815 = vperm.xlu0 %1814, %v1782
        %v1816 = vpop.permute.xlu0 %1815
        %v1818 = vmul.f32 %v1816, %v1590
        %1820 = vrot.lane.b32.xlu0 %v1818, 111
        %v1821 = vpop.permute.xlu0 %1820
        %v1823 = vadd.f32 %v1813, %v1821
        %1824 = vrot.lane.b32.xlu0 %v1518, 110
        %v1825 = vpop.permute.xlu0 %1824
        %v1827 = vsel %vm564, %v1825, 0.0
        %s1828 = scalar_lea.vmem %s11, 64
        %v1829 = vld [vmem:[%s1828] sm:$0xff]
        %1831 = vset.pattern.permute.xlu0 0
        %1832 = vperm.xlu0 %1831, %v1829
        %v1833 = vpop.permute.xlu0 %1832
        %v1835 = vperm.slane %v1827, 0
        %v1836 = vmul.f32 %v1833, %v1835
        %v1837 = vadd.f32 %v1823, %v1836
        %1838 = vset.pattern.permute.xlu0 1
        %1839 = vperm.xlu0 %1838, %v1829
        %v1840 = vpop.permute.xlu0 %1839
        %v1842 = vperm.slane %v1827, 1
        %v1843 = vmul.f32 %v1840, %v1842
        %v1844 = vadd.f32 %v1837, %v1843
        %1845 = vset.pattern.permute.xlu0 2
        %1846 = vperm.xlu0 %1845, %v1829
        %v1847 = vpop.permute.xlu0 %1846
        %v1849 = vperm.slane %v1827, 2
        %v1850 = vmul.f32 %v1847, %v1849
        %v1851 = vadd.f32 %v1844, %v1850
        %1852 = vset.pattern.permute.xlu0 3
        %1853 = vperm.xlu0 %1852, %v1829
        %v1854 = vpop.permute.xlu0 %1853
        %v1856 = vperm.slane %v1827, 3
        %v1857 = vmul.f32 %v1854, %v1856
        %v1858 = vadd.f32 %v1851, %v1857
        %v1859 = vld [vmem:[%s12] sm:$0xff]
        %1861 = vset.pattern.permute.xlu0 0
        %1862 = vperm.xlu0 %1861, %v1859
        %v1863 = vpop.permute.xlu0 %1862
        %v1865 = vadd.f32 %v1858, %v1863
        %v1866 = vadd.f32 %v1496, %v1865
        %vm1867 = vcmask 523264
        %1868 = vst.msk [vmem:[%s431] sm:$0xff] %vm1867, %v1866
        %s1869 = sand.u32 %s313, 1
        %s1870 = scalar_lea.sflag [#allocation5], %s1869
        %s1871 = sand.u32 %s313, 1
        %s1872 = smul.addr %s1871, 8
        %s1873 = scalar_lea.vmem [#allocation4], %s1872
        // Predicated region
        $region73: #{tpu_custom_call.1} parent=71 // pred_check
          %p1874 = pneg %p323
        $region74: #{tpu_custom_call.1} parent=71 // pred_check_branch
          %1876 = sbr.rel (%p1874) target = $region76
        $region75: #{tpu_custom_call.1} parent=71 // pred_region
          %1878 = vsyncadd %s1870, 0
          %s1879 = smul.addr %s27, 8
          %s1880 = scalar_lea.hbm %s13, %s1879
          %s1882 = sshll.u32 %s1873, 4
          %s1883 = int_to_ptr.vmem [resolvable:$true] %s1882
          %s1884 = sshll.u32 %s1880, 4
          %s1885 = int_to_ptr.hbm [resolvable:$true] %s1884
          %1887 = dma.vmem_to_hbm [thread:$0]  %s1883, 128, %s1885, %s1870
        $region76: #{tpu_custom_call.1} parent=71 // pred_fallthru
          _
      $region72: #{tpu_custom_call.1} parent=5 // pred_fallthru
        _
      %p1888 = scmp.le.s32.totalorder 2, %s22
      // Predicated region
      $region77: #{tpu_custom_call.1} parent=5 // pred_check
        %p1889 = pneg %p1888
      $region78: #{tpu_custom_call.1} parent=5 // pred_check_branch
        %1891 = sbr.rel (%p1889) target = $region80
      $region79: #{tpu_custom_call.1} parent=5 // pred_region
        %s1892 = ssub.s32 %s22, 2
        // Predicated region
        $region81: #{tpu_custom_call.1} parent=79 // pred_check
          %p1893 = pneg %p329
        $region82: #{tpu_custom_call.1} parent=79 // pred_check_branch
          %1895 = sbr.rel (%p1893) target = $region84
        $region83: #{tpu_custom_call.1} parent=79 // pred_region
          %s1896 = sand.u32 %s314, 1
          %s1897 = scalar_lea.sflag [#allocation5], %s1896
          %s1898 = sand.u32 %s314, 1
          %s1899 = smul.addr %s1898, 8
          %s1900 = scalar_lea.vmem [#allocation4], %s1899
          %1902 = dma.done %s1897, 128
        $region84: #{tpu_custom_call.1} parent=79 // pred_fallthru
          _
      $region80: #{tpu_custom_call.1} parent=5 // pred_fallthru
        _
    $region6: #{tpu_custom_call.1} parent=1 // loop_footer
      %s26 = sadd.s32 1, %s22
    $region7: #{tpu_custom_call.1} parent=1 // loop_footer_branch
      %21 = sbr.rel target = $region3
    $region8: #{tpu_custom_call.1} parent=1 // loop_exit
      _
    %1903 = vsyncpa [#allocation5], 1
    %s1904 = scalar_lea.sflag [#allocation5], 1
    %1905 = vsyncpa %s1904, 1

</llo_original>
